<compile_context>
chip_gen: v7x
topology: tpu7x:2x2x1
jax: 0.10.0
libtpu: 0.0.40
codegen_flags: <defaults>
</compile_context>

<pallas_src>
import functools

import jax
import jax.numpy as jnp
import numpy as np
from jax import lax
from jax.experimental import pallas as pl
from jax.experimental.pallas import tpu as pltpu


# ---------------------------------------------------------------------------
# Pallas kernels
# ---------------------------------------------------------------------------
def _fused_reduce_1x1_kernel(x_ref, w1_ref, b1_ref, w2_ref, b2_ref,
                             w3_ref, b3_ref, o1_ref, o2_ref, o3_ref):
    """Three 1x1 convs (BN folded) sharing a single load of x.

    x_ref: (TM, Cin) bf16 tile of the flattened activation.
    w*_ref: (Cin, C*) bf16 folded weights; b*_ref: (1, C*) f32 folded bias.
    o1: branch1 (ReLU, f32); o2: branch2 reduce (no ReLU, bf16);
    o3: branch3 reduce (ReLU, bf16).
    """
    x = x_ref[...]
    y1 = jnp.dot(x, w1_ref[...], preferred_element_type=jnp.float32) + b1_ref[...]
    o1_ref[...] = jnp.maximum(y1, 0.0).astype(o1_ref.dtype)
    y2 = jnp.dot(x, w2_ref[...], preferred_element_type=jnp.float32) + b2_ref[...]
    o2_ref[...] = y2.astype(o2_ref.dtype)                  # branch2: BN, no ReLU
    y3 = jnp.dot(x, w3_ref[...], preferred_element_type=jnp.float32) + b3_ref[...]
    o3_ref[...] = jnp.maximum(y3, 0.0).astype(o3_ref.dtype)


def _conv3x3_kernel(t_ref, w_ref, b_ref, o_ref, pad_ref, *, H, W):
    """3x3 conv (pad=1) + bias + ReLU for one image; BN pre-folded into w/b.

    t_ref: (H, W, Cin) bf16; w_ref: (9, Cin, Cout) bf16; b_ref: (1, Cout) f32.
    pad_ref: (H+2, W+2, Cin) f32 VMEM scratch used for in-kernel zero padding.
    """
    Cin = t_ref.shape[-1]
    Cout = o_ref.shape[-1]
    pad_ref[...] = jnp.zeros(pad_ref.shape, pad_ref.dtype)
    pad_ref[pl.ds(1, H), pl.ds(1, W), :] = t_ref[...].astype(pad_ref.dtype)
    acc = jnp.zeros((H * W, Cout), jnp.float32)
    # TODO(synk): build an im2col slab (single K=9*Cin matmul) and realise the
    # dw shifts with pltpu.roll to avoid the 9 misaligned-window relayouts.
    for dh in range(3):
        for dw in range(3):
            tap = pad_ref[dh:dh + H, dw:dw + W, :]          # (H, W, Cin)
            acc = acc + jnp.dot(
                tap.reshape(H * W, Cin).astype(jnp.bfloat16), w_ref[dh * 3 + dw],
                preferred_element_type=jnp.float32)
    y = jnp.maximum(acc + b_ref[...], 0.0)
    o_ref[...] = y.reshape(H, W, Cout).astype(o_ref.dtype)


def _maxpool_conv1x1_kernel(x_ref, w_ref, b_ref, o_ref, pad_ref, *, H, W):
    """branch4: maxpool3x3(s=1,p=1) fused with 1x1 conv + BN(folded) + ReLU.

    x_ref: (H, W, Cin) bf16; w_ref: (Cin, Cout) bf16; b_ref: (1, Cout) f32.
    pad_ref: (H+2, W+2, Cin) f32 VMEM scratch (-inf padded).
    """
    Cout = o_ref.shape[-1]
    pad_ref[...] = jnp.full(pad_ref.shape, -jnp.inf, pad_ref.dtype)
    pad_ref[pl.ds(1, H), pl.ds(1, W), :] = x_ref[...].astype(pad_ref.dtype)
    # Separable 3x3 max: 3-tap row max, then 3-tap column max.  The centre tap
    # is always in-bounds, so no -inf reaches the matmul.
    rm = jnp.maximum(jnp.maximum(pad_ref[:, 0:W, :], pad_ref[:, 1:W + 1, :]),
                     pad_ref[:, 2:W + 2, :])                # (H+2, W, Cin)
    pooled = jnp.maximum(jnp.maximum(rm[0:H], rm[1:H + 1]), rm[2:H + 2])
    y = jnp.dot(pooled.reshape(H * W, -1).astype(jnp.bfloat16), w_ref[...],
                preferred_element_type=jnp.float32)
    y = jnp.maximum(y + b_ref[...], 0.0)
    o_ref[...] = y.reshape(H, W, Cout).astype(o_ref.dtype)


# ---------------------------------------------------------------------------
# Pallas wrappers
# ---------------------------------------------------------------------------
def fused_reduce_1x1(x2d, w1, b1, w2, b2, w3, b3, *, tm=256):
    """All three 1x1 convs that consume x, M-tiled with a parallel grid."""
    M, Cin = x2d.shape
    C1, C2, C3 = w1.shape[1], w2.shape[1], w3.shape[1]
    tm = min(tm, M)                       # tune upward (512-1024) for big M
    row = lambda i: (i, 0)
    rep = lambda i: (0, 0)
    return pl.pallas_call(
        _fused_reduce_1x1_kernel,
        out_shape=(jax.ShapeDtypeStruct((M, C1), jnp.float32),
                   jax.ShapeDtypeStruct((M, C2), jnp.bfloat16),
                   jax.ShapeDtypeStruct((M, C3), jnp.bfloat16)),
        grid=(pl.cdiv(M, tm),),
        in_specs=[
            pl.BlockSpec((tm, Cin), row),
            pl.BlockSpec((Cin, C1), rep), pl.BlockSpec((1, C1), rep),
            pl.BlockSpec((Cin, C2), rep), pl.BlockSpec((1, C2), rep),
            pl.BlockSpec((Cin, C3), rep), pl.BlockSpec((1, C3), rep),
        ],
        out_specs=[pl.BlockSpec((tm, C1), row),
                   pl.BlockSpec((tm, C2), row),
                   pl.BlockSpec((tm, C3), row)],
        compiler_params=pltpu.CompilerParams(dimension_semantics=("parallel",)),
    )(x2d, w1, b1.reshape(1, C1), w2, b2.reshape(1, C2), w3, b3.reshape(1, C3))


def conv3x3_relu(t_nhwc, w9, b):
    N, H, W, Cin = t_nhwc.shape
    Cout = w9.shape[-1]
    # TODO(synk): for large spatial sizes add a row-tile grid axis (halo blocks)
    # so pipelining does not depend on the batch size alone.
    return pl.pallas_call(
        functools.partial(_conv3x3_kernel, H=H, W=W),
        out_shape=jax.ShapeDtypeStruct((N, H, W, Cout), jnp.float32),
        grid=(N,),
        in_specs=[
            pl.BlockSpec((None, H, W, Cin), lambda n: (n, 0, 0, 0)),
            pl.BlockSpec((9, Cin, Cout), lambda n: (0, 0, 0)),
            pl.BlockSpec((1, Cout), lambda n: (0, 0)),
        ],
        out_specs=pl.BlockSpec((None, H, W, Cout), lambda n: (n, 0, 0, 0)),
        scratch_shapes=[pltpu.VMEM((H + 2, W + 2, Cin), jnp.float32)],
        compiler_params=pltpu.CompilerParams(dimension_semantics=("parallel",)),
    )(t_nhwc, w9, b.reshape(1, Cout))


def maxpool_conv1x1(x_nhwc, w, b):
    N, H, W, Cin = x_nhwc.shape
    Cout = w.shape[-1]
    return pl.pallas_call(
        functools.partial(_maxpool_conv1x1_kernel, H=H, W=W),
        out_shape=jax.ShapeDtypeStruct((N, H, W, Cout), jnp.float32),
        grid=(N,),
        in_specs=[
            pl.BlockSpec((None, H, W, Cin), lambda n: (n, 0, 0, 0)),
            pl.BlockSpec((Cin, Cout), lambda n: (0, 0)),
            pl.BlockSpec((1, Cout), lambda n: (0, 0)),
        ],
        out_specs=pl.BlockSpec((None, H, W, Cout), lambda n: (n, 0, 0, 0)),
        scratch_shapes=[pltpu.VMEM((H + 2, W + 2, Cin), jnp.float32)],
        compiler_params=pltpu.CompilerParams(dimension_semantics=("parallel",)),
    )(x_nhwc, w, b.reshape(1, Cout))


# ---------------------------------------------------------------------------
# Parameters (deterministic, synthetic) and weight preparation
# ---------------------------------------------------------------------------
def init_params(key, in_channels, n1x1, n3x3_reduce, n3x3, n5x5_reduce, n5x5,
                pool_plane):
    keys = iter(jax.random.split(key, 40))

    def conv_p(cout, cin, k):
        return {'w': 0.1 * jax.random.normal(next(keys), (cout, cin, k, k), jnp.float32),
                'b': 0.1 * jax.random.normal(next(keys), (cout,), jnp.float32)}

    def bn_p(c):
        return {'gamma': 1.0 + 0.1 * jax.random.normal(next(keys), (c,), jnp.float32),
                'beta': 0.1 * jax.random.normal(next(keys), (c,), jnp.float32),
                'mean': 0.1 * jax.random.normal(next(keys), (c,), jnp.float32),
                'var': 1.0 + 0.1 * jax.random.uniform(next(keys), (c,), jnp.float32)}

    return {
        'b1_conv': conv_p(n1x1, in_channels, 1), 'b1_bn': bn_p(n1x1),
        'b2_conv1': conv_p(n3x3_reduce, in_channels, 1), 'b2_bn': bn_p(n3x3_reduce),
        'b2_conv2': conv_p(n3x3, n3x3_reduce, 3),
        'b3_conv1': conv_p(n5x5_reduce, in_channels, 1), 'b3_bn1': bn_p(n5x5_reduce),
        'b3_conv2': conv_p(n5x5, n5x5_reduce, 3), 'b3_bn2': bn_p(n5x5),
        'b4_conv': conv_p(pool_plane, in_channels, 1), 'b4_bn': bn_p(pool_plane),
    }


def _bn_fold(w_oihw, b, bn, eps=1e-5):
    """Fold inference BatchNorm into the preceding conv's weights and bias."""
    s = bn['gamma'] / jnp.sqrt(bn['var'] + eps)
    return w_oihw * s[:, None, None, None], (b - bn['mean']) * s + bn['beta']


def _w1x1(w_oihw):    # OIHW (Cout, Cin, 1, 1) -> (Cin, Cout)
    return jnp.transpose(w_oihw[:, :, 0, 0], (1, 0))


def _w3x3(w_oihw):    # OIHW (Cout, Cin, 3, 3) -> (9, Cin, Cout), tap = kh*3+kw
    Cout, Cin = w_oihw.shape[0], w_oihw.shape[1]
    return jnp.transpose(w_oihw, (2, 3, 1, 0)).reshape(9, Cin, Cout)


# ---------------------------------------------------------------------------
# Inception forward (Pallas)
# ---------------------------------------------------------------------------
def inception_forward(x_nchw, P):
    N, Cin, H, W = x_nchw.shape
    bf16 = jnp.bfloat16
    # TODO(synk): in a full GoogLeNet keep the whole network NHWC so this
    # transpose happens once per model, not once per Inception block.
    xb = jnp.transpose(x_nchw, (0, 2, 3, 1)).astype(bf16)   # NHWC bf16

    # Fold BN (running stats) into conv weights / bias once, in f32.
    w1, b1 = _bn_fold(P['b1_conv']['w'], P['b1_conv']['b'], P['b1_bn'])
    w2r, b2r = _bn_fold(P['b2_conv1']['w'], P['b2_conv1']['b'], P['b2_bn'])
    w3r, b3r = _bn_fold(P['b3_conv1']['w'], P['b3_conv1']['b'], P['b3_bn1'])
    w33, b33 = _bn_fold(P['b3_conv2']['w'], P['b3_conv2']['b'], P['b3_bn2'])
    w23, b23 = P['b2_conv2']['w'], P['b2_conv2']['b']       # branch2 3x3: no BN
    w4, b4 = _bn_fold(P['b4_conv']['w'], P['b4_conv']['b'], P['b4_bn'])

    # branch1 + branch2-reduce + branch3-reduce: one fused kernel (x read once).
    y1_2d, t2_2d, t3_2d = fused_reduce_1x1(
        xb.reshape(N * H * W, Cin),
        _w1x1(w1).astype(bf16), b1,
        _w1x1(w2r).astype(bf16), b2r,
        _w1x1(w3r).astype(bf16), b3r)
    y1 = y1_2d.reshape(N, H, W, -1)
    t2 = t2_2d.reshape(N, H, W, -1)
    t3 = t3_2d.reshape(N, H, W, -1)

    y2 = conv3x3_relu(t2, _w3x3(w23).astype(bf16), b23)     # branch2 tail
    y3 = conv3x3_relu(t3, _w3x3(w33).astype(bf16), b33)     # branch3 tail
    y4 = maxpool_conv1x1(xb, _w1x1(w4).astype(bf16), b4)    # branch4 (pool fused)

    # TODO(synk): write the four branches into channel slices of one
    # pre-concatenated buffer (aliased output) to make the final store lane-dense.
    y = jnp.concatenate([y1, y2, y3, y4], axis=-1)
    return jnp.transpose(y, (0, 3, 1, 2))                   # back to NCHW (f32)


# ---------------------------------------------------------------------------
# Pure-JAX reference (for correctness check)
# ---------------------------------------------------------------------------
def ref_forward(x, P, eps=1e-5):
    def conv(x, w, b, pad):
        y = lax.conv_general_dilated(x, w, (1, 1), [(pad, pad), (pad, pad)],
                                     dimension_numbers=('NCHW', 'OIHW', 'NCHW'))
        return y + b[None, :, None, None]

    def bn(x, p):
        g, bt, m, v = p['gamma'], p['beta'], p['mean'], p['var']
        return ((x - m[None, :, None, None]) / jnp.sqrt(v + eps)[None, :, None, None]
                * g[None, :, None, None] + bt[None, :, None, None])

    relu = lambda z: jnp.maximum(z, 0.0)
    y1 = relu(bn(conv(x, P['b1_conv']['w'], P['b1_conv']['b'], 0), P['b1_bn']))
    t = bn(conv(x, P['b2_conv1']['w'], P['b2_conv1']['b'], 0), P['b2_bn'])
    y2 = relu(conv(t, P['b2_conv2']['w'], P['b2_conv2']['b'], 1))
    t = relu(bn(conv(x, P['b3_conv1']['w'], P['b3_conv1']['b'], 0), P['b3_bn1']))
    y3 = relu(bn(conv(t, P['b3_conv2']['w'], P['b3_conv2']['b'], 1), P['b3_bn2']))
    pmax = lax.reduce_window(x, -jnp.inf, lax.max, (1, 1, 3, 3), (1, 1, 1, 1),
                             [(0, 0), (0, 0), (1, 1), (1, 1)])
    y4 = relu(bn(conv(pmax, P['b4_conv']['w'], P['b4_conv']['b'], 0), P['b4_bn']))
    return jnp.concatenate([y1, y2, y3, y4], axis=1)


# ---------------------------------------------------------------------------
if __name__ == "__main__":
    key = jax.random.PRNGKey(0)
    in_channels, n1x1, n3x3_reduce, n3x3, n5x5_reduce, n5x5, pool_plane = 4, 8, 4, 8, 4, 8, 8
    N, H, W = 2, 16, 16

    kx, kp = jax.random.split(key)
    x = jax.random.normal(kx, (N, in_channels, H, W), jnp.float32)
    P = init_params(kp, in_channels, n1x1, n3x3_reduce, n3x3, n5x5_reduce, n5x5,
                    pool_plane)

    fwd = jax.jit(inception_forward)
    out = jax.block_until_ready(fwd(x, P))
    assert out.shape == (N, n1x1 + n3x3 + n5x5 + pool_plane, H, W)

    ref = ref_forward(x, P)
    # bf16 MXU inputs with f32 accumulation: slightly looser tolerance than f32.
    np.testing.assert_allclose(np.asarray(out), np.asarray(ref),
                               rtol=2e-2, atol=2e-2)
    print("KERNEL_OK")
</pallas_src>

<mosaic_0001>
module attributes {stable_mosaic.version = 11 : i64} {
  func.func @_fused_reduce_1x1_kernel(%arg0: i32, %arg1: memref<256x4xbf16, #tpu.memory_space<vmem>>, %arg2: memref<4x8xbf16, #tpu.memory_space<vmem>>, %arg3: memref<1x8xf32, #tpu.memory_space<vmem>>, %arg4: memref<4x4xbf16, #tpu.memory_space<vmem>>, %arg5: memref<1x4xf32, #tpu.memory_space<vmem>>, %arg6: memref<4x4xbf16, #tpu.memory_space<vmem>>, %arg7: memref<1x4xf32, #tpu.memory_space<vmem>>, %arg8: memref<256x8xf32, #tpu.memory_space<vmem>>, %arg9: memref<256x4xbf16, #tpu.memory_space<vmem>>, %arg10: memref<256x4xbf16, #tpu.memory_space<vmem>>) attributes {dimension_semantics = [#tpu.dimension_semantics<parallel>], iteration_bounds = array<i64: 2>, scalar_prefetch = 0 : i64, scratch_operands = 0 : i64, tpu.core_type = #tpu.core_type<tc>, window_params = [{transform_indices = @transform_0, window_bounds = array<i64: 256, 4>}, {pipeline_mode = #tpu.pipeline_mode<synchronous>, transform_indices = @transform_1, window_bounds = array<i64: 4, 8>}, {pipeline_mode = #tpu.pipeline_mode<synchronous>, transform_indices = @transform_2, window_bounds = array<i64: 1, 8>}, {pipeline_mode = #tpu.pipeline_mode<synchronous>, transform_indices = @transform_3, window_bounds = array<i64: 4, 4>}, {pipeline_mode = #tpu.pipeline_mode<synchronous>, transform_indices = @transform_4, window_bounds = array<i64: 1, 4>}, {pipeline_mode = #tpu.pipeline_mode<synchronous>, transform_indices = @transform_5, window_bounds = array<i64: 4, 4>}, {pipeline_mode = #tpu.pipeline_mode<synchronous>, transform_indices = @transform_6, window_bounds = array<i64: 1, 4>}, {transform_indices = @transform_7, window_bounds = array<i64: 256, 8>}, {transform_indices = @transform_8, window_bounds = array<i64: 256, 4>}, {transform_indices = @transform_9, window_bounds = array<i64: 256, 4>}]} {
    %c0 = arith.constant 0 : index
    %c0_0 = arith.constant 0 : index
    %0 = vector.load %arg1[%c0, %c0_0] : memref<256x4xbf16, #tpu.memory_space<vmem>>, vector<256x4xbf16>
    %c0_1 = arith.constant 0 : index
    %c0_2 = arith.constant 0 : index
    %1 = vector.load %arg2[%c0_1, %c0_2] : memref<4x8xbf16, #tpu.memory_space<vmem>>, vector<4x8xbf16>
    %cst = arith.constant dense<0.000000e+00> : vector<256x8xf32>
    %2 = tpu.matmul %0, %1, %cst {dimension_numbers = #tpu.dot_dimension_numbers<[1], [0], [0], [1], [0, 0, 1, 1], [], []>} : vector<256x4xbf16>, vector<4x8xbf16>, vector<256x8xf32> -> vector<256x8xf32>
    %c0_3 = arith.constant 0 : index
    %c0_4 = arith.constant 0 : index
    %3 = vector.load %arg3[%c0_3, %c0_4] : memref<1x8xf32, #tpu.memory_space<vmem>>, vector<1x8xf32>
    %4 = vector.broadcast %3 : vector<1x8xf32> to vector<256x8xf32>
    %5 = arith.addf %2, %4 : vector<256x8xf32>
    %cst_5 = arith.constant 0.000000e+00 : f32
    %6 = vector.broadcast %cst_5 : f32 to vector<256x8xf32>
    %7 = arith.maximumf %5, %6 : vector<256x8xf32>
    %c0_6 = arith.constant 0 : index
    %c0_7 = arith.constant 0 : index
    %8 = vector.load %arg8[%c0_6, %c0_7] : memref<256x8xf32, #tpu.memory_space<vmem>>, vector<256x8xf32>
    tpu.vector_store %arg8[%c0_6, %c0_7], %7 {strides = array<i32>} : memref<256x8xf32, #tpu.memory_space<vmem>>, vector<256x8xf32>,
    %c0_8 = arith.constant 0 : index
    %c0_9 = arith.constant 0 : index
    %9 = vector.load %arg4[%c0_8, %c0_9] : memref<4x4xbf16, #tpu.memory_space<vmem>>, vector<4x4xbf16>
    %cst_10 = arith.constant dense<0.000000e+00> : vector<256x4xf32>
    %10 = tpu.matmul %0, %9, %cst_10 {dimension_numbers = #tpu.dot_dimension_numbers<[1], [0], [0], [1], [0, 0, 1, 1], [], []>} : vector<256x4xbf16>, vector<4x4xbf16>, vector<256x4xf32> -> vector<256x4xf32>
    %c0_11 = arith.constant 0 : index
    %c0_12 = arith.constant 0 : index
    %11 = vector.load %arg5[%c0_11, %c0_12] : memref<1x4xf32, #tpu.memory_space<vmem>>, vector<1x4xf32>
    %12 = vector.broadcast %11 : vector<1x4xf32> to vector<256x4xf32>
    %13 = arith.addf %10, %12 : vector<256x4xf32>
    %14 = arith.truncf %13 : vector<256x4xf32> to vector<256x4xbf16>
    %c0_13 = arith.constant 0 : index
    %c0_14 = arith.constant 0 : index
    %15 = vector.load %arg9[%c0_13, %c0_14] : memref<256x4xbf16, #tpu.memory_space<vmem>>, vector<256x4xbf16>
    tpu.vector_store %arg9[%c0_13, %c0_14], %14 {strides = array<i32>} : memref<256x4xbf16, #tpu.memory_space<vmem>>, vector<256x4xbf16>,
    %c0_15 = arith.constant 0 : index
    %c0_16 = arith.constant 0 : index
    %16 = vector.load %arg6[%c0_15, %c0_16] : memref<4x4xbf16, #tpu.memory_space<vmem>>, vector<4x4xbf16>
    %cst_17 = arith.constant dense<0.000000e+00> : vector<256x4xf32>
    %17 = tpu.matmul %0, %16, %cst_17 {dimension_numbers = #tpu.dot_dimension_numbers<[1], [0], [0], [1], [0, 0, 1, 1], [], []>} : vector<256x4xbf16>, vector<4x4xbf16>, vector<256x4xf32> -> vector<256x4xf32>
    %c0_18 = arith.constant 0 : index
    %c0_19 = arith.constant 0 : index
    %18 = vector.load %arg7[%c0_18, %c0_19] : memref<1x4xf32, #tpu.memory_space<vmem>>, vector<1x4xf32>
    %19 = vector.broadcast %18 : vector<1x4xf32> to vector<256x4xf32>
    %20 = arith.addf %17, %19 : vector<256x4xf32>
    %cst_20 = arith.constant 0.000000e+00 : f32
    %21 = vector.broadcast %cst_20 : f32 to vector<256x4xf32>
    %22 = arith.maximumf %20, %21 : vector<256x4xf32>
    %23 = arith.truncf %22 : vector<256x4xf32> to vector<256x4xbf16>
    %c0_21 = arith.constant 0 : index
    %c0_22 = arith.constant 0 : index
    %24 = vector.load %arg10[%c0_21, %c0_22] : memref<256x4xbf16, #tpu.memory_space<vmem>>, vector<256x4xbf16>
    tpu.vector_store %arg10[%c0_21, %c0_22], %23 {strides = array<i32>} : memref<256x4xbf16, #tpu.memory_space<vmem>>, vector<256x4xbf16>,
    return
  }
  func.func @transform_0(%arg0: i32) -> (i32, i32) {
    %c0_i32 = arith.constant 0 : i32
    %c0_i32_0 = arith.constant 0 : i32
    return %arg0, %c0_i32 : i32, i32
  }
  func.func @transform_1(%arg0: i32) -> (i32, i32) {
    %c0_i32 = arith.constant 0 : i32
    %c0_i32_0 = arith.constant 0 : i32
    %c0_i32_1 = arith.constant 0 : i32
    return %c0_i32, %c0_i32_0 : i32, i32
  }
  func.func @transform_2(%arg0: i32) -> (i32, i32) {
    %c0_i32 = arith.constant 0 : i32
    %c0_i32_0 = arith.constant 0 : i32
    %c0_i32_1 = arith.constant 0 : i32
    return %c0_i32, %c0_i32_0 : i32, i32
  }
  func.func @transform_3(%arg0: i32) -> (i32, i32) {
    %c0_i32 = arith.constant 0 : i32
    %c0_i32_0 = arith.constant 0 : i32
    %c0_i32_1 = arith.constant 0 : i32
    return %c0_i32, %c0_i32_0 : i32, i32
  }
  func.func @transform_4(%arg0: i32) -> (i32, i32) {
    %c0_i32 = arith.constant 0 : i32
    %c0_i32_0 = arith.constant 0 : i32
    %c0_i32_1 = arith.constant 0 : i32
    return %c0_i32, %c0_i32_0 : i32, i32
  }
  func.func @transform_5(%arg0: i32) -> (i32, i32) {
    %c0_i32 = arith.constant 0 : i32
    %c0_i32_0 = arith.constant 0 : i32
    %c0_i32_1 = arith.constant 0 : i32
    return %c0_i32, %c0_i32_0 : i32, i32
  }
  func.func @transform_6(%arg0: i32) -> (i32, i32) {
    %c0_i32 = arith.constant 0 : i32
    %c0_i32_0 = arith.constant 0 : i32
    %c0_i32_1 = arith.constant 0 : i32
    return %c0_i32, %c0_i32_0 : i32, i32
  }
  func.func @transform_7(%arg0: i32) -> (i32, i32) {
    %c0_i32 = arith.constant 0 : i32
    %c0_i32_0 = arith.constant 0 : i32
    return %arg0, %c0_i32 : i32, i32
  }
  func.func @transform_8(%arg0: i32) -> (i32, i32) {
    %c0_i32 = arith.constant 0 : i32
    %c0_i32_0 = arith.constant 0 : i32
    return %arg0, %c0_i32 : i32, i32
  }
  func.func @transform_9(%arg0: i32) -> (i32, i32) {
    %c0_i32 = arith.constant 0 : i32
    %c0_i32_0 = arith.constant 0 : i32
    return %arg0, %c0_i32 : i32, i32
  }
}

module attributes {stable_mosaic.version = 11 : i64} {
  func.func @_maxpool_conv1x1_kernel(%arg0: i32, %arg1: memref<1x16x16x4xbf16, #tpu.memory_space<vmem>>, %arg2: memref<4x8xbf16, #tpu.memory_space<vmem>>, %arg3: memref<1x8xf32, #tpu.memory_space<vmem>>, %arg4: memref<1x16x16x8xf32, #tpu.memory_space<vmem>>, %arg5: memref<18x18x4xf32, #tpu.memory_space<vmem>>) attributes {dimension_semantics = [#tpu.dimension_semantics<parallel>], iteration_bounds = array<i64: 2>, scalar_prefetch = 0 : i64, scratch_operands = 1 : i64, tpu.core_type = #tpu.core_type<tc>, window_params = [{transform_indices = @transform_0, window_bounds = array<i64: 1, 16, 16, 4>}, {pipeline_mode = #tpu.pipeline_mode<synchronous>, transform_indices = @transform_1, window_bounds = array<i64: 4, 8>}, {pipeline_mode = #tpu.pipeline_mode<synchronous>, transform_indices = @transform_2, window_bounds = array<i64: 1, 8>}, {transform_indices = @transform_3, window_bounds = array<i64: 1, 16, 16, 8>}]} {
    %cst = arith.constant 0xFF800000 : f32
    %0 = vector.broadcast %cst : f32 to vector<18x18x4xf32>
    %c0 = arith.constant 0 : index
    %c0_0 = arith.constant 0 : index
    %c0_1 = arith.constant 0 : index
    %1 = vector.load %arg5[%c0, %c0_0, %c0_1] : memref<18x18x4xf32, #tpu.memory_space<vmem>>, vector<18x18x4xf32>
    tpu.vector_store %arg5[%c0, %c0_0, %c0_1], %0 {strides = array<i32>} : memref<18x18x4xf32, #tpu.memory_space<vmem>>, vector<18x18x4xf32>,
    %c0_2 = arith.constant 0 : index
    %c0_3 = arith.constant 0 : index
    %c0_4 = arith.constant 0 : index
    %c0_5 = arith.constant 0 : index
    %2 = vector.load %arg1[%c0_2, %c0_3, %c0_4, %c0_5] : memref<1x16x16x4xbf16, #tpu.memory_space<vmem>>, vector<1x16x16x4xbf16>
    %3 = vector.shape_cast %2 : vector<1x16x16x4xbf16> to vector<16x16x4xbf16>
    %4 = arith.extf %3 : vector<16x16x4xbf16> to vector<16x16x4xf32>
    %c1 = arith.constant 1 : index
    %c1_6 = arith.constant 1 : index
    %c0_7 = arith.constant 0 : index
    %5 = vector.load %arg5[%c1, %c1_6, %c0_7] : memref<18x18x4xf32, #tpu.memory_space<vmem>>, vector<16x16x4xf32>
    tpu.vector_store %arg5[%c1, %c1_6, %c0_7], %4 {strides = array<i32>} : memref<18x18x4xf32, #tpu.memory_space<vmem>>, vector<16x16x4xf32>,
    %c0_8 = arith.constant 0 : index
    %c0_9 = arith.constant 0 : index
    %c0_10 = arith.constant 0 : index
    %6 = vector.load %arg5[%c0_8, %c0_9, %c0_10] : memref<18x18x4xf32, #tpu.memory_space<vmem>>, vector<18x16x4xf32>
    %c0_11 = arith.constant 0 : index
    %c1_12 = arith.constant 1 : index
    %c0_13 = arith.constant 0 : index
    %7 = vector.load %arg5[%c0_11, %c1_12, %c0_13] : memref<18x18x4xf32, #tpu.memory_space<vmem>>, vector<18x16x4xf32>
    %8 = arith.maximumf %6, %7 : vector<18x16x4xf32>
    %c0_14 = arith.constant 0 : index
    %c2 = arith.constant 2 : index
    %c0_15 = arith.constant 0 : index
    %9 = vector.load %arg5[%c0_14, %c2, %c0_15] : memref<18x18x4xf32, #tpu.memory_space<vmem>>, vector<18x16x4xf32>
    %10 = arith.maximumf %8, %9 : vector<18x16x4xf32>
    %11 = vector.extract_strided_slice %10 {offsets = [0, 0, 0], sizes = [16, 16, 4], strides = [1, 1, 1]} : vector<18x16x4xf32> to vector<16x16x4xf32>
    %12 = vector.extract_strided_slice %10 {offsets = [1, 0, 0], sizes = [16, 16, 4], strides = [1, 1, 1]} : vector<18x16x4xf32> to vector<16x16x4xf32>
    %13 = arith.maximumf %11, %12 : vector<16x16x4xf32>
    %14 = vector.extract_strided_slice %10 {offsets = [2, 0, 0], sizes = [16, 16, 4], strides = [1, 1, 1]} : vector<18x16x4xf32> to vector<16x16x4xf32>
    %15 = arith.maximumf %13, %14 : vector<16x16x4xf32>
    %16 = vector.shape_cast %15 : vector<16x16x4xf32> to vector<256x4xf32>
    %17 = arith.truncf %16 : vector<256x4xf32> to vector<256x4xbf16>
    %c0_16 = arith.constant 0 : index
    %c0_17 = arith.constant 0 : index
    %18 = vector.load %arg2[%c0_16, %c0_17] : memref<4x8xbf16, #tpu.memory_space<vmem>>, vector<4x8xbf16>
    %cst_18 = arith.constant dense<0.000000e+00> : vector<256x8xf32>
    %19 = tpu.matmul %17, %18, %cst_18 {dimension_numbers = #tpu.dot_dimension_numbers<[1], [0], [0], [1], [0, 0, 1, 1], [], []>} : vector<256x4xbf16>, vector<4x8xbf16>, vector<256x8xf32> -> vector<256x8xf32>
    %c0_19 = arith.constant 0 : index
    %c0_20 = arith.constant 0 : index
    %20 = vector.load %arg3[%c0_19, %c0_20] : memref<1x8xf32, #tpu.memory_space<vmem>>, vector<1x8xf32>
    %21 = vector.broadcast %20 : vector<1x8xf32> to vector<256x8xf32>
    %22 = arith.addf %19, %21 : vector<256x8xf32>
    %cst_21 = arith.constant 0.000000e+00 : f32
    %23 = vector.broadcast %cst_21 : f32 to vector<256x8xf32>
    %24 = arith.maximumf %22, %23 : vector<256x8xf32>
    %25 = vector.shape_cast %24 : vector<256x8xf32> to vector<16x16x8xf32>
    %c0_22 = arith.constant 0 : index
    %c0_23 = arith.constant 0 : index
    %c0_24 = arith.constant 0 : index
    %c0_25 = arith.constant 0 : index
    %26 = vector.load %arg4[%c0_22, %c0_23, %c0_24, %c0_25] : memref<1x16x16x8xf32, #tpu.memory_space<vmem>>, vector<1x16x16x8xf32>
    %27 = vector.shape_cast %26 : vector<1x16x16x8xf32> to vector<16x16x8xf32>
    %28 = vector.shape_cast %25 : vector<16x16x8xf32> to vector<1x16x16x8xf32>
    tpu.vector_store %arg4[%c0_22, %c0_23, %c0_24, %c0_25], %28 {strides = array<i32>} : memref<1x16x16x8xf32, #tpu.memory_space<vmem>>, vector<1x16x16x8xf32>,
    return
  }
  func.func @transform_0(%arg0: i32) -> (i32, i32, i32, i32) {
    %c0_i32 = arith.constant 0 : i32
    %c0_i32_0 = arith.constant 0 : i32
    %c0_i32_1 = arith.constant 0 : i32
    %c0_i32_2 = arith.constant 0 : i32
    return %arg0, %c0_i32, %c0_i32_0, %c0_i32_1 : i32, i32, i32, i32
  }
  func.func @transform_1(%arg0: i32) -> (i32, i32) {
    %c0_i32 = arith.constant 0 : i32
    %c0_i32_0 = arith.constant 0 : i32
    %c0_i32_1 = arith.constant 0 : i32
    return %c0_i32, %c0_i32_0 : i32, i32
  }
  func.func @transform_2(%arg0: i32) -> (i32, i32) {
    %c0_i32 = arith.constant 0 : i32
    %c0_i32_0 = arith.constant 0 : i32
    %c0_i32_1 = arith.constant 0 : i32
    return %c0_i32, %c0_i32_0 : i32, i32
  }
  func.func @transform_3(%arg0: i32) -> (i32, i32, i32, i32) {
    %c0_i32 = arith.constant 0 : i32
    %c0_i32_0 = arith.constant 0 : i32
    %c0_i32_1 = arith.constant 0 : i32
    %c0_i32_2 = arith.constant 0 : i32
    return %arg0, %c0_i32, %c0_i32_0, %c0_i32_1 : i32, i32, i32, i32
  }
}

module attributes {stable_mosaic.version = 11 : i64} {
  func.func @_conv3x3_kernel(%arg0: i32, %arg1: memref<1x16x16x4xbf16, #tpu.memory_space<vmem>>, %arg2: memref<9x4x8xbf16, #tpu.memory_space<vmem>>, %arg3: memref<1x8xf32, #tpu.memory_space<vmem>>, %arg4: memref<1x16x16x8xf32, #tpu.memory_space<vmem>>, %arg5: memref<18x18x4xf32, #tpu.memory_space<vmem>>) attributes {dimension_semantics = [#tpu.dimension_semantics<parallel>], iteration_bounds = array<i64: 2>, scalar_prefetch = 0 : i64, scratch_operands = 1 : i64, tpu.core_type = #tpu.core_type<tc>, window_params = [{transform_indices = @transform_0, window_bounds = array<i64: 1, 16, 16, 4>}, {pipeline_mode = #tpu.pipeline_mode<synchronous>, transform_indices = @transform_1, window_bounds = array<i64: 9, 4, 8>}, {pipeline_mode = #tpu.pipeline_mode<synchronous>, transform_indices = @transform_2, window_bounds = array<i64: 1, 8>}, {transform_indices = @transform_3, window_bounds = array<i64: 1, 16, 16, 8>}]} {
    %cst = arith.constant 0.000000e+00 : f32
    %0 = vector.broadcast %cst : f32 to vector<18x18x4xf32>
    %c0 = arith.constant 0 : index
    %c0_0 = arith.constant 0 : index
    %c0_1 = arith.constant 0 : index
    %1 = vector.load %arg5[%c0, %c0_0, %c0_1] : memref<18x18x4xf32, #tpu.memory_space<vmem>>, vector<18x18x4xf32>
    tpu.vector_store %arg5[%c0, %c0_0, %c0_1], %0 {strides = array<i32>} : memref<18x18x4xf32, #tpu.memory_space<vmem>>, vector<18x18x4xf32>,
    %c0_2 = arith.constant 0 : index
    %c0_3 = arith.constant 0 : index
    %c0_4 = arith.constant 0 : index
    %c0_5 = arith.constant 0 : index
    %2 = vector.load %arg1[%c0_2, %c0_3, %c0_4, %c0_5] : memref<1x16x16x4xbf16, #tpu.memory_space<vmem>>, vector<1x16x16x4xbf16>
    %3 = vector.shape_cast %2 : vector<1x16x16x4xbf16> to vector<16x16x4xbf16>
    %4 = arith.extf %3 : vector<16x16x4xbf16> to vector<16x16x4xf32>
    %c1 = arith.constant 1 : index
    %c1_6 = arith.constant 1 : index
    %c0_7 = arith.constant 0 : index
    %5 = vector.load %arg5[%c1, %c1_6, %c0_7] : memref<18x18x4xf32, #tpu.memory_space<vmem>>, vector<16x16x4xf32>
    tpu.vector_store %arg5[%c1, %c1_6, %c0_7], %4 {strides = array<i32>} : memref<18x18x4xf32, #tpu.memory_space<vmem>>, vector<16x16x4xf32>,
    %cst_8 = arith.constant 0.000000e+00 : f32
    %6 = vector.broadcast %cst_8 : f32 to vector<256x8xf32>
    %c0_9 = arith.constant 0 : index
    %c0_10 = arith.constant 0 : index
    %c0_11 = arith.constant 0 : index
    %7 = vector.load %arg5[%c0_9, %c0_10, %c0_11] : memref<18x18x4xf32, #tpu.memory_space<vmem>>, vector<16x16x4xf32>
    %8 = vector.shape_cast %7 : vector<16x16x4xf32> to vector<256x4xf32>
    %9 = arith.truncf %8 : vector<256x4xf32> to vector<256x4xbf16>
    %c0_12 = arith.constant 0 : index
    %c0_13 = arith.constant 0 : index
    %c0_14 = arith.constant 0 : index
    %10 = vector.load %arg2[%c0_12, %c0_13, %c0_14] : memref<9x4x8xbf16, #tpu.memory_space<vmem>>, vector<1x4x8xbf16>
    %11 = vector.shape_cast %10 : vector<1x4x8xbf16> to vector<4x8xbf16>
    %cst_15 = arith.constant dense<0.000000e+00> : vector<256x8xf32>
    %12 = tpu.matmul %9, %11, %cst_15 {dimension_numbers = #tpu.dot_dimension_numbers<[1], [0], [0], [1], [0, 0, 1, 1], [], []>} : vector<256x4xbf16>, vector<4x8xbf16>, vector<256x8xf32> -> vector<256x8xf32>
    %13 = arith.addf %6, %12 : vector<256x8xf32>
    %c0_16 = arith.constant 0 : index
    %c1_17 = arith.constant 1 : index
    %c0_18 = arith.constant 0 : index
    %14 = vector.load %arg5[%c0_16, %c1_17, %c0_18] : memref<18x18x4xf32, #tpu.memory_space<vmem>>, vector<16x16x4xf32>
    %15 = vector.shape_cast %14 : vector<16x16x4xf32> to vector<256x4xf32>
    %16 = arith.truncf %15 : vector<256x4xf32> to vector<256x4xbf16>
    %c1_19 = arith.constant 1 : index
    %c0_20 = arith.constant 0 : index
    %c0_21 = arith.constant 0 : index
    %17 = vector.load %arg2[%c1_19, %c0_20, %c0_21] : memref<9x4x8xbf16, #tpu.memory_space<vmem>>, vector<1x4x8xbf16>
    %18 = vector.shape_cast %17 : vector<1x4x8xbf16> to vector<4x8xbf16>
    %cst_22 = arith.constant dense<0.000000e+00> : vector<256x8xf32>
    %19 = tpu.matmul %16, %18, %cst_22 {dimension_numbers = #tpu.dot_dimension_numbers<[1], [0], [0], [1], [0, 0, 1, 1], [], []>} : vector<256x4xbf16>, vector<4x8xbf16>, vector<256x8xf32> -> vector<256x8xf32>
    %20 = arith.addf %13, %19 : vector<256x8xf32>
    %c0_23 = arith.constant 0 : index
    %c2 = arith.constant 2 : index
    %c0_24 = arith.constant 0 : index
    %21 = vector.load %arg5[%c0_23, %c2, %c0_24] : memref<18x18x4xf32, #tpu.memory_space<vmem>>, vector<16x16x4xf32>
    %22 = vector.shape_cast %21 : vector<16x16x4xf32> to vector<256x4xf32>
    %23 = arith.truncf %22 : vector<256x4xf32> to vector<256x4xbf16>
    %c2_25 = arith.constant 2 : index
    %c0_26 = arith.constant 0 : index
    %c0_27 = arith.constant 0 : index
    %24 = vector.load %arg2[%c2_25, %c0_26, %c0_27] : memref<9x4x8xbf16, #tpu.memory_space<vmem>>, vector<1x4x8xbf16>
    %25 = vector.shape_cast %24 : vector<1x4x8xbf16> to vector<4x8xbf16>
    %cst_28 = arith.constant dense<0.000000e+00> : vector<256x8xf32>
    %26 = tpu.matmul %23, %25, %cst_28 {dimension_numbers = #tpu.dot_dimension_numbers<[1], [0], [0], [1], [0, 0, 1, 1], [], []>} : vector<256x4xbf16>, vector<4x8xbf16>, vector<256x8xf32> -> vector<256x8xf32>
    %27 = arith.addf %20, %26 : vector<256x8xf32>
    %c1_29 = arith.constant 1 : index
    %c0_30 = arith.constant 0 : index
    %c0_31 = arith.constant 0 : index
    %28 = vector.load %arg5[%c1_29, %c0_30, %c0_31] : memref<18x18x4xf32, #tpu.memory_space<vmem>>, vector<16x16x4xf32>
    %29 = vector.shape_cast %28 : vector<16x16x4xf32> to vector<256x4xf32>
    %30 = arith.truncf %29 : vector<256x4xf32> to vector<256x4xbf16>
    %c3 = arith.constant 3 : index
    %c0_32 = arith.constant 0 : index
    %c0_33 = arith.constant 0 : index
    %31 = vector.load %arg2[%c3, %c0_32, %c0_33] : memref<9x4x8xbf16, #tpu.memory_space<vmem>>, vector<1x4x8xbf16>
    %32 = vector.shape_cast %31 : vector<1x4x8xbf16> to vector<4x8xbf16>
    %cst_34 = arith.constant dense<0.000000e+00> : vector<256x8xf32>
    %33 = tpu.matmul %30, %32, %cst_34 {dimension_numbers = #tpu.dot_dimension_numbers<[1], [0], [0], [1], [0, 0, 1, 1], [], []>} : vector<256x4xbf16>, vector<4x8xbf16>, vector<256x8xf32> -> vector<256x8xf32>
    %34 = arith.addf %27, %33 : vector<256x8xf32>
    %c1_35 = arith.constant 1 : index
    %c1_36 = arith.constant 1 : index
    %c0_37 = arith.constant 0 : index
    %35 = vector.load %arg5[%c1_35, %c1_36, %c0_37] : memref<18x18x4xf32, #tpu.memory_space<vmem>>, vector<16x16x4xf32>
    %36 = vector.shape_cast %35 : vector<16x16x4xf32> to vector<256x4xf32>
    %37 = arith.truncf %36 : vector<256x4xf32> to vector<256x4xbf16>
    %c4 = arith.constant 4 : index
    %c0_38 = arith.constant 0 : index
    %c0_39 = arith.constant 0 : index
    %38 = vector.load %arg2[%c4, %c0_38, %c0_39] : memref<9x4x8xbf16, #tpu.memory_space<vmem>>, vector<1x4x8xbf16>
    %39 = vector.shape_cast %38 : vector<1x4x8xbf16> to vector<4x8xbf16>
    %cst_40 = arith.constant dense<0.000000e+00> : vector<256x8xf32>
    %40 = tpu.matmul %37, %39, %cst_40 {dimension_numbers = #tpu.dot_dimension_numbers<[1], [0], [0], [1], [0, 0, 1, 1], [], []>} : vector<256x4xbf16>, vector<4x8xbf16>, vector<256x8xf32> -> vector<256x8xf32>
    %41 = arith.addf %34, %40 : vector<256x8xf32>
    %c1_41 = arith.constant 1 : index
    %c2_42 = arith.constant 2 : index
    %c0_43 = arith.constant 0 : index
    %42 = vector.load %arg5[%c1_41, %c2_42, %c0_43] : memref<18x18x4xf32, #tpu.memory_space<vmem>>, vector<16x16x4xf32>
    %43 = vector.shape_cast %42 : vector<16x16x4xf32> to vector<256x4xf32>
    %44 = arith.truncf %43 : vector<256x4xf32> to vector<256x4xbf16>
    %c5 = arith.constant 5 : index
    %c0_44 = arith.constant 0 : index
    %c0_45 = arith.constant 0 : index
    %45 = vector.load %arg2[%c5, %c0_44, %c0_45] : memref<9x4x8xbf16, #tpu.memory_space<vmem>>, vector<1x4x8xbf16>
    %46 = vector.shape_cast %45 : vector<1x4x8xbf16> to vector<4x8xbf16>
    %cst_46 = arith.constant dense<0.000000e+00> : vector<256x8xf32>
    %47 = tpu.matmul %44, %46, %cst_46 {dimension_numbers = #tpu.dot_dimension_numbers<[1], [0], [0], [1], [0, 0, 1, 1], [], []>} : vector<256x4xbf16>, vector<4x8xbf16>, vector<256x8xf32> -> vector<256x8xf32>
    %48 = arith.addf %41, %47 : vector<256x8xf32>
    %c2_47 = arith.constant 2 : index
    %c0_48 = arith.constant 0 : index
    %c0_49 = arith.constant 0 : index
    %49 = vector.load %arg5[%c2_47, %c0_48, %c0_49] : memref<18x18x4xf32, #tpu.memory_space<vmem>>, vector<16x16x4xf32>
    %50 = vector.shape_cast %49 : vector<16x16x4xf32> to vector<256x4xf32>
    %51 = arith.truncf %50 : vector<256x4xf32> to vector<256x4xbf16>
    %c6 = arith.constant 6 : index
    %c0_50 = arith.constant 0 : index
    %c0_51 = arith.constant 0 : index
    %52 = vector.load %arg2[%c6, %c0_50, %c0_51] : memref<9x4x8xbf16, #tpu.memory_space<vmem>>, vector<1x4x8xbf16>
    %53 = vector.shape_cast %52 : vector<1x4x8xbf16> to vector<4x8xbf16>
    %cst_52 = arith.constant dense<0.000000e+00> : vector<256x8xf32>
    %54 = tpu.matmul %51, %53, %cst_52 {dimension_numbers = #tpu.dot_dimension_numbers<[1], [0], [0], [1], [0, 0, 1, 1], [], []>} : vector<256x4xbf16>, vector<4x8xbf16>, vector<256x8xf32> -> vector<256x8xf32>
    %55 = arith.addf %48, %54 : vector<256x8xf32>
    %c2_53 = arith.constant 2 : index
    %c1_54 = arith.constant 1 : index
    %c0_55 = arith.constant 0 : index
    %56 = vector.load %arg5[%c2_53, %c1_54, %c0_55] : memref<18x18x4xf32, #tpu.memory_space<vmem>>, vector<16x16x4xf32>
    %57 = vector.shape_cast %56 : vector<16x16x4xf32> to vector<256x4xf32>
    %58 = arith.truncf %57 : vector<256x4xf32> to vector<256x4xbf16>
    %c7 = arith.constant 7 : index
    %c0_56 = arith.constant 0 : index
    %c0_57 = arith.constant 0 : index
    %59 = vector.load %arg2[%c7, %c0_56, %c0_57] : memref<9x4x8xbf16, #tpu.memory_space<vmem>>, vector<1x4x8xbf16>
    %60 = vector.shape_cast %59 : vector<1x4x8xbf16> to vector<4x8xbf16>
    %cst_58 = arith.constant dense<0.000000e+00> : vector<256x8xf32>
    %61 = tpu.matmul %58, %60, %cst_58 {dimension_numbers = #tpu.dot_dimension_numbers<[1], [0], [0], [1], [0, 0, 1, 1], [], []>} : vector<256x4xbf16>, vector<4x8xbf16>, vector<256x8xf32> -> vector<256x8xf32>
    %62 = arith.addf %55, %61 : vector<256x8xf32>
    %c2_59 = arith.constant 2 : index
    %c2_60 = arith.constant 2 : index
    %c0_61 = arith.constant 0 : index
    %63 = vector.load %arg5[%c2_59, %c2_60, %c0_61] : memref<18x18x4xf32, #tpu.memory_space<vmem>>, vector<16x16x4xf32>
    %64 = vector.shape_cast %63 : vector<16x16x4xf32> to vector<256x4xf32>
    %65 = arith.truncf %64 : vector<256x4xf32> to vector<256x4xbf16>
    %c8 = arith.constant 8 : index
    %c0_62 = arith.constant 0 : index
    %c0_63 = arith.constant 0 : index
    %66 = vector.load %arg2[%c8, %c0_62, %c0_63] : memref<9x4x8xbf16, #tpu.memory_space<vmem>>, vector<1x4x8xbf16>
    %67 = vector.shape_cast %66 : vector<1x4x8xbf16> to vector<4x8xbf16>
    %cst_64 = arith.constant dense<0.000000e+00> : vector<256x8xf32>
    %68 = tpu.matmul %65, %67, %cst_64 {dimension_numbers = #tpu.dot_dimension_numbers<[1], [0], [0], [1], [0, 0, 1, 1], [], []>} : vector<256x4xbf16>, vector<4x8xbf16>, vector<256x8xf32> -> vector<256x8xf32>
    %69 = arith.addf %62, %68 : vector<256x8xf32>
    %c0_65 = arith.constant 0 : index
    %c0_66 = arith.constant 0 : index
    %70 = vector.load %arg3[%c0_65, %c0_66] : memref<1x8xf32, #tpu.memory_space<vmem>>, vector<1x8xf32>
    %71 = vector.broadcast %70 : vector<1x8xf32> to vector<256x8xf32>
    %72 = arith.addf %69, %71 : vector<256x8xf32>
    %cst_67 = arith.constant 0.000000e+00 : f32
    %73 = vector.broadcast %cst_67 : f32 to vector<256x8xf32>
    %74 = arith.maximumf %72, %73 : vector<256x8xf32>
    %75 = vector.shape_cast %74 : vector<256x8xf32> to vector<16x16x8xf32>
    %c0_68 = arith.constant 0 : index
    %c0_69 = arith.constant 0 : index
    %c0_70 = arith.constant 0 : index
    %c0_71 = arith.constant 0 : index
    %76 = vector.load %arg4[%c0_68, %c0_69, %c0_70, %c0_71] : memref<1x16x16x8xf32, #tpu.memory_space<vmem>>, vector<1x16x16x8xf32>
    %77 = vector.shape_cast %76 : vector<1x16x16x8xf32> to vector<16x16x8xf32>
    %78 = vector.shape_cast %75 : vector<16x16x8xf32> to vector<1x16x16x8xf32>
    tpu.vector_store %arg4[%c0_68, %c0_69, %c0_70, %c0_71], %78 {strides = array<i32>} : memref<1x16x16x8xf32, #tpu.memory_space<vmem>>, vector<1x16x16x8xf32>,
    return
  }
  func.func @transform_0(%arg0: i32) -> (i32, i32, i32, i32) {
    %c0_i32 = arith.constant 0 : i32
    %c0_i32_0 = arith.constant 0 : i32
    %c0_i32_1 = arith.constant 0 : i32
    %c0_i32_2 = arith.constant 0 : i32
    return %arg0, %c0_i32, %c0_i32_0, %c0_i32_1 : i32, i32, i32, i32
  }
  func.func @transform_1(%arg0: i32) -> (i32, i32, i32) {
    %c0_i32 = arith.constant 0 : i32
    %c0_i32_0 = arith.constant 0 : i32
    %c0_i32_1 = arith.constant 0 : i32
    %c0_i32_2 = arith.constant 0 : i32
    return %c0_i32, %c0_i32_0, %c0_i32_1 : i32, i32, i32
  }
  func.func @transform_2(%arg0: i32) -> (i32, i32) {
    %c0_i32 = arith.constant 0 : i32
    %c0_i32_0 = arith.constant 0 : i32
    %c0_i32_1 = arith.constant 0 : i32
    return %c0_i32, %c0_i32_0 : i32, i32
  }
  func.func @transform_3(%arg0: i32) -> (i32, i32, i32, i32) {
    %c0_i32 = arith.constant 0 : i32
    %c0_i32_0 = arith.constant 0 : i32
    %c0_i32_1 = arith.constant 0 : i32
    %c0_i32_2 = arith.constant 0 : i32
    return %arg0, %c0_i32, %c0_i32_0, %c0_i32_1 : i32, i32, i32, i32
  }
}

</mosaic_0001>

<llo_original>
// kernel: inception_forward.4
$region0: #{inception_forward.4}
  #allocation0 [shape = 'u32[]', space=smem, size = 0x4, offset = 0x4, fixed_abs, tag = 'smem constant byte address 0x4 - core index']
  #allocation1 [shape = 'u32[144,128]{1,0:T(1,128)}', space=vmem, size = 0x12000, scoped, tag = 'internal scratch']
  %s0 = inlined_call_operand.vmem [shape: bf16[512,4], index: 0, kind: input, shape index: {}]
  %s1 = inlined_call_operand.vmem [shape: bf16[4,8], index: 1, kind: input, shape index: {}]
  %s2 = inlined_call_operand.vmem [shape: f32[1,8], index: 2, kind: input, shape index: {}]
  %s3 = inlined_call_operand.vmem [shape: bf16[4,4], index: 3, kind: input, shape index: {}]
  %s4 = inlined_call_operand.vmem [shape: f32[1,4], index: 4, kind: input, shape index: {}]
  %s5 = inlined_call_operand.vmem [shape: bf16[4,4], index: 5, kind: input, shape index: {}]
  %s6 = inlined_call_operand.vmem [shape: f32[1,4], index: 6, kind: input, shape index: {}]
  %s7 = inlined_call_operand.vmem [shape: f32[512,8], index: 7, kind: output, shape index: {0}]
  %s8 = inlined_call_operand.vmem [shape: bf16[512,4], index: 8, kind: output, shape index: {1}]
  %s9 = inlined_call_operand.vmem [shape: bf16[512,4], index: 9, kind: output, shape index: {2}]
  %10 = xla_tuple %s7, %s8, %s9
  %s11 = sld [smem:[#allocation0]]
  $region77: #{inception_forward.4} parent=0
    _
  %s13 = ssub.s32 1, %s11
  %s14 = scalar_select 0, %s13, %s11
  loop: start=0, step=1, limit=4
  $region2: #{inception_forward.4} parent=0 // loop_pre_header
    _
  $region3: #{inception_forward.4} parent=0 // loop_header
    %s16 = sphi 0, %s20
    %p17 = scmp.ge.s32.totalorder %s16, 4
    %s26 = sphi 0, %s28
    %s29 = sphi 0, %s26
    %s30 = sphi 0, %s29
    %s46 = sphi 0, %s30
    %s50 = sphi 0, %s50
    %s52 = sphi 0, %s50
    %s53 = sphi 0, %s52
    %s67 = sphi 0, %s53
    %s71 = sphi 0, %s71
    %s73 = sphi 0, %s71
    %s74 = sphi 0, %s73
    %s88 = sphi 0, %s74
    %s92 = sphi 0, %s92
    %s94 = sphi 0, %s92
    %s95 = sphi 0, %s94
    %s109 = sphi 0, %s95
    %s113 = sphi 0, %s113
    %s115 = sphi 0, %s113
    %s116 = sphi 0, %s115
    %s130 = sphi 0, %s116
    %s134 = sphi 0, %s134
    %s136 = sphi 0, %s134
    %s137 = sphi 0, %s136
    %s151 = sphi 0, %s137
    %s155 = sphi 0, %s155
    %s157 = sphi 0, %s155
    %s158 = sphi 0, %s157
    %s172 = sphi 0, %s158
    %s178 = sphi 0, %s180
    %s181 = sphi 0, %s178
    %s182 = sphi 0, %s181
    %s198 = sphi 0, %s182
    %s204 = sphi 0, %s206
    %s207 = sphi 0, %s204
    %s208 = sphi 0, %s207
    %s224 = sphi 0, %s208
    %s230 = sphi 0, %s232
    %s233 = sphi 0, %s230
    %s234 = sphi 0, %s233
    %s250 = sphi 0, %s234
  $region4: #{inception_forward.4} parent=0 // loop_header_branch
    %19 = sbr.rel (%p17) target = $region8
  $region5: #{inception_forward.4} parent=0 // loop_body
    %s21 = ssub.s32 %s16, 1
    %s22 = ssub.s32 %s16, 2
    %s23 = sadd.s32 %s16, 1
    %s24 = ssub.s32 %s16, %s23
    %p25 = scmp.eq.s32.totalorder %s24, 0
    %s27 = sadd.s32 %s26, 1
    %s28 = scalar_select %p25, %s26, %s27
    %p31 = pneg %p25
    %p32 = scmp.eq.s32.totalorder %s16, 1
    %p33 = por %p31, %p32
    %p34 = scmp.ne.s32.totalorder %s26, %s29
    %p35 = scmp.eq.s32.totalorder %s16, 0
    %p36 = por %p34, %p35
    %p37 = scmp.ne.s32.totalorder %s26, %s29
    %p38 = scmp.eq.s32.totalorder %s21, 1
    %p39 = por %p37, %p38
    %p40 = scmp.ne.s32.totalorder %s29, %s30
    %p41 = scmp.eq.s32.totalorder %s21, 0
    %p42 = por %p40, %p41
    %p43 = scmp.ne.s32.totalorder %s29, %s30
    %p44 = scmp.eq.s32.totalorder %s22, 1
    %p45 = por %p43, %p44
    %p47 = scmp.ne.s32.totalorder %s30, %s46
    %p48 = scmp.eq.s32.totalorder %s22, 0
    %p49 = por %p47, %p48
    %s51 = sadd.s32 %s50, 1
    %p54 = scmp.eq.s32.totalorder %s16, 1
    %p55 = scmp.ne.s32.totalorder %s50, %s52
    %p56 = scmp.eq.s32.totalorder %s16, 0
    %p57 = por %p55, %p56
    %p58 = scmp.ne.s32.totalorder %s50, %s52
    %p59 = scmp.eq.s32.totalorder %s21, 1
    %p60 = por %p58, %p59
    %p61 = scmp.ne.s32.totalorder %s52, %s53
    %p62 = scmp.eq.s32.totalorder %s21, 0
    %p63 = por %p61, %p62
    %p64 = scmp.ne.s32.totalorder %s52, %s53
    %p65 = scmp.eq.s32.totalorder %s22, 1
    %p66 = por %p64, %p65
    %p68 = scmp.ne.s32.totalorder %s53, %s67
    %p69 = scmp.eq.s32.totalorder %s22, 0
    %p70 = por %p68, %p69
    %s72 = sadd.s32 %s71, 1
    %p75 = scmp.eq.s32.totalorder %s16, 1
    %p76 = scmp.ne.s32.totalorder %s71, %s73
    %p77 = scmp.eq.s32.totalorder %s16, 0
    %p78 = por %p76, %p77
    %p79 = scmp.ne.s32.totalorder %s71, %s73
    %p80 = scmp.eq.s32.totalorder %s21, 1
    %p81 = por %p79, %p80
    %p82 = scmp.ne.s32.totalorder %s73, %s74
    %p83 = scmp.eq.s32.totalorder %s21, 0
    %p84 = por %p82, %p83
    %p85 = scmp.ne.s32.totalorder %s73, %s74
    %p86 = scmp.eq.s32.totalorder %s22, 1
    %p87 = por %p85, %p86
    %p89 = scmp.ne.s32.totalorder %s74, %s88
    %p90 = scmp.eq.s32.totalorder %s22, 0
    %p91 = por %p89, %p90
    %s93 = sadd.s32 %s92, 1
    %p96 = scmp.eq.s32.totalorder %s16, 1
    %p97 = scmp.ne.s32.totalorder %s92, %s94
    %p98 = scmp.eq.s32.totalorder %s16, 0
    %p99 = por %p97, %p98
    %p100 = scmp.ne.s32.totalorder %s92, %s94
    %p101 = scmp.eq.s32.totalorder %s21, 1
    %p102 = por %p100, %p101
    %p103 = scmp.ne.s32.totalorder %s94, %s95
    %p104 = scmp.eq.s32.totalorder %s21, 0
    %p105 = por %p103, %p104
    %p106 = scmp.ne.s32.totalorder %s94, %s95
    %p107 = scmp.eq.s32.totalorder %s22, 1
    %p108 = por %p106, %p107
    %p110 = scmp.ne.s32.totalorder %s95, %s109
    %p111 = scmp.eq.s32.totalorder %s22, 0
    %p112 = por %p110, %p111
    %s114 = sadd.s32 %s113, 1
    %p117 = scmp.eq.s32.totalorder %s16, 1
    %p118 = scmp.ne.s32.totalorder %s113, %s115
    %p119 = scmp.eq.s32.totalorder %s16, 0
    %p120 = por %p118, %p119
    %p121 = scmp.ne.s32.totalorder %s113, %s115
    %p122 = scmp.eq.s32.totalorder %s21, 1
    %p123 = por %p121, %p122
    %p124 = scmp.ne.s32.totalorder %s115, %s116
    %p125 = scmp.eq.s32.totalorder %s21, 0
    %p126 = por %p124, %p125
    %p127 = scmp.ne.s32.totalorder %s115, %s116
    %p128 = scmp.eq.s32.totalorder %s22, 1
    %p129 = por %p127, %p128
    %p131 = scmp.ne.s32.totalorder %s116, %s130
    %p132 = scmp.eq.s32.totalorder %s22, 0
    %p133 = por %p131, %p132
    %s135 = sadd.s32 %s134, 1
    %p138 = scmp.eq.s32.totalorder %s16, 1
    %p139 = scmp.ne.s32.totalorder %s134, %s136
    %p140 = scmp.eq.s32.totalorder %s16, 0
    %p141 = por %p139, %p140
    %p142 = scmp.ne.s32.totalorder %s134, %s136
    %p143 = scmp.eq.s32.totalorder %s21, 1
    %p144 = por %p142, %p143
    %p145 = scmp.ne.s32.totalorder %s136, %s137
    %p146 = scmp.eq.s32.totalorder %s21, 0
    %p147 = por %p145, %p146
    %p148 = scmp.ne.s32.totalorder %s136, %s137
    %p149 = scmp.eq.s32.totalorder %s22, 1
    %p150 = por %p148, %p149
    %p152 = scmp.ne.s32.totalorder %s137, %s151
    %p153 = scmp.eq.s32.totalorder %s22, 0
    %p154 = por %p152, %p153
    %s156 = sadd.s32 %s155, 1
    %p159 = scmp.eq.s32.totalorder %s16, 1
    %p160 = scmp.ne.s32.totalorder %s155, %s157
    %p161 = scmp.eq.s32.totalorder %s16, 0
    %p162 = por %p160, %p161
    %p163 = scmp.ne.s32.totalorder %s155, %s157
    %p164 = scmp.eq.s32.totalorder %s21, 1
    %p165 = por %p163, %p164
    %p166 = scmp.ne.s32.totalorder %s157, %s158
    %p167 = scmp.eq.s32.totalorder %s21, 0
    %p168 = por %p166, %p167
    %p169 = scmp.ne.s32.totalorder %s157, %s158
    %p170 = scmp.eq.s32.totalorder %s22, 1
    %p171 = por %p169, %p170
    %p173 = scmp.ne.s32.totalorder %s158, %s172
    %p174 = scmp.eq.s32.totalorder %s22, 0
    %p175 = por %p173, %p174
    %s176 = ssub.s32 %s16, %s23
    %p177 = scmp.eq.s32.totalorder %s176, 0
    %s179 = sadd.s32 %s178, 1
    %s180 = scalar_select %p177, %s178, %s179
    %p183 = pneg %p177
    %p184 = scmp.eq.s32.totalorder %s16, 1
    %p185 = por %p183, %p184
    %p186 = scmp.ne.s32.totalorder %s178, %s181
    %p187 = scmp.eq.s32.totalorder %s16, 0
    %p188 = por %p186, %p187
    %p189 = scmp.ne.s32.totalorder %s178, %s181
    %p190 = scmp.eq.s32.totalorder %s21, 1
    %p191 = por %p189, %p190
    %p192 = scmp.ne.s32.totalorder %s181, %s182
    %p193 = scmp.eq.s32.totalorder %s21, 0
    %p194 = por %p192, %p193
    %p195 = scmp.ne.s32.totalorder %s181, %s182
    %p196 = scmp.eq.s32.totalorder %s22, 1
    %p197 = por %p195, %p196
    %p199 = scmp.ne.s32.totalorder %s182, %s198
    %p200 = scmp.eq.s32.totalorder %s22, 0
    %p201 = por %p199, %p200
    %s202 = ssub.s32 %s16, %s23
    %p203 = scmp.eq.s32.totalorder %s202, 0
    %s205 = sadd.s32 %s204, 1
    %s206 = scalar_select %p203, %s204, %s205
    %p209 = pneg %p203
    %p210 = scmp.eq.s32.totalorder %s16, 1
    %p211 = por %p209, %p210
    %p212 = scmp.ne.s32.totalorder %s204, %s207
    %p213 = scmp.eq.s32.totalorder %s16, 0
    %p214 = por %p212, %p213
    %p215 = scmp.ne.s32.totalorder %s204, %s207
    %p216 = scmp.eq.s32.totalorder %s21, 1
    %p217 = por %p215, %p216
    %p218 = scmp.ne.s32.totalorder %s207, %s208
    %p219 = scmp.eq.s32.totalorder %s21, 0
    %p220 = por %p218, %p219
    %p221 = scmp.ne.s32.totalorder %s207, %s208
    %p222 = scmp.eq.s32.totalorder %s22, 1
    %p223 = por %p221, %p222
    %p225 = scmp.ne.s32.totalorder %s208, %s224
    %p226 = scmp.eq.s32.totalorder %s22, 0
    %p227 = por %p225, %p226
    %s228 = ssub.s32 %s16, %s23
    %p229 = scmp.eq.s32.totalorder %s228, 0
    %s231 = sadd.s32 %s230, 1
    %s232 = scalar_select %p229, %s230, %s231
    %p235 = pneg %p229
    %p236 = scmp.eq.s32.totalorder %s16, 1
    %p237 = por %p235, %p236
    %p238 = scmp.ne.s32.totalorder %s230, %s233
    %p239 = scmp.eq.s32.totalorder %s16, 0
    %p240 = por %p238, %p239
    %p241 = scmp.ne.s32.totalorder %s230, %s233
    %p242 = scmp.eq.s32.totalorder %s21, 1
    %p243 = por %p241, %p242
    %p244 = scmp.ne.s32.totalorder %s233, %s234
    %p245 = scmp.eq.s32.totalorder %s21, 0
    %p246 = por %p244, %p245
    %p247 = scmp.ne.s32.totalorder %s233, %s234
    %p248 = scmp.eq.s32.totalorder %s22, 1
    %p249 = por %p247, %p248
    %p251 = scmp.ne.s32.totalorder %s234, %s250
    %p252 = scmp.eq.s32.totalorder %s22, 0
    %p253 = por %p251, %p252
    %p254 = scmp.le.s32.totalorder 1, %s16
    %p255 = scmp.lt.s32.totalorder %s16, 3
    %p256 = pnand %p254, %p255
    %p257 = pneg %p256
    // Predicated region
    $region9: #{inception_forward.4} parent=5 // pred_check
      _
    $region10: #{inception_forward.4} parent=5 // pred_check_branch
      %259 = sbr.rel (%p256) target = $region12
    $region11: #{inception_forward.4} parent=5 // pred_region
      %s260 = ssub.s32 %s16, 1
      // Predicated region
      $region13: #{inception_forward.4} parent=11 // pred_check
        %p261 = pneg %p63
      $region14: #{inception_forward.4} parent=11 // pred_check_branch
        %263 = sbr.rel (%p261) target = $region16
      $region15: #{inception_forward.4} parent=11 // pred_region
        _
      $region16: #{inception_forward.4} parent=11 // pred_fallthru
        _
      // Predicated region
      $region17: #{inception_forward.4} parent=11 // pred_check
        %p264 = pneg %p84
      $region18: #{inception_forward.4} parent=11 // pred_check_branch
        %266 = sbr.rel (%p264) target = $region20
      $region19: #{inception_forward.4} parent=11 // pred_region
        _
      $region20: #{inception_forward.4} parent=11 // pred_fallthru
        _
      // Predicated region
      $region21: #{inception_forward.4} parent=11 // pred_check
        %p267 = pneg %p105
      $region22: #{inception_forward.4} parent=11 // pred_check_branch
        %269 = sbr.rel (%p267) target = $region24
      $region23: #{inception_forward.4} parent=11 // pred_region
        _
      $region24: #{inception_forward.4} parent=11 // pred_fallthru
        _
      // Predicated region
      $region25: #{inception_forward.4} parent=11 // pred_check
        %p270 = pneg %p126
      $region26: #{inception_forward.4} parent=11 // pred_check_branch
        %272 = sbr.rel (%p270) target = $region28
      $region27: #{inception_forward.4} parent=11 // pred_region
        _
      $region28: #{inception_forward.4} parent=11 // pred_fallthru
        _
      // Predicated region
      $region29: #{inception_forward.4} parent=11 // pred_check
        %p273 = pneg %p147
      $region30: #{inception_forward.4} parent=11 // pred_check_branch
        %275 = sbr.rel (%p273) target = $region32
      $region31: #{inception_forward.4} parent=11 // pred_region
        _
      $region32: #{inception_forward.4} parent=11 // pred_fallthru
        _
      // Predicated region
      $region33: #{inception_forward.4} parent=11 // pred_check
        %p276 = pneg %p168
      $region34: #{inception_forward.4} parent=11 // pred_check_branch
        %278 = sbr.rel (%p276) target = $region36
      $region35: #{inception_forward.4} parent=11 // pred_region
        _
      $region36: #{inception_forward.4} parent=11 // pred_fallthru
        _
    $region12: #{inception_forward.4} parent=5 // pred_fallthru
      _
    %p279 = scmp.lt.s32.totalorder %s16, 2
    // Predicated region
    $region37: #{inception_forward.4} parent=5 // pred_check
      %p280 = pneg %p279
    $region38: #{inception_forward.4} parent=5 // pred_check_branch
      %282 = sbr.rel (%p280) target = $region40
    $region39: #{inception_forward.4} parent=5 // pred_region
      // Predicated region
      $region41: #{inception_forward.4} parent=39 // pred_check
        %p283 = pneg %p36
      $region42: #{inception_forward.4} parent=39 // pred_check_branch
        %285 = sbr.rel (%p283) target = $region44
      $region43: #{inception_forward.4} parent=39 // pred_region
        %s286 = smul.u32 32, %s16
        %p287 = scmp.lt.s32.totalorder %s286, 63
        %s288 = scalar_select %p287, %s286, 63
        %s289 = smul.addr %s288, 4
        %s290 = scalar_lea.vmem %s0, %s289
        %s291 = smul.u32 32, %s16
      $region44: #{inception_forward.4} parent=39 // pred_fallthru
        _
    $region40: #{inception_forward.4} parent=5 // pred_fallthru
      _
    %p292 = scmp.le.s32.totalorder 1, %s16
    %p293 = scmp.lt.s32.totalorder %s16, 3
    %p294 = pnand %p292, %p293
    %p295 = pneg %p294
    // Predicated region
    $region45: #{inception_forward.4} parent=5 // pred_check
      _
    $region46: #{inception_forward.4} parent=5 // pred_check_branch
      %297 = sbr.rel (%p294) target = $region48
    $region47: #{inception_forward.4} parent=5 // pred_region
      %s298 = ssub.s32 %s16, 1
      %s299 = smul.u32 32, %s21
      %p300 = scmp.lt.s32.totalorder %s299, 63
      %s301 = scalar_select %p300, %s299, 63
      %s302 = smul.addr %s301, 4
      %s303 = scalar_lea.vmem %s0, %s302
      %p304 = pneg %p42
      %p305 = pneg %p39
      %p306 = pneg %p63
      %p307 = pneg %p60
      %p308 = pneg %p84
      %p309 = pneg %p81
      %p310 = pneg %p105
      %p311 = pneg %p102
      %p312 = pneg %p126
      %p313 = pneg %p123
      %p314 = pneg %p147
      %p315 = pneg %p144
      %p316 = pneg %p168
      %p317 = pneg %p165
      %p318 = pneg %p194
      %p319 = pneg %p191
      %s320 = smul.u32 32, %s21
      %p321 = scmp.lt.s32.totalorder %s320, 63
      %s322 = scalar_select %p321, %s320, 63
      %s323 = smul.addr %s322, 8
      %s324 = scalar_lea.vmem %s7, %s323
      %p325 = pneg %p220
      %p326 = pneg %p217
      %s327 = smul.u32 32, %s21
      %p328 = scmp.lt.s32.totalorder %s327, 63
      %s329 = scalar_select %p328, %s327, 63
      %s330 = smul.addr %s329, 4
      %s331 = scalar_lea.vmem %s8, %s330
      %p332 = pneg %p246
      %p333 = pneg %p243
      %s334 = smul.u32 32, %s21
      %p335 = scmp.lt.s32.totalorder %s334, 63
      %s336 = scalar_select %p335, %s334, 63
      %s337 = smul.addr %s336, 4
      %s338 = scalar_lea.vmem %s9, %s337
      %s339 = smul.u32 32, %s21
      %p340 = scmp.lt.s32.totalorder %s339, 63
      %s341 = scalar_select %p340, %s339, 63
      %s342 = smul.addr %s341, 4
      %s343 = scalar_lea.vmem %s0, %s342
      %s344 = smul.u32 32, %s21
      %s345 = smul.u32 32, %s21
      %p346 = scmp.lt.s32.totalorder %s345, 63
      %s347 = scalar_select %p346, %s345, 63
      %s348 = smul.addr %s347, 8
      %s349 = scalar_lea.vmem %s7, %s348
      %s350 = smul.u32 32, %s21
      %s351 = smul.u32 32, %s21
      %p352 = scmp.lt.s32.totalorder %s351, 63
      %s353 = scalar_select %p352, %s351, 63
      %s354 = smul.addr %s353, 4
      %s355 = scalar_lea.vmem %s8, %s354
      %s356 = smul.u32 32, %s21
      %s357 = smul.u32 32, %s21
      %p358 = scmp.lt.s32.totalorder %s357, 63
      %s359 = scalar_select %p358, %s357, 63
      %s360 = smul.addr %s359, 4
      %s361 = scalar_lea.vmem %s9, %s360
      %s362 = smul.u32 32, %s21
      %v364 = vld [vmem:[%s343] sm:$0xf]
      %v365 = vld [vmem:[%s343 + $0x4] sm:$0xf]
      %v366 = vld [vmem:[%s343 + $0x8] sm:$0xf]
      %v367 = vld [vmem:[%s343 + $0xc] sm:$0xf]
      %v368 = vld [vmem:[%s343 + $0x10] sm:$0xf]
      %v369 = vld [vmem:[%s343 + $0x14] sm:$0xf]
      %v370 = vld [vmem:[%s343 + $0x18] sm:$0xf]
      %v371 = vld [vmem:[%s343 + $0x1c] sm:$0xf]
      %v372 = vld [vmem:[%s343 + $0x20] sm:$0xf]
      %v373 = vld [vmem:[%s343 + $0x24] sm:$0xf]
      %v374 = vld [vmem:[%s343 + $0x28] sm:$0xf]
      %v375 = vld [vmem:[%s343 + $0x2c] sm:$0xf]
      %v376 = vld [vmem:[%s343 + $0x30] sm:$0xf]
      %v377 = vld [vmem:[%s343 + $0x34] sm:$0xf]
      %v378 = vld [vmem:[%s343 + $0x38] sm:$0xf]
      %v379 = vld [vmem:[%s343 + $0x3c] sm:$0xf]
      %v380 = vld [vmem:[%s343 + $0x40] sm:$0xf]
      %v381 = vld [vmem:[%s343 + $0x44] sm:$0xf]
      %v382 = vld [vmem:[%s343 + $0x48] sm:$0xf]
      %v383 = vld [vmem:[%s343 + $0x4c] sm:$0xf]
      %v384 = vld [vmem:[%s343 + $0x50] sm:$0xf]
      %v385 = vld [vmem:[%s343 + $0x54] sm:$0xf]
      %v386 = vld [vmem:[%s343 + $0x58] sm:$0xf]
      %v387 = vld [vmem:[%s343 + $0x5c] sm:$0xf]
      %v388 = vld [vmem:[%s343 + $0x60] sm:$0xf]
      %v389 = vld [vmem:[%s343 + $0x64] sm:$0xf]
      %v390 = vld [vmem:[%s343 + $0x68] sm:$0xf]
      %v391 = vld [vmem:[%s343 + $0x6c] sm:$0xf]
      %v392 = vld [vmem:[%s343 + $0x70] sm:$0xf]
      %v393 = vld [vmem:[%s343 + $0x74] sm:$0xf]
      %v394 = vld [vmem:[%s343 + $0x78] sm:$0xf]
      %v395 = vld [vmem:[%s343 + $0x7c] sm:$0xf]
      %v396 = vld [vmem:[%s1] sm:$0x3]
      %v397 = vld [vmem:[%s2] sm:$0x1]
      %v399 = vlaneseq
      %v400 = vshrl.u32 %v399, 7
      %v401 = vsub.s32 0, %v400
      %v402 = vrot.slane %v397, %v401
      %v436 = vunpack.c.l.b16 %v364
      %v437 = vunpack.c.l.b16 %v365
      %v438 = vunpack.c.l.b16 %v366
      %v439 = vunpack.c.l.b16 %v367
      %v440 = vunpack.c.l.b16 %v368
      %v441 = vunpack.c.l.b16 %v369
      %v442 = vunpack.c.l.b16 %v370
      %v443 = vunpack.c.l.b16 %v371
      %v444 = vunpack.c.l.b16 %v372
      %v445 = vunpack.c.l.b16 %v373
      %v446 = vunpack.c.l.b16 %v374
      %v447 = vunpack.c.l.b16 %v375
      %v448 = vunpack.c.l.b16 %v376
      %v449 = vunpack.c.l.b16 %v377
      %v450 = vunpack.c.l.b16 %v378
      %v451 = vunpack.c.l.b16 %v379
      %v452 = vunpack.c.l.b16 %v380
      %v453 = vunpack.c.l.b16 %v381
      %v454 = vunpack.c.l.b16 %v382
      %v455 = vunpack.c.l.b16 %v383
      %v456 = vunpack.c.l.b16 %v384
      %v457 = vunpack.c.l.b16 %v385
      %v458 = vunpack.c.l.b16 %v386
      %v459 = vunpack.c.l.b16 %v387
      %v460 = vunpack.c.l.b16 %v388
      %v461 = vunpack.c.l.b16 %v389
      %v462 = vunpack.c.l.b16 %v390
      %v463 = vunpack.c.l.b16 %v391
      %v464 = vunpack.c.l.b16 %v392
      %v465 = vunpack.c.l.b16 %v393
      %v466 = vunpack.c.l.b16 %v394
      %v467 = vunpack.c.l.b16 %v395
      %v468 = vpack.c.b16 %v437, %v436
      %v469 = vpack.c.b16 %v439, %v438
      %v470 = vpack.c.b16 %v441, %v440
      %v471 = vpack.c.b16 %v443, %v442
      %v472 = vpack.c.b16 %v445, %v444
      %v473 = vpack.c.b16 %v447, %v446
      %v474 = vpack.c.b16 %v449, %v448
      %v475 = vpack.c.b16 %v451, %v450
      %v476 = vpack.c.b16 %v453, %v452
      %v477 = vpack.c.b16 %v455, %v454
      %v478 = vpack.c.b16 %v457, %v456
      %v479 = vpack.c.b16 %v459, %v458
      %v480 = vpack.c.b16 %v461, %v460
      %v481 = vpack.c.b16 %v463, %v462
      %v482 = vpack.c.b16 %v465, %v464
      %v483 = vpack.c.b16 %v467, %v466
      %vm484 = vcmask 31744
      %v486 = vsel %vm484, %v468, 0
      %v489 = vsel %vm484, %v469, 0
      %v492 = vsel %vm484, %v470, 0
      %v495 = vsel %vm484, %v471, 0
      %v498 = vsel %vm484, %v472, 0
      %v501 = vsel %vm484, %v473, 0
      %v504 = vsel %vm484, %v474, 0
      %v507 = vsel %vm484, %v475, 0
      %v510 = vsel %vm484, %v476, 0
      %v513 = vsel %vm484, %v477, 0
      %v516 = vsel %vm484, %v478, 0
      %v519 = vsel %vm484, %v479, 0
      %v522 = vsel %vm484, %v480, 0
      %v525 = vsel %vm484, %v481, 0
      %v528 = vsel %vm484, %v482, 0
      %v531 = vsel %vm484, %v483, 0
      %vm533 = vcmask 1041408
      %v535 = vsel %vm533, %v396, 0
      %537 = vmatprep.subr.bf16.mxu0 0
      %538 = vmatpush1.bf16.msra.mxu0 %v535
      %539 = vmatprep.subr.bf16.mxu0 0
      %540 = vmatpush1.bf16.msra.mxu0 0
      %541 = vmatprep.subr.bf16.mxu0 0
      %542 = vmatpush1.bf16.msra.mxu0 0
      %543 = vmatprep.subr.bf16.mxu0 0
      %544 = vmatpush1.bf16.msra.mxu0 0
      %545 = vmatprep.subr.bf16.mxu0 0
      %546 = vmatpush1.bf16.msra.mxu0 0
      %547 = vmatprep.subr.bf16.mxu0 0
      %548 = vmatpush1.bf16.msra.mxu0 0
      %549 = vmatprep.subr.bf16.mxu0 0
      %550 = vmatpush1.bf16.msra.mxu0 0
      %551 = vmatprep.subr.bf16.mxu0 0
      %552 = vmatpush1.bf16.msra.mxu0 0
      %553 = vmatprep.subr.bf16.mxu0 0
      %554 = vmatpush1.bf16.msra.mxu0 0
      %555 = vmatprep.subr.bf16.mxu0 0
      %556 = vmatpush1.bf16.msra.mxu0 0
      %557 = vmatprep.subr.bf16.mxu0 0
      %558 = vmatpush1.bf16.msra.mxu0 0
      %559 = vmatprep.subr.bf16.mxu0 0
      %560 = vmatpush1.bf16.msra.mxu0 0
      %561 = vmatprep.subr.bf16.mxu0 0
      %562 = vmatpush1.bf16.msra.mxu0 0
      %563 = vmatprep.subr.bf16.mxu0 0
      %564 = vmatpush1.bf16.msra.mxu0 0
      %565 = vmatprep.subr.bf16.mxu0 0
      %566 = vmatpush1.bf16.msra.mxu0 0
      %567 = vmatprep.subr.bf16.mxu0 0
      %568 = vmatpush1.bf16.msra.mxu0 0
      %569 = vmatprep.mubr.bf16.mxu0 0
      %570 = vmatmul.mubr.bf16.gmra.mrb[0].mxu0 %v486
      %v571 = vpop.f32.mrb[0].mxu0
      %v572 = vadd.f32 %v402, %v571
      %v573 = vpop.f32.mrb[0].mxu0
      %v574 = vpop.f32.mrb[0].mxu0
      %v575 = vadd.f32 %v402, %v574
      %v576 = vpop.f32.mrb[0].mxu0
      %577 = vmatprep.mubr.bf16.mxu0 0
      %578 = vmatmul.mubr.bf16.gmra.mrb[0].mxu0 %v489
      %v579 = vpop.f32.mrb[0].mxu0
      %v580 = vadd.f32 %v402, %v579
      %v581 = vpop.f32.mrb[0].mxu0
      %v582 = vpop.f32.mrb[0].mxu0
      %v583 = vadd.f32 %v402, %v582
      %v584 = vpop.f32.mrb[0].mxu0
      %585 = vmatprep.mubr.bf16.mxu0 0
      %586 = vmatmul.mubr.bf16.gmra.mrb[0].mxu0 %v492
      %v587 = vpop.f32.mrb[0].mxu0
      %v588 = vadd.f32 %v402, %v587
      %v589 = vpop.f32.mrb[0].mxu0
      %v590 = vpop.f32.mrb[0].mxu0
      %v591 = vadd.f32 %v402, %v590
      %v592 = vpop.f32.mrb[0].mxu0
      %593 = vmatprep.mubr.bf16.mxu0 0
      %594 = vmatmul.mubr.bf16.gmra.mrb[0].mxu0 %v495
      %v595 = vpop.f32.mrb[0].mxu0
      %v596 = vadd.f32 %v402, %v595
      %v597 = vpop.f32.mrb[0].mxu0
      %v598 = vpop.f32.mrb[0].mxu0
      %v599 = vadd.f32 %v402, %v598
      %v600 = vpop.f32.mrb[0].mxu0
      %601 = vmatprep.mubr.bf16.mxu0 0
      %602 = vmatmul.mubr.bf16.gmra.mrb[0].mxu0 %v498
      %v603 = vpop.f32.mrb[0].mxu0
      %v604 = vadd.f32 %v402, %v603
      %v605 = vpop.f32.mrb[0].mxu0
      %v606 = vpop.f32.mrb[0].mxu0
      %v607 = vadd.f32 %v402, %v606
      %v608 = vpop.f32.mrb[0].mxu0
      %609 = vmatprep.mubr.bf16.mxu0 0
      %610 = vmatmul.mubr.bf16.gmra.mrb[0].mxu0 %v501
      %v611 = vpop.f32.mrb[0].mxu0
      %v612 = vadd.f32 %v402, %v611
      %v613 = vpop.f32.mrb[0].mxu0
      %v614 = vpop.f32.mrb[0].mxu0
      %v615 = vadd.f32 %v402, %v614
      %v616 = vpop.f32.mrb[0].mxu0
      %617 = vmatprep.mubr.bf16.mxu0 0
      %618 = vmatmul.mubr.bf16.gmra.mrb[0].mxu0 %v504
      %v619 = vpop.f32.mrb[0].mxu0
      %v620 = vadd.f32 %v402, %v619
      %v621 = vpop.f32.mrb[0].mxu0
      %v622 = vpop.f32.mrb[0].mxu0
      %v623 = vadd.f32 %v402, %v622
      %v624 = vpop.f32.mrb[0].mxu0
      %625 = vmatprep.mubr.bf16.mxu0 0
      %626 = vmatmul.mubr.bf16.gmra.mrb[0].mxu0 %v507
      %v627 = vpop.f32.mrb[0].mxu0
      %v628 = vadd.f32 %v402, %v627
      %v629 = vpop.f32.mrb[0].mxu0
      %v630 = vpop.f32.mrb[0].mxu0
      %v631 = vadd.f32 %v402, %v630
      %v632 = vpop.f32.mrb[0].mxu0
      %633 = vmatprep.mubr.bf16.mxu0 0
      %634 = vmatmul.mubr.bf16.gmra.mrb[0].mxu0 %v510
      %v635 = vpop.f32.mrb[0].mxu0
      %v636 = vadd.f32 %v402, %v635
      %v637 = vpop.f32.mrb[0].mxu0
      %v638 = vpop.f32.mrb[0].mxu0
      %v639 = vadd.f32 %v402, %v638
      %v640 = vpop.f32.mrb[0].mxu0
      %641 = vmatprep.mubr.bf16.mxu0 0
      %642 = vmatmul.mubr.bf16.gmra.mrb[0].mxu0 %v513
      %v643 = vpop.f32.mrb[0].mxu0
      %v644 = vadd.f32 %v402, %v643
      %v645 = vpop.f32.mrb[0].mxu0
      %v646 = vpop.f32.mrb[0].mxu0
      %v647 = vadd.f32 %v402, %v646
      %v648 = vpop.f32.mrb[0].mxu0
      %649 = vmatprep.mubr.bf16.mxu0 0
      %650 = vmatmul.mubr.bf16.gmra.mrb[0].mxu0 %v516
      %v651 = vpop.f32.mrb[0].mxu0
      %v652 = vadd.f32 %v402, %v651
      %v653 = vpop.f32.mrb[0].mxu0
      %v654 = vpop.f32.mrb[0].mxu0
      %v655 = vadd.f32 %v402, %v654
      %v656 = vpop.f32.mrb[0].mxu0
      %657 = vmatprep.mubr.bf16.mxu0 0
      %658 = vmatmul.mubr.bf16.gmra.mrb[0].mxu0 %v519
      %v659 = vpop.f32.mrb[0].mxu0
      %v660 = vadd.f32 %v402, %v659
      %v661 = vpop.f32.mrb[0].mxu0
      %v662 = vpop.f32.mrb[0].mxu0
      %v663 = vadd.f32 %v402, %v662
      %v664 = vpop.f32.mrb[0].mxu0
      %665 = vmatprep.mubr.bf16.mxu0 0
      %666 = vmatmul.mubr.bf16.gmra.mrb[0].mxu0 %v522
      %v667 = vpop.f32.mrb[0].mxu0
      %v668 = vadd.f32 %v402, %v667
      %v669 = vpop.f32.mrb[0].mxu0
      %v670 = vpop.f32.mrb[0].mxu0
      %v671 = vadd.f32 %v402, %v670
      %v672 = vpop.f32.mrb[0].mxu0
      %673 = vmatprep.mubr.bf16.mxu0 0
      %674 = vmatmul.mubr.bf16.gmra.mrb[0].mxu0 %v525
      %v675 = vpop.f32.mrb[0].mxu0
      %v676 = vadd.f32 %v402, %v675
      %v677 = vpop.f32.mrb[0].mxu0
      %v678 = vpop.f32.mrb[0].mxu0
      %v679 = vadd.f32 %v402, %v678
      %v680 = vpop.f32.mrb[0].mxu0
      %681 = vmatprep.mubr.bf16.mxu0 0
      %682 = vmatmul.mubr.bf16.gmra.mrb[0].mxu0 %v528
      %v683 = vpop.f32.mrb[0].mxu0
      %v684 = vadd.f32 %v402, %v683
      %v685 = vpop.f32.mrb[0].mxu0
      %v686 = vpop.f32.mrb[0].mxu0
      %v687 = vadd.f32 %v402, %v686
      %v688 = vpop.f32.mrb[0].mxu0
      %689 = vmatprep.mubr.bf16.mxu0 0
      %690 = vmatmul.mubr.bf16.gmra.mrb[0].mxu0 %v531
      %v691 = vpop.f32.mrb[0].mxu0
      %v692 = vadd.f32 %v402, %v691
      %v693 = vpop.f32.mrb[0].mxu0
      %v694 = vpop.f32.mrb[0].mxu0
      %v695 = vadd.f32 %v402, %v694
      %v696 = vpop.f32.mrb[0].mxu0
      %697 = vdwg.mxu0
      %v698 = vmax.f32 %v572, 0.0
      %v699 = vmax.f32 %v575, 0.0
      %v700 = vmax.f32 %v580, 0.0
      %v701 = vmax.f32 %v583, 0.0
      %v702 = vmax.f32 %v588, 0.0
      %v703 = vmax.f32 %v591, 0.0
      %v704 = vmax.f32 %v596, 0.0
      %v705 = vmax.f32 %v599, 0.0
      %v706 = vmax.f32 %v604, 0.0
      %v707 = vmax.f32 %v607, 0.0
      %v708 = vmax.f32 %v612, 0.0
      %v709 = vmax.f32 %v615, 0.0
      %v710 = vmax.f32 %v620, 0.0
      %v711 = vmax.f32 %v623, 0.0
      %v712 = vmax.f32 %v628, 0.0
      %v713 = vmax.f32 %v631, 0.0
      %v714 = vmax.f32 %v636, 0.0
      %v715 = vmax.f32 %v639, 0.0
      %v716 = vmax.f32 %v644, 0.0
      %v717 = vmax.f32 %v647, 0.0
      %v718 = vmax.f32 %v652, 0.0
      %v719 = vmax.f32 %v655, 0.0
      %v720 = vmax.f32 %v660, 0.0
      %v721 = vmax.f32 %v663, 0.0
      %v722 = vmax.f32 %v668, 0.0
      %v723 = vmax.f32 %v671, 0.0
      %v724 = vmax.f32 %v676, 0.0
      %v725 = vmax.f32 %v679, 0.0
      %v726 = vmax.f32 %v684, 0.0
      %v727 = vmax.f32 %v687, 0.0
      %v728 = vmax.f32 %v692, 0.0
      %v729 = vmax.f32 %v695, 0.0
      %vm730 = vcmask 64512
      %731 = vst.msk [vmem:[%s349] sm:$0xff] %vm730, %v698
      %732 = vst.msk [vmem:[%s349 + $0x8] sm:$0xff] %vm730, %v699
      %733 = vst.msk [vmem:[%s349 + $0x10] sm:$0xff] %vm730, %v700
      %734 = vst.msk [vmem:[%s349 + $0x18] sm:$0xff] %vm730, %v701
      %735 = vst.msk [vmem:[%s349 + $0x20] sm:$0xff] %vm730, %v702
      %736 = vst.msk [vmem:[%s349 + $0x28] sm:$0xff] %vm730, %v703
      %737 = vst.msk [vmem:[%s349 + $0x30] sm:$0xff] %vm730, %v704
      %738 = vst.msk [vmem:[%s349 + $0x38] sm:$0xff] %vm730, %v705
      %739 = vst.msk [vmem:[%s349 + $0x40] sm:$0xff] %vm730, %v706
      %740 = vst.msk [vmem:[%s349 + $0x48] sm:$0xff] %vm730, %v707
      %741 = vst.msk [vmem:[%s349 + $0x50] sm:$0xff] %vm730, %v708
      %742 = vst.msk [vmem:[%s349 + $0x58] sm:$0xff] %vm730, %v709
      %743 = vst.msk [vmem:[%s349 + $0x60] sm:$0xff] %vm730, %v710
      %744 = vst.msk [vmem:[%s349 + $0x68] sm:$0xff] %vm730, %v711
      %745 = vst.msk [vmem:[%s349 + $0x70] sm:$0xff] %vm730, %v712
      %746 = vst.msk [vmem:[%s349 + $0x78] sm:$0xff] %vm730, %v713
      %747 = vst.msk [vmem:[%s349 + $0x80] sm:$0xff] %vm730, %v714
      %748 = vst.msk [vmem:[%s349 + $0x88] sm:$0xff] %vm730, %v715
      %749 = vst.msk [vmem:[%s349 + $0x90] sm:$0xff] %vm730, %v716
      %750 = vst.msk [vmem:[%s349 + $0x98] sm:$0xff] %vm730, %v717
      %751 = vst.msk [vmem:[%s349 + $0xa0] sm:$0xff] %vm730, %v718
      %752 = vst.msk [vmem:[%s349 + $0xa8] sm:$0xff] %vm730, %v719
      %753 = vst.msk [vmem:[%s349 + $0xb0] sm:$0xff] %vm730, %v720
      %754 = vst.msk [vmem:[%s349 + $0xb8] sm:$0xff] %vm730, %v721
      %755 = vst.msk [vmem:[%s349 + $0xc0] sm:$0xff] %vm730, %v722
      %756 = vst.msk [vmem:[%s349 + $0xc8] sm:$0xff] %vm730, %v723
      %757 = vst.msk [vmem:[%s349 + $0xd0] sm:$0xff] %vm730, %v724
      %758 = vst.msk [vmem:[%s349 + $0xd8] sm:$0xff] %vm730, %v725
      %759 = vst.msk [vmem:[%s349 + $0xe0] sm:$0xff] %vm730, %v726
      %760 = vst.msk [vmem:[%s349 + $0xe8] sm:$0xff] %vm730, %v727
      %761 = vst.msk [vmem:[%s349 + $0xf0] sm:$0xff] %vm730, %v728
      %762 = vst.msk [vmem:[%s349 + $0xf8] sm:$0xff] %vm730, %v729
      %v763 = vld [vmem:[%s3] sm:$0x3]
      %v764 = vld [vmem:[%s4] sm:$0x1]
      %v766 = vlaneseq
      %v767 = vshrl.u32 %v766, 7
      %v768 = vsub.s32 0, %v767
      %v769 = vrot.slane %v764, %v768
      %v772 = vsel %vm533, %v763, 0
      %774 = vmatprep.subr.bf16.mxu0 0
      %775 = vmatpush1.bf16.msra.mxu0 %v772
      %776 = vmatprep.subr.bf16.mxu0 0
      %777 = vmatpush1.bf16.msra.mxu0 0
      %778 = vmatprep.subr.bf16.mxu0 0
      %779 = vmatpush1.bf16.msra.mxu0 0
      %780 = vmatprep.subr.bf16.mxu0 0
      %781 = vmatpush1.bf16.msra.mxu0 0
      %782 = vmatprep.subr.bf16.mxu0 0
      %783 = vmatpush1.bf16.msra.mxu0 0
      %784 = vmatprep.subr.bf16.mxu0 0
      %785 = vmatpush1.bf16.msra.mxu0 0
      %786 = vmatprep.subr.bf16.mxu0 0
      %787 = vmatpush1.bf16.msra.mxu0 0
      %788 = vmatprep.subr.bf16.mxu0 0
      %789 = vmatpush1.bf16.msra.mxu0 0
      %790 = vmatprep.subr.bf16.mxu0 0
      %791 = vmatpush1.bf16.msra.mxu0 0
      %792 = vmatprep.subr.bf16.mxu0 0
      %793 = vmatpush1.bf16.msra.mxu0 0
      %794 = vmatprep.subr.bf16.mxu0 0
      %795 = vmatpush1.bf16.msra.mxu0 0
      %796 = vmatprep.subr.bf16.mxu0 0
      %797 = vmatpush1.bf16.msra.mxu0 0
      %798 = vmatprep.subr.bf16.mxu0 0
      %799 = vmatpush1.bf16.msra.mxu0 0
      %800 = vmatprep.subr.bf16.mxu0 0
      %801 = vmatpush1.bf16.msra.mxu0 0
      %802 = vmatprep.subr.bf16.mxu0 0
      %803 = vmatpush1.bf16.msra.mxu0 0
      %804 = vmatprep.subr.bf16.mxu0 0
      %805 = vmatpush1.bf16.msra.mxu0 0
      %806 = vmatprep.mubr.bf16.mxu0 0
      %807 = vmatmul.mubr.bf16.gmra.mrb[0].mxu0 %v486
      %v808 = vpop.f32.mrb[0].mxu0
      %v809 = vadd.f32 %v769, %v808
      %v810 = vpop.f32.mrb[0].mxu0
      %v811 = vpop.f32.mrb[0].mxu0
      %v812 = vadd.f32 %v769, %v811
      %v813 = vpop.f32.mrb[0].mxu0
      %814 = vmatprep.mubr.bf16.mxu0 0
      %815 = vmatmul.mubr.bf16.gmra.mrb[0].mxu0 %v489
      %v816 = vpop.f32.mrb[0].mxu0
      %v817 = vadd.f32 %v769, %v816
      %v818 = vpop.f32.mrb[0].mxu0
      %v819 = vpop.f32.mrb[0].mxu0
      %v820 = vadd.f32 %v769, %v819
      %v821 = vpop.f32.mrb[0].mxu0
      %822 = vmatprep.mubr.bf16.mxu0 0
      %823 = vmatmul.mubr.bf16.gmra.mrb[0].mxu0 %v492
      %v824 = vpop.f32.mrb[0].mxu0
      %v825 = vadd.f32 %v769, %v824
      %v826 = vpop.f32.mrb[0].mxu0
      %v827 = vpop.f32.mrb[0].mxu0
      %v828 = vadd.f32 %v769, %v827
      %v829 = vpop.f32.mrb[0].mxu0
      %830 = vmatprep.mubr.bf16.mxu0 0
      %831 = vmatmul.mubr.bf16.gmra.mrb[0].mxu0 %v495
      %v832 = vpop.f32.mrb[0].mxu0
      %v833 = vadd.f32 %v769, %v832
      %v834 = vpop.f32.mrb[0].mxu0
      %v835 = vpop.f32.mrb[0].mxu0
      %v836 = vadd.f32 %v769, %v835
      %v837 = vpop.f32.mrb[0].mxu0
      %838 = vmatprep.mubr.bf16.mxu0 0
      %839 = vmatmul.mubr.bf16.gmra.mrb[0].mxu0 %v498
      %v840 = vpop.f32.mrb[0].mxu0
      %v841 = vadd.f32 %v769, %v840
      %v842 = vpop.f32.mrb[0].mxu0
      %v843 = vpop.f32.mrb[0].mxu0
      %v844 = vadd.f32 %v769, %v843
      %v845 = vpop.f32.mrb[0].mxu0
      %846 = vmatprep.mubr.bf16.mxu0 0
      %847 = vmatmul.mubr.bf16.gmra.mrb[0].mxu0 %v501
      %v848 = vpop.f32.mrb[0].mxu0
      %v849 = vadd.f32 %v769, %v848
      %v850 = vpop.f32.mrb[0].mxu0
      %v851 = vpop.f32.mrb[0].mxu0
      %v852 = vadd.f32 %v769, %v851
      %v853 = vpop.f32.mrb[0].mxu0
      %854 = vmatprep.mubr.bf16.mxu0 0
      %855 = vmatmul.mubr.bf16.gmra.mrb[0].mxu0 %v504
      %v856 = vpop.f32.mrb[0].mxu0
      %v857 = vadd.f32 %v769, %v856
      %v858 = vpop.f32.mrb[0].mxu0
      %v859 = vpop.f32.mrb[0].mxu0
      %v860 = vadd.f32 %v769, %v859
      %v861 = vpop.f32.mrb[0].mxu0
      %862 = vmatprep.mubr.bf16.mxu0 0
      %863 = vmatmul.mubr.bf16.gmra.mrb[0].mxu0 %v507
      %v864 = vpop.f32.mrb[0].mxu0
      %v865 = vadd.f32 %v769, %v864
      %v866 = vpop.f32.mrb[0].mxu0
      %v867 = vpop.f32.mrb[0].mxu0
      %v868 = vadd.f32 %v769, %v867
      %v869 = vpop.f32.mrb[0].mxu0
      %870 = vmatprep.mubr.bf16.mxu0 0
      %871 = vmatmul.mubr.bf16.gmra.mrb[0].mxu0 %v510
      %v872 = vpop.f32.mrb[0].mxu0
      %v873 = vadd.f32 %v769, %v872
      %v874 = vpop.f32.mrb[0].mxu0
      %v875 = vpop.f32.mrb[0].mxu0
      %v876 = vadd.f32 %v769, %v875
      %v877 = vpop.f32.mrb[0].mxu0
      %878 = vmatprep.mubr.bf16.mxu0 0
      %879 = vmatmul.mubr.bf16.gmra.mrb[0].mxu0 %v513
      %v880 = vpop.f32.mrb[0].mxu0
      %v881 = vadd.f32 %v769, %v880
      %v882 = vpop.f32.mrb[0].mxu0
      %v883 = vpop.f32.mrb[0].mxu0
      %v884 = vadd.f32 %v769, %v883
      %v885 = vpop.f32.mrb[0].mxu0
      %886 = vmatprep.mubr.bf16.mxu0 0
      %887 = vmatmul.mubr.bf16.gmra.mrb[0].mxu0 %v516
      %v888 = vpop.f32.mrb[0].mxu0
      %v889 = vadd.f32 %v769, %v888
      %v890 = vpop.f32.mrb[0].mxu0
      %v891 = vpop.f32.mrb[0].mxu0
      %v892 = vadd.f32 %v769, %v891
      %v893 = vpop.f32.mrb[0].mxu0
      %894 = vmatprep.mubr.bf16.mxu0 0
      %895 = vmatmul.mubr.bf16.gmra.mrb[0].mxu0 %v519
      %v896 = vpop.f32.mrb[0].mxu0
      %v897 = vadd.f32 %v769, %v896
      %v898 = vpop.f32.mrb[0].mxu0
      %v899 = vpop.f32.mrb[0].mxu0
      %v900 = vadd.f32 %v769, %v899
      %v901 = vpop.f32.mrb[0].mxu0
      %902 = vmatprep.mubr.bf16.mxu0 0
      %903 = vmatmul.mubr.bf16.gmra.mrb[0].mxu0 %v522
      %v904 = vpop.f32.mrb[0].mxu0
      %v905 = vadd.f32 %v769, %v904
      %v906 = vpop.f32.mrb[0].mxu0
      %v907 = vpop.f32.mrb[0].mxu0
      %v908 = vadd.f32 %v769, %v907
      %v909 = vpop.f32.mrb[0].mxu0
      %910 = vmatprep.mubr.bf16.mxu0 0
      %911 = vmatmul.mubr.bf16.gmra.mrb[0].mxu0 %v525
      %v912 = vpop.f32.mrb[0].mxu0
      %v913 = vadd.f32 %v769, %v912
      %v914 = vpop.f32.mrb[0].mxu0
      %v915 = vpop.f32.mrb[0].mxu0
      %v916 = vadd.f32 %v769, %v915
      %v917 = vpop.f32.mrb[0].mxu0
      %918 = vmatprep.mubr.bf16.mxu0 0
      %919 = vmatmul.mubr.bf16.gmra.mrb[0].mxu0 %v528
      %v920 = vpop.f32.mrb[0].mxu0
      %v921 = vadd.f32 %v769, %v920
      %v922 = vpop.f32.mrb[0].mxu0
      %v923 = vpop.f32.mrb[0].mxu0
      %v924 = vadd.f32 %v769, %v923
      %v925 = vpop.f32.mrb[0].mxu0
      %926 = vmatprep.mubr.bf16.mxu0 0
      %927 = vmatmul.mubr.bf16.gmra.mrb[0].mxu0 %v531
      %v928 = vpop.f32.mrb[0].mxu0
      %v929 = vadd.f32 %v769, %v928
      %v930 = vpop.f32.mrb[0].mxu0
      %v931 = vpop.f32.mrb[0].mxu0
      %v932 = vadd.f32 %v769, %v931
      %v933 = vpop.f32.mrb[0].mxu0
      %934 = vdwg.mxu0
      %v935 = vpack.c.bf16 %v812, %v809
      %v936 = vpack.c.bf16 %v820, %v817
      %v937 = vpack.c.bf16 %v828, %v825
      %v938 = vpack.c.bf16 %v836, %v833
      %v939 = vpack.c.bf16 %v844, %v841
      %v940 = vpack.c.bf16 %v852, %v849
      %v941 = vpack.c.bf16 %v860, %v857
      %v942 = vpack.c.bf16 %v868, %v865
      %v943 = vpack.c.bf16 %v876, %v873
      %v944 = vpack.c.bf16 %v884, %v881
      %v945 = vpack.c.bf16 %v892, %v889
      %v946 = vpack.c.bf16 %v900, %v897
      %v947 = vpack.c.bf16 %v908, %v905
      %v948 = vpack.c.bf16 %v916, %v913
      %v949 = vpack.c.bf16 %v924, %v921
      %v950 = vpack.c.bf16 %v932, %v929
      %v967 = vunpack.c.l.b16 %v935
      %v968 = vunpack.c.h.b16 %v935
      %v969 = vunpack.c.l.b16 %v936
      %v970 = vunpack.c.h.b16 %v936
      %v971 = vunpack.c.l.b16 %v937
      %v972 = vunpack.c.h.b16 %v937
      %v973 = vunpack.c.l.b16 %v938
      %v974 = vunpack.c.h.b16 %v938
      %v975 = vunpack.c.l.b16 %v939
      %v976 = vunpack.c.h.b16 %v939
      %v977 = vunpack.c.l.b16 %v940
      %v978 = vunpack.c.h.b16 %v940
      %v979 = vunpack.c.l.b16 %v941
      %v980 = vunpack.c.h.b16 %v941
      %v981 = vunpack.c.l.b16 %v942
      %v982 = vunpack.c.h.b16 %v942
      %v983 = vunpack.c.l.b16 %v943
      %v984 = vunpack.c.h.b16 %v943
      %v985 = vunpack.c.l.b16 %v944
      %v986 = vunpack.c.h.b16 %v944
      %v987 = vunpack.c.l.b16 %v945
      %v988 = vunpack.c.h.b16 %v945
      %v989 = vunpack.c.l.b16 %v946
      %v990 = vunpack.c.h.b16 %v946
      %v991 = vunpack.c.l.b16 %v947
      %v992 = vunpack.c.h.b16 %v947
      %v993 = vunpack.c.l.b16 %v948
      %v994 = vunpack.c.h.b16 %v948
      %v995 = vunpack.c.l.b16 %v949
      %v996 = vunpack.c.h.b16 %v949
      %v997 = vunpack.c.l.b16 %v950
      %v998 = vunpack.c.h.b16 %v950
      %v999 = vpack.c.b16 %v967, %v967
      %v1000 = vpack.c.b16 %v968, %v968
      %v1001 = vpack.c.b16 %v969, %v969
      %v1002 = vpack.c.b16 %v970, %v970
      %v1003 = vpack.c.b16 %v971, %v971
      %v1004 = vpack.c.b16 %v972, %v972
      %v1005 = vpack.c.b16 %v973, %v973
      %v1006 = vpack.c.b16 %v974, %v974
      %v1007 = vpack.c.b16 %v975, %v975
      %v1008 = vpack.c.b16 %v976, %v976
      %v1009 = vpack.c.b16 %v977, %v977
      %v1010 = vpack.c.b16 %v978, %v978
      %v1011 = vpack.c.b16 %v979, %v979
      %v1012 = vpack.c.b16 %v980, %v980
      %v1013 = vpack.c.b16 %v981, %v981
      %v1014 = vpack.c.b16 %v982, %v982
      %v1015 = vpack.c.b16 %v983, %v983
      %v1016 = vpack.c.b16 %v984, %v984
      %v1017 = vpack.c.b16 %v985, %v985
      %v1018 = vpack.c.b16 %v986, %v986
      %v1019 = vpack.c.b16 %v987, %v987
      %v1020 = vpack.c.b16 %v988, %v988
      %v1021 = vpack.c.b16 %v989, %v989
      %v1022 = vpack.c.b16 %v990, %v990
      %v1023 = vpack.c.b16 %v991, %v991
      %v1024 = vpack.c.b16 %v992, %v992
      %v1025 = vpack.c.b16 %v993, %v993
      %v1026 = vpack.c.b16 %v994, %v994
      %v1027 = vpack.c.b16 %v995, %v995
      %v1028 = vpack.c.b16 %v996, %v996
      %v1029 = vpack.c.b16 %v997, %v997
      %v1030 = vpack.c.b16 %v998, %v998
      %vm1063 = vcmask 27648
      %1064 = vst.msk [vmem:[%s355] sm:$0xf] %vm1063, %v999
      %1065 = vst.msk [vmem:[%s355 + $0x4] sm:$0xf] %vm1063, %v1000
      %1066 = vst.msk [vmem:[%s355 + $0x8] sm:$0xf] %vm1063, %v1001
      %1067 = vst.msk [vmem:[%s355 + $0xc] sm:$0xf] %vm1063, %v1002
      %1068 = vst.msk [vmem:[%s355 + $0x10] sm:$0xf] %vm1063, %v1003
      %1069 = vst.msk [vmem:[%s355 + $0x14] sm:$0xf] %vm1063, %v1004
      %1070 = vst.msk [vmem:[%s355 + $0x18] sm:$0xf] %vm1063, %v1005
      %1071 = vst.msk [vmem:[%s355 + $0x1c] sm:$0xf] %vm1063, %v1006
      %1072 = vst.msk [vmem:[%s355 + $0x20] sm:$0xf] %vm1063, %v1007
      %1073 = vst.msk [vmem:[%s355 + $0x24] sm:$0xf] %vm1063, %v1008
      %1074 = vst.msk [vmem:[%s355 + $0x28] sm:$0xf] %vm1063, %v1009
      %1075 = vst.msk [vmem:[%s355 + $0x2c] sm:$0xf] %vm1063, %v1010
      %1076 = vst.msk [vmem:[%s355 + $0x30] sm:$0xf] %vm1063, %v1011
      %1077 = vst.msk [vmem:[%s355 + $0x34] sm:$0xf] %vm1063, %v1012
      %1078 = vst.msk [vmem:[%s355 + $0x38] sm:$0xf] %vm1063, %v1013
      %1079 = vst.msk [vmem:[%s355 + $0x3c] sm:$0xf] %vm1063, %v1014
      %1080 = vst.msk [vmem:[%s355 + $0x40] sm:$0xf] %vm1063, %v1015
      %1081 = vst.msk [vmem:[%s355 + $0x44] sm:$0xf] %vm1063, %v1016
      %1082 = vst.msk [vmem:[%s355 + $0x48] sm:$0xf] %vm1063, %v1017
      %1083 = vst.msk [vmem:[%s355 + $0x4c] sm:$0xf] %vm1063, %v1018
      %1084 = vst.msk [vmem:[%s355 + $0x50] sm:$0xf] %vm1063, %v1019
      %1085 = vst.msk [vmem:[%s355 + $0x54] sm:$0xf] %vm1063, %v1020
      %1086 = vst.msk [vmem:[%s355 + $0x58] sm:$0xf] %vm1063, %v1021
      %1087 = vst.msk [vmem:[%s355 + $0x5c] sm:$0xf] %vm1063, %v1022
      %1088 = vst.msk [vmem:[%s355 + $0x60] sm:$0xf] %vm1063, %v1023
      %1089 = vst.msk [vmem:[%s355 + $0x64] sm:$0xf] %vm1063, %v1024
      %1090 = vst.msk [vmem:[%s355 + $0x68] sm:$0xf] %vm1063, %v1025
      %1091 = vst.msk [vmem:[%s355 + $0x6c] sm:$0xf] %vm1063, %v1026
      %1092 = vst.msk [vmem:[%s355 + $0x70] sm:$0xf] %vm1063, %v1027
      %1093 = vst.msk [vmem:[%s355 + $0x74] sm:$0xf] %vm1063, %v1028
      %1094 = vst.msk [vmem:[%s355 + $0x78] sm:$0xf] %vm1063, %v1029
      %1095 = vst.msk [vmem:[%s355 + $0x7c] sm:$0xf] %vm1063, %v1030
      %v1096 = vld [vmem:[%s5] sm:$0x3]
      %v1097 = vld [vmem:[%s6] sm:$0x1]
      %v1099 = vlaneseq
      %v1100 = vshrl.u32 %v1099, 7
      %v1101 = vsub.s32 0, %v1100
      %v1102 = vrot.slane %v1097, %v1101
      %v1105 = vsel %vm533, %v1096, 0
      %1107 = vmatprep.subr.bf16.mxu0 0
      %1108 = vmatpush1.bf16.msra.mxu0 %v1105
      %1109 = vmatprep.subr.bf16.mxu0 0
      %1110 = vmatpush1.bf16.msra.mxu0 0
      %1111 = vmatprep.subr.bf16.mxu0 0
      %1112 = vmatpush1.bf16.msra.mxu0 0
      %1113 = vmatprep.subr.bf16.mxu0 0
      %1114 = vmatpush1.bf16.msra.mxu0 0
      %1115 = vmatprep.subr.bf16.mxu0 0
      %1116 = vmatpush1.bf16.msra.mxu0 0
      %1117 = vmatprep.subr.bf16.mxu0 0
      %1118 = vmatpush1.bf16.msra.mxu0 0
      %1119 = vmatprep.subr.bf16.mxu0 0
      %1120 = vmatpush1.bf16.msra.mxu0 0
      %1121 = vmatprep.subr.bf16.mxu0 0
      %1122 = vmatpush1.bf16.msra.mxu0 0
      %1123 = vmatprep.subr.bf16.mxu0 0
      %1124 = vmatpush1.bf16.msra.mxu0 0
      %1125 = vmatprep.subr.bf16.mxu0 0
      %1126 = vmatpush1.bf16.msra.mxu0 0
      %1127 = vmatprep.subr.bf16.mxu0 0
      %1128 = vmatpush1.bf16.msra.mxu0 0
      %1129 = vmatprep.subr.bf16.mxu0 0
      %1130 = vmatpush1.bf16.msra.mxu0 0
      %1131 = vmatprep.subr.bf16.mxu0 0
      %1132 = vmatpush1.bf16.msra.mxu0 0
      %1133 = vmatprep.subr.bf16.mxu0 0
      %1134 = vmatpush1.bf16.msra.mxu0 0
      %1135 = vmatprep.subr.bf16.mxu0 0
      %1136 = vmatpush1.bf16.msra.mxu0 0
      %1137 = vmatprep.subr.bf16.mxu0 0
      %1138 = vmatpush1.bf16.msra.mxu0 0
      %1139 = vmatprep.mubr.bf16.mxu0 0
      %1140 = vmatmul.mubr.bf16.gmra.mrb[0].mxu0 %v486
      %v1141 = vpop.f32.mrb[0].mxu0
      %v1142 = vadd.f32 %v1102, %v1141
      %v1143 = vpop.f32.mrb[0].mxu0
      %v1144 = vpop.f32.mrb[0].mxu0
      %v1145 = vadd.f32 %v1102, %v1144
      %v1146 = vpop.f32.mrb[0].mxu0
      %1147 = vmatprep.mubr.bf16.mxu0 0
      %1148 = vmatmul.mubr.bf16.gmra.mrb[0].mxu0 %v489
      %v1149 = vpop.f32.mrb[0].mxu0
      %v1150 = vadd.f32 %v1102, %v1149
      %v1151 = vpop.f32.mrb[0].mxu0
      %v1152 = vpop.f32.mrb[0].mxu0
      %v1153 = vadd.f32 %v1102, %v1152
      %v1154 = vpop.f32.mrb[0].mxu0
      %1155 = vmatprep.mubr.bf16.mxu0 0
      %1156 = vmatmul.mubr.bf16.gmra.mrb[0].mxu0 %v492
      %v1157 = vpop.f32.mrb[0].mxu0
      %v1158 = vadd.f32 %v1102, %v1157
      %v1159 = vpop.f32.mrb[0].mxu0
      %v1160 = vpop.f32.mrb[0].mxu0
      %v1161 = vadd.f32 %v1102, %v1160
      %v1162 = vpop.f32.mrb[0].mxu0
      %1163 = vmatprep.mubr.bf16.mxu0 0
      %1164 = vmatmul.mubr.bf16.gmra.mrb[0].mxu0 %v495
      %v1165 = vpop.f32.mrb[0].mxu0
      %v1166 = vadd.f32 %v1102, %v1165
      %v1167 = vpop.f32.mrb[0].mxu0
      %v1168 = vpop.f32.mrb[0].mxu0
      %v1169 = vadd.f32 %v1102, %v1168
      %v1170 = vpop.f32.mrb[0].mxu0
      %1171 = vmatprep.mubr.bf16.mxu0 0
      %1172 = vmatmul.mubr.bf16.gmra.mrb[0].mxu0 %v498
      %v1173 = vpop.f32.mrb[0].mxu0
      %v1174 = vadd.f32 %v1102, %v1173
      %v1175 = vpop.f32.mrb[0].mxu0
      %v1176 = vpop.f32.mrb[0].mxu0
      %v1177 = vadd.f32 %v1102, %v1176
      %v1178 = vpop.f32.mrb[0].mxu0
      %1179 = vmatprep.mubr.bf16.mxu0 0
      %1180 = vmatmul.mubr.bf16.gmra.mrb[0].mxu0 %v501
      %v1181 = vpop.f32.mrb[0].mxu0
      %v1182 = vadd.f32 %v1102, %v1181
      %v1183 = vpop.f32.mrb[0].mxu0
      %v1184 = vpop.f32.mrb[0].mxu0
      %v1185 = vadd.f32 %v1102, %v1184
      %v1186 = vpop.f32.mrb[0].mxu0
      %1187 = vmatprep.mubr.bf16.mxu0 0
      %1188 = vmatmul.mubr.bf16.gmra.mrb[0].mxu0 %v504
      %v1189 = vpop.f32.mrb[0].mxu0
      %v1190 = vadd.f32 %v1102, %v1189
      %v1191 = vpop.f32.mrb[0].mxu0
      %v1192 = vpop.f32.mrb[0].mxu0
      %v1193 = vadd.f32 %v1102, %v1192
      %v1194 = vpop.f32.mrb[0].mxu0
      %1195 = vmatprep.mubr.bf16.mxu0 0
      %1196 = vmatmul.mubr.bf16.gmra.mrb[0].mxu0 %v507
      %v1197 = vpop.f32.mrb[0].mxu0
      %v1198 = vadd.f32 %v1102, %v1197
      %v1199 = vpop.f32.mrb[0].mxu0
      %v1200 = vpop.f32.mrb[0].mxu0
      %v1201 = vadd.f32 %v1102, %v1200
      %v1202 = vpop.f32.mrb[0].mxu0
      %1203 = vmatprep.mubr.bf16.mxu0 0
      %1204 = vmatmul.mubr.bf16.gmra.mrb[0].mxu0 %v510
      %v1205 = vpop.f32.mrb[0].mxu0
      %v1206 = vadd.f32 %v1102, %v1205
      %v1207 = vpop.f32.mrb[0].mxu0
      %v1208 = vpop.f32.mrb[0].mxu0
      %v1209 = vadd.f32 %v1102, %v1208
      %v1210 = vpop.f32.mrb[0].mxu0
      %1211 = vmatprep.mubr.bf16.mxu0 0
      %1212 = vmatmul.mubr.bf16.gmra.mrb[0].mxu0 %v513
      %v1213 = vpop.f32.mrb[0].mxu0
      %v1214 = vadd.f32 %v1102, %v1213
      %v1215 = vpop.f32.mrb[0].mxu0
      %v1216 = vpop.f32.mrb[0].mxu0
      %v1217 = vadd.f32 %v1102, %v1216
      %v1218 = vpop.f32.mrb[0].mxu0
      %1219 = vmatprep.mubr.bf16.mxu0 0
      %1220 = vmatmul.mubr.bf16.gmra.mrb[0].mxu0 %v516
      %v1221 = vpop.f32.mrb[0].mxu0
      %v1222 = vadd.f32 %v1102, %v1221
      %v1223 = vpop.f32.mrb[0].mxu0
      %v1224 = vpop.f32.mrb[0].mxu0
      %v1225 = vadd.f32 %v1102, %v1224
      %v1226 = vpop.f32.mrb[0].mxu0
      %1227 = vmatprep.mubr.bf16.mxu0 0
      %1228 = vmatmul.mubr.bf16.gmra.mrb[0].mxu0 %v519
      %v1229 = vpop.f32.mrb[0].mxu0
      %v1230 = vadd.f32 %v1102, %v1229
      %v1231 = vpop.f32.mrb[0].mxu0
      %v1232 = vpop.f32.mrb[0].mxu0
      %v1233 = vadd.f32 %v1102, %v1232
      %v1234 = vpop.f32.mrb[0].mxu0
      %1235 = vmatprep.mubr.bf16.mxu0 0
      %1236 = vmatmul.mubr.bf16.gmra.mrb[0].mxu0 %v522
      %v1237 = vpop.f32.mrb[0].mxu0
      %v1238 = vadd.f32 %v1102, %v1237
      %v1239 = vpop.f32.mrb[0].mxu0
      %v1240 = vpop.f32.mrb[0].mxu0
      %v1241 = vadd.f32 %v1102, %v1240
      %v1242 = vpop.f32.mrb[0].mxu0
      %1243 = vmatprep.mubr.bf16.mxu0 0
      %1244 = vmatmul.mubr.bf16.gmra.mrb[0].mxu0 %v525
      %v1245 = vpop.f32.mrb[0].mxu0
      %v1246 = vadd.f32 %v1102, %v1245
      %v1247 = vpop.f32.mrb[0].mxu0
      %v1248 = vpop.f32.mrb[0].mxu0
      %v1249 = vadd.f32 %v1102, %v1248
      %v1250 = vpop.f32.mrb[0].mxu0
      %1251 = vmatprep.mubr.bf16.mxu0 0
      %1252 = vmatmul.mubr.bf16.gmra.mrb[0].mxu0 %v528
      %v1253 = vpop.f32.mrb[0].mxu0
      %v1254 = vadd.f32 %v1102, %v1253
      %v1255 = vpop.f32.mrb[0].mxu0
      %v1256 = vpop.f32.mrb[0].mxu0
      %v1257 = vadd.f32 %v1102, %v1256
      %v1258 = vpop.f32.mrb[0].mxu0
      %1259 = vmatprep.mubr.bf16.mxu0 0
      %1260 = vmatmul.mubr.bf16.gmra.mrb[0].mxu0 %v531
      %v1261 = vpop.f32.mrb[0].mxu0
      %v1262 = vadd.f32 %v1102, %v1261
      %v1263 = vpop.f32.mrb[0].mxu0
      %v1264 = vpop.f32.mrb[0].mxu0
      %v1265 = vadd.f32 %v1102, %v1264
      %v1266 = vpop.f32.mrb[0].mxu0
      %1267 = vdwg.mxu0
      %v1268 = vmax.f32 %v1142, 0.0
      %v1269 = vmax.f32 %v1145, 0.0
      %v1270 = vmax.f32 %v1150, 0.0
      %v1271 = vmax.f32 %v1153, 0.0
      %v1272 = vmax.f32 %v1158, 0.0
      %v1273 = vmax.f32 %v1161, 0.0
      %v1274 = vmax.f32 %v1166, 0.0
      %v1275 = vmax.f32 %v1169, 0.0
      %v1276 = vmax.f32 %v1174, 0.0
      %v1277 = vmax.f32 %v1177, 0.0
      %v1278 = vmax.f32 %v1182, 0.0
      %v1279 = vmax.f32 %v1185, 0.0
      %v1280 = vmax.f32 %v1190, 0.0
      %v1281 = vmax.f32 %v1193, 0.0
      %v1282 = vmax.f32 %v1198, 0.0
      %v1283 = vmax.f32 %v1201, 0.0
      %v1284 = vmax.f32 %v1206, 0.0
      %v1285 = vmax.f32 %v1209, 0.0
      %v1286 = vmax.f32 %v1214, 0.0
      %v1287 = vmax.f32 %v1217, 0.0
      %v1288 = vmax.f32 %v1222, 0.0
      %v1289 = vmax.f32 %v1225, 0.0
      %v1290 = vmax.f32 %v1230, 0.0
      %v1291 = vmax.f32 %v1233, 0.0
      %v1292 = vmax.f32 %v1238, 0.0
      %v1293 = vmax.f32 %v1241, 0.0
      %v1294 = vmax.f32 %v1246, 0.0
      %v1295 = vmax.f32 %v1249, 0.0
      %v1296 = vmax.f32 %v1254, 0.0
      %v1297 = vmax.f32 %v1257, 0.0
      %v1298 = vmax.f32 %v1262, 0.0
      %v1299 = vmax.f32 %v1265, 0.0
      %v1300 = vpack.c.bf16 %v1269, %v1268
      %v1301 = vpack.c.bf16 %v1271, %v1270
      %v1302 = vpack.c.bf16 %v1273, %v1272
      %v1303 = vpack.c.bf16 %v1275, %v1274
      %v1304 = vpack.c.bf16 %v1277, %v1276
      %v1305 = vpack.c.bf16 %v1279, %v1278
      %v1306 = vpack.c.bf16 %v1281, %v1280
      %v1307 = vpack.c.bf16 %v1283, %v1282
      %v1308 = vpack.c.bf16 %v1285, %v1284
      %v1309 = vpack.c.bf16 %v1287, %v1286
      %v1310 = vpack.c.bf16 %v1289, %v1288
      %v1311 = vpack.c.bf16 %v1291, %v1290
      %v1312 = vpack.c.bf16 %v1293, %v1292
      %v1313 = vpack.c.bf16 %v1295, %v1294
      %v1314 = vpack.c.bf16 %v1297, %v1296
      %v1315 = vpack.c.bf16 %v1299, %v1298
      %v1332 = vunpack.c.l.b16 %v1300
      %v1333 = vunpack.c.h.b16 %v1300
      %v1334 = vunpack.c.l.b16 %v1301
      %v1335 = vunpack.c.h.b16 %v1301
      %v1336 = vunpack.c.l.b16 %v1302
      %v1337 = vunpack.c.h.b16 %v1302
      %v1338 = vunpack.c.l.b16 %v1303
      %v1339 = vunpack.c.h.b16 %v1303
      %v1340 = vunpack.c.l.b16 %v1304
      %v1341 = vunpack.c.h.b16 %v1304
      %v1342 = vunpack.c.l.b16 %v1305
      %v1343 = vunpack.c.h.b16 %v1305
      %v1344 = vunpack.c.l.b16 %v1306
      %v1345 = vunpack.c.h.b16 %v1306
      %v1346 = vunpack.c.l.b16 %v1307
      %v1347 = vunpack.c.h.b16 %v1307
      %v1348 = vunpack.c.l.b16 %v1308
      %v1349 = vunpack.c.h.b16 %v1308
      %v1350 = vunpack.c.l.b16 %v1309
      %v1351 = vunpack.c.h.b16 %v1309
      %v1352 = vunpack.c.l.b16 %v1310
      %v1353 = vunpack.c.h.b16 %v1310
      %v1354 = vunpack.c.l.b16 %v1311
      %v1355 = vunpack.c.h.b16 %v1311
      %v1356 = vunpack.c.l.b16 %v1312
      %v1357 = vunpack.c.h.b16 %v1312
      %v1358 = vunpack.c.l.b16 %v1313
      %v1359 = vunpack.c.h.b16 %v1313
      %v1360 = vunpack.c.l.b16 %v1314
      %v1361 = vunpack.c.h.b16 %v1314
      %v1362 = vunpack.c.l.b16 %v1315
      %v1363 = vunpack.c.h.b16 %v1315
      %v1364 = vpack.c.b16 %v1332, %v1332
      %v1365 = vpack.c.b16 %v1333, %v1333
      %v1366 = vpack.c.b16 %v1334, %v1334
      %v1367 = vpack.c.b16 %v1335, %v1335
      %v1368 = vpack.c.b16 %v1336, %v1336
      %v1369 = vpack.c.b16 %v1337, %v1337
      %v1370 = vpack.c.b16 %v1338, %v1338
      %v1371 = vpack.c.b16 %v1339, %v1339
      %v1372 = vpack.c.b16 %v1340, %v1340
      %v1373 = vpack.c.b16 %v1341, %v1341
      %v1374 = vpack.c.b16 %v1342, %v1342
      %v1375 = vpack.c.b16 %v1343, %v1343
      %v1376 = vpack.c.b16 %v1344, %v1344
      %v1377 = vpack.c.b16 %v1345, %v1345
      %v1378 = vpack.c.b16 %v1346, %v1346
      %v1379 = vpack.c.b16 %v1347, %v1347
      %v1380 = vpack.c.b16 %v1348, %v1348
      %v1381 = vpack.c.b16 %v1349, %v1349
      %v1382 = vpack.c.b16 %v1350, %v1350
      %v1383 = vpack.c.b16 %v1351, %v1351
      %v1384 = vpack.c.b16 %v1352, %v1352
      %v1385 = vpack.c.b16 %v1353, %v1353
      %v1386 = vpack.c.b16 %v1354, %v1354
      %v1387 = vpack.c.b16 %v1355, %v1355
      %v1388 = vpack.c.b16 %v1356, %v1356
      %v1389 = vpack.c.b16 %v1357, %v1357
      %v1390 = vpack.c.b16 %v1358, %v1358
      %v1391 = vpack.c.b16 %v1359, %v1359
      %v1392 = vpack.c.b16 %v1360, %v1360
      %v1393 = vpack.c.b16 %v1361, %v1361
      %v1394 = vpack.c.b16 %v1362, %v1362
      %v1395 = vpack.c.b16 %v1363, %v1363
      %1428 = vst.msk [vmem:[%s361] sm:$0xf] %vm1063, %v1364
      %1429 = vst.msk [vmem:[%s361 + $0x4] sm:$0xf] %vm1063, %v1365
      %1430 = vst.msk [vmem:[%s361 + $0x8] sm:$0xf] %vm1063, %v1366
      %1431 = vst.msk [vmem:[%s361 + $0xc] sm:$0xf] %vm1063, %v1367
      %1432 = vst.msk [vmem:[%s361 + $0x10] sm:$0xf] %vm1063, %v1368
      %1433 = vst.msk [vmem:[%s361 + $0x14] sm:$0xf] %vm1063, %v1369
      %1434 = vst.msk [vmem:[%s361 + $0x18] sm:$0xf] %vm1063, %v1370
      %1435 = vst.msk [vmem:[%s361 + $0x1c] sm:$0xf] %vm1063, %v1371
      %1436 = vst.msk [vmem:[%s361 + $0x20] sm:$0xf] %vm1063, %v1372
      %1437 = vst.msk [vmem:[%s361 + $0x24] sm:$0xf] %vm1063, %v1373
      %1438 = vst.msk [vmem:[%s361 + $0x28] sm:$0xf] %vm1063, %v1374
      %1439 = vst.msk [vmem:[%s361 + $0x2c] sm:$0xf] %vm1063, %v1375
      %1440 = vst.msk [vmem:[%s361 + $0x30] sm:$0xf] %vm1063, %v1376
      %1441 = vst.msk [vmem:[%s361 + $0x34] sm:$0xf] %vm1063, %v1377
      %1442 = vst.msk [vmem:[%s361 + $0x38] sm:$0xf] %vm1063, %v1378
      %1443 = vst.msk [vmem:[%s361 + $0x3c] sm:$0xf] %vm1063, %v1379
      %1444 = vst.msk [vmem:[%s361 + $0x40] sm:$0xf] %vm1063, %v1380
      %1445 = vst.msk [vmem:[%s361 + $0x44] sm:$0xf] %vm1063, %v1381
      %1446 = vst.msk [vmem:[%s361 + $0x48] sm:$0xf] %vm1063, %v1382
      %1447 = vst.msk [vmem:[%s361 + $0x4c] sm:$0xf] %vm1063, %v1383
      %1448 = vst.msk [vmem:[%s361 + $0x50] sm:$0xf] %vm1063, %v1384
      %1449 = vst.msk [vmem:[%s361 + $0x54] sm:$0xf] %vm1063, %v1385
      %1450 = vst.msk [vmem:[%s361 + $0x58] sm:$0xf] %vm1063, %v1386
      %1451 = vst.msk [vmem:[%s361 + $0x5c] sm:$0xf] %vm1063, %v1387
      %1452 = vst.msk [vmem:[%s361 + $0x60] sm:$0xf] %vm1063, %v1388
      %1453 = vst.msk [vmem:[%s361 + $0x64] sm:$0xf] %vm1063, %v1389
      %1454 = vst.msk [vmem:[%s361 + $0x68] sm:$0xf] %vm1063, %v1390
      %1455 = vst.msk [vmem:[%s361 + $0x6c] sm:$0xf] %vm1063, %v1391
      %1456 = vst.msk [vmem:[%s361 + $0x70] sm:$0xf] %vm1063, %v1392
      %1457 = vst.msk [vmem:[%s361 + $0x74] sm:$0xf] %vm1063, %v1393
      %1458 = vst.msk [vmem:[%s361 + $0x78] sm:$0xf] %vm1063, %v1394
      %1459 = vst.msk [vmem:[%s361 + $0x7c] sm:$0xf] %vm1063, %v1395
      %s1460 = smul.u32 32, %s21
      %p1461 = scmp.lt.s32.totalorder %s1460, 63
      %s1462 = scalar_select %p1461, %s1460, 63
      %s1463 = smul.addr %s1462, 8
      %s1464 = scalar_lea.vmem %s7, %s1463
      %s1465 = smul.u32 32, %s21
      %p1466 = scmp.lt.s32.totalorder %s1465, 63
      %s1467 = scalar_select %p1466, %s1465, 63
      %s1468 = smul.addr %s1467, 4
      %s1469 = scalar_lea.vmem %s8, %s1468
      %s1470 = smul.u32 32, %s21
      %p1471 = scmp.lt.s32.totalorder %s1470, 63
      %s1472 = scalar_select %p1471, %s1470, 63
      %s1473 = smul.addr %s1472, 4
      %s1474 = scalar_lea.vmem %s9, %s1473
      // Predicated region
      $region49: #{inception_forward.4} parent=47 // pred_check
        %p1475 = pneg %p191
      $region50: #{inception_forward.4} parent=47 // pred_check_branch
        %1477 = sbr.rel (%p1475) target = $region52
      $region51: #{inception_forward.4} parent=47 // pred_region
        %s1478 = smul.u32 32, %s21
      $region52: #{inception_forward.4} parent=47 // pred_fallthru
        _
      // Predicated region
      $region53: #{inception_forward.4} parent=47 // pred_check
        %p1479 = pneg %p217
      $region54: #{inception_forward.4} parent=47 // pred_check_branch
        %1481 = sbr.rel (%p1479) target = $region56
      $region55: #{inception_forward.4} parent=47 // pred_region
        %s1482 = smul.u32 32, %s21
      $region56: #{inception_forward.4} parent=47 // pred_fallthru
        _
      // Predicated region
      $region57: #{inception_forward.4} parent=47 // pred_check
        %p1483 = pneg %p243
      $region58: #{inception_forward.4} parent=47 // pred_check_branch
        %1485 = sbr.rel (%p1483) target = $region60
      $region59: #{inception_forward.4} parent=47 // pred_region
        %s1486 = smul.u32 32, %s21
      $region60: #{inception_forward.4} parent=47 // pred_fallthru
        _
    $region48: #{inception_forward.4} parent=5 // pred_fallthru
      _
    %p1487 = scmp.le.s32.totalorder 2, %s16
    // Predicated region
    $region61: #{inception_forward.4} parent=5 // pred_check
      %p1488 = pneg %p1487
    $region62: #{inception_forward.4} parent=5 // pred_check_branch
      %1490 = sbr.rel (%p1488) target = $region64
    $region63: #{inception_forward.4} parent=5 // pred_region
      %s1491 = ssub.s32 %s16, 2
      // Predicated region
      $region65: #{inception_forward.4} parent=63 // pred_check
        %p1492 = pneg %p197
      $region66: #{inception_forward.4} parent=63 // pred_check_branch
        %1494 = sbr.rel (%p1492) target = $region68
      $region67: #{inception_forward.4} parent=63 // pred_region
        %s1495 = smul.u32 32, %s22
        %p1496 = scmp.lt.s32.totalorder %s1495, 63
        %s1497 = scalar_select %p1496, %s1495, 63
        %s1498 = smul.addr %s1497, 8
        %s1499 = scalar_lea.vmem %s7, %s1498
      $region68: #{inception_forward.4} parent=63 // pred_fallthru
        _
      // Predicated region
      $region69: #{inception_forward.4} parent=63 // pred_check
        %p1500 = pneg %p223
      $region70: #{inception_forward.4} parent=63 // pred_check_branch
        %1502 = sbr.rel (%p1500) target = $region72
      $region71: #{inception_forward.4} parent=63 // pred_region
        %s1503 = smul.u32 32, %s22
        %p1504 = scmp.lt.s32.totalorder %s1503, 63
        %s1505 = scalar_select %p1504, %s1503, 63
        %s1506 = smul.addr %s1505, 4
        %s1507 = scalar_lea.vmem %s8, %s1506
      $region72: #{inception_forward.4} parent=63 // pred_fallthru
        _
      // Predicated region
      $region73: #{inception_forward.4} parent=63 // pred_check
        %p1508 = pneg %p249
      $region74: #{inception_forward.4} parent=63 // pred_check_branch
        %1510 = sbr.rel (%p1508) target = $region76
      $region75: #{inception_forward.4} parent=63 // pred_region
        %s1511 = smul.u32 32, %s22
        %p1512 = scmp.lt.s32.totalorder %s1511, 63
        %s1513 = scalar_select %p1512, %s1511, 63
        %s1514 = smul.addr %s1513, 4
        %s1515 = scalar_lea.vmem %s9, %s1514
      $region76: #{inception_forward.4} parent=63 // pred_fallthru
        _
    $region64: #{inception_forward.4} parent=5 // pred_fallthru
      _
  $region6: #{inception_forward.4} parent=0 // loop_footer
    %s20 = sadd.s32 1, %s16
  $region7: #{inception_forward.4} parent=0 // loop_footer_branch
    %15 = sbr.rel target = $region3
  $region8: #{inception_forward.4} parent=0 // loop_exit
    _

// kernel: inception_forward.7
$region0: #{inception_forward.7}
  #allocation0 [shape = 'u32[]', space=smem, size = 0x4, offset = 0x4, fixed_abs, tag = 'smem constant byte address 0x4 - core index']
  #allocation1 [shape = 'u32[144,128]{1,0:T(1,128)}', space=vmem, size = 0x12000, scoped, tag = 'internal scratch']
  #allocation2 [shape = 'f32[18,18,4]{2,1,0:T(8,128)}', space=vmem, size = 0x36000, scoped, tag = 'scratch operand']
  %s0 = inlined_call_operand.vmem [shape: bf16[2,16,16,4], index: 0, kind: input, shape index: {}]
  %s1 = inlined_call_operand.vmem [shape: bf16[4,8], index: 1, kind: input, shape index: {}]
  %s2 = inlined_call_operand.vmem [shape: f32[1,8], index: 2, kind: input, shape index: {}]
  %s3 = inlined_call_operand.vmem [shape: f32[2,16,16,8], index: 3, kind: output, shape index: {}]
  %s4 = sld [smem:[#allocation0]]
  $region45: #{inception_forward.7} parent=0
    _
  %s6 = ssub.s32 1, %s4
  %s7 = scalar_select 0, %s6, %s4
  loop: start=0, step=1, limit=4
  $region2: #{inception_forward.7} parent=0 // loop_pre_header
    _
  $region3: #{inception_forward.7} parent=0 // loop_header
    %s9 = sphi 0, %s13
    %p10 = scmp.ge.s32.totalorder %s9, 4
    %s19 = sphi 0, %s21
    %s22 = sphi 0, %s19
    %s23 = sphi 0, %s22
    %s39 = sphi 0, %s23
    %s43 = sphi 0, %s43
    %s45 = sphi 0, %s43
    %s46 = sphi 0, %s45
    %s60 = sphi 0, %s46
    %s64 = sphi 0, %s64
    %s66 = sphi 0, %s64
    %s67 = sphi 0, %s66
    %s81 = sphi 0, %s67
    %s87 = sphi 0, %s89
    %s90 = sphi 0, %s87
    %s91 = sphi 0, %s90
    %s107 = sphi 0, %s91
  $region4: #{inception_forward.7} parent=0 // loop_header_branch
    %12 = sbr.rel (%p10) target = $region8
  $region5: #{inception_forward.7} parent=0 // loop_body
    %s14 = ssub.s32 %s9, 1
    %s15 = ssub.s32 %s9, 2
    %s16 = sadd.s32 %s9, 1
    %s17 = ssub.s32 %s9, %s16
    %p18 = scmp.eq.s32.totalorder %s17, 0
    %s20 = sadd.s32 %s19, 1
    %s21 = scalar_select %p18, %s19, %s20
    %p24 = pneg %p18
    %p25 = scmp.eq.s32.totalorder %s9, 1
    %p26 = por %p24, %p25
    %p27 = scmp.ne.s32.totalorder %s19, %s22
    %p28 = scmp.eq.s32.totalorder %s9, 0
    %p29 = por %p27, %p28
    %p30 = scmp.ne.s32.totalorder %s19, %s22
    %p31 = scmp.eq.s32.totalorder %s14, 1
    %p32 = por %p30, %p31
    %p33 = scmp.ne.s32.totalorder %s22, %s23
    %p34 = scmp.eq.s32.totalorder %s14, 0
    %p35 = por %p33, %p34
    %p36 = scmp.ne.s32.totalorder %s22, %s23
    %p37 = scmp.eq.s32.totalorder %s15, 1
    %p38 = por %p36, %p37
    %p40 = scmp.ne.s32.totalorder %s23, %s39
    %p41 = scmp.eq.s32.totalorder %s15, 0
    %p42 = por %p40, %p41
    %s44 = sadd.s32 %s43, 1
    %p47 = scmp.eq.s32.totalorder %s9, 1
    %p48 = scmp.ne.s32.totalorder %s43, %s45
    %p49 = scmp.eq.s32.totalorder %s9, 0
    %p50 = por %p48, %p49
    %p51 = scmp.ne.s32.totalorder %s43, %s45
    %p52 = scmp.eq.s32.totalorder %s14, 1
    %p53 = por %p51, %p52
    %p54 = scmp.ne.s32.totalorder %s45, %s46
    %p55 = scmp.eq.s32.totalorder %s14, 0
    %p56 = por %p54, %p55
    %p57 = scmp.ne.s32.totalorder %s45, %s46
    %p58 = scmp.eq.s32.totalorder %s15, 1
    %p59 = por %p57, %p58
    %p61 = scmp.ne.s32.totalorder %s46, %s60
    %p62 = scmp.eq.s32.totalorder %s15, 0
    %p63 = por %p61, %p62
    %s65 = sadd.s32 %s64, 1
    %p68 = scmp.eq.s32.totalorder %s9, 1
    %p69 = scmp.ne.s32.totalorder %s64, %s66
    %p70 = scmp.eq.s32.totalorder %s9, 0
    %p71 = por %p69, %p70
    %p72 = scmp.ne.s32.totalorder %s64, %s66
    %p73 = scmp.eq.s32.totalorder %s14, 1
    %p74 = por %p72, %p73
    %p75 = scmp.ne.s32.totalorder %s66, %s67
    %p76 = scmp.eq.s32.totalorder %s14, 0
    %p77 = por %p75, %p76
    %p78 = scmp.ne.s32.totalorder %s66, %s67
    %p79 = scmp.eq.s32.totalorder %s15, 1
    %p80 = por %p78, %p79
    %p82 = scmp.ne.s32.totalorder %s67, %s81
    %p83 = scmp.eq.s32.totalorder %s15, 0
    %p84 = por %p82, %p83
    %s85 = ssub.s32 %s9, %s16
    %p86 = scmp.eq.s32.totalorder %s85, 0
    %s88 = sadd.s32 %s87, 1
    %s89 = scalar_select %p86, %s87, %s88
    %p92 = pneg %p86
    %p93 = scmp.eq.s32.totalorder %s9, 1
    %p94 = por %p92, %p93
    %p95 = scmp.ne.s32.totalorder %s87, %s90
    %p96 = scmp.eq.s32.totalorder %s9, 0
    %p97 = por %p95, %p96
    %p98 = scmp.ne.s32.totalorder %s87, %s90
    %p99 = scmp.eq.s32.totalorder %s14, 1
    %p100 = por %p98, %p99
    %p101 = scmp.ne.s32.totalorder %s90, %s91
    %p102 = scmp.eq.s32.totalorder %s14, 0
    %p103 = por %p101, %p102
    %p104 = scmp.ne.s32.totalorder %s90, %s91
    %p105 = scmp.eq.s32.totalorder %s15, 1
    %p106 = por %p104, %p105
    %p108 = scmp.ne.s32.totalorder %s91, %s107
    %p109 = scmp.eq.s32.totalorder %s15, 0
    %p110 = por %p108, %p109
    %p111 = scmp.le.s32.totalorder 1, %s9
    %p112 = scmp.lt.s32.totalorder %s9, 3
    %p113 = pnand %p111, %p112
    %p114 = pneg %p113
    // Predicated region
    $region9: #{inception_forward.7} parent=5 // pred_check
      _
    $region10: #{inception_forward.7} parent=5 // pred_check_branch
      %116 = sbr.rel (%p113) target = $region12
    $region11: #{inception_forward.7} parent=5 // pred_region
      %s117 = ssub.s32 %s9, 1
      // Predicated region
      $region13: #{inception_forward.7} parent=11 // pred_check
        %p118 = pneg %p56
      $region14: #{inception_forward.7} parent=11 // pred_check_branch
        %120 = sbr.rel (%p118) target = $region16
      $region15: #{inception_forward.7} parent=11 // pred_region
        _
      $region16: #{inception_forward.7} parent=11 // pred_fallthru
        _
      // Predicated region
      $region17: #{inception_forward.7} parent=11 // pred_check
        %p121 = pneg %p77
      $region18: #{inception_forward.7} parent=11 // pred_check_branch
        %123 = sbr.rel (%p121) target = $region20
      $region19: #{inception_forward.7} parent=11 // pred_region
        _
      $region20: #{inception_forward.7} parent=11 // pred_fallthru
        _
    $region12: #{inception_forward.7} parent=5 // pred_fallthru
      _
    %p124 = scmp.lt.s32.totalorder %s9, 2
    // Predicated region
    $region21: #{inception_forward.7} parent=5 // pred_check
      %p125 = pneg %p124
    $region22: #{inception_forward.7} parent=5 // pred_check_branch
      %127 = sbr.rel (%p125) target = $region24
    $region23: #{inception_forward.7} parent=5 // pred_region
      // Predicated region
      $region25: #{inception_forward.7} parent=23 // pred_check
        %p128 = pneg %p29
      $region26: #{inception_forward.7} parent=23 // pred_check_branch
        %130 = sbr.rel (%p128) target = $region28
      $region27: #{inception_forward.7} parent=23 // pred_region
        %p131 = scmp.lt.s32.totalorder %s9, 1
        %s132 = scalar_select %p131, %s9, 1
        %s133 = smul.addr %s132, 32
        %s134 = smul.addr %s133, 4
        %s135 = scalar_lea.vmem %s0, %s134
      $region28: #{inception_forward.7} parent=23 // pred_fallthru
        _
    $region24: #{inception_forward.7} parent=5 // pred_fallthru
      _
    %p136 = scmp.le.s32.totalorder 1, %s9
    %p137 = scmp.lt.s32.totalorder %s9, 3
    %p138 = pnand %p136, %p137
    %p139 = pneg %p138
    // Predicated region
    $region29: #{inception_forward.7} parent=5 // pred_check
      _
    $region30: #{inception_forward.7} parent=5 // pred_check_branch
      %141 = sbr.rel (%p138) target = $region32
    $region31: #{inception_forward.7} parent=5 // pred_region
      %s142 = ssub.s32 %s9, 1
      %p143 = scmp.lt.s32.totalorder %s14, 1
      %s144 = scalar_select %p143, %s14, 1
      %s145 = smul.addr %s144, 32
      %s146 = smul.addr %s145, 4
      %s147 = scalar_lea.vmem %s0, %s146
      %p148 = pneg %p35
      %p149 = pneg %p32
      %p150 = pneg %p56
      %p151 = pneg %p53
      %p152 = pneg %p77
      %p153 = pneg %p74
      %p154 = pneg %p103
      %p155 = pneg %p100
      %p156 = scmp.lt.s32.totalorder %s14, 1
      %s157 = scalar_select %p156, %s14, 1
      %s158 = smul.addr %s157, 32
      %s159 = smul.addr %s158, 8
      %s160 = scalar_lea.vmem %s3, %s159
      %p161 = scmp.lt.s32.totalorder %s14, 1
      %s162 = scalar_select %p161, %s14, 1
      %s163 = smul.addr %s162, 32
      %s164 = smul.addr %s163, 4
      %s165 = scalar_lea.vmem %s0, %s164
      %p166 = scmp.lt.s32.totalorder %s14, 1
      %s167 = scalar_select %p166, %s14, 1
      %s168 = smul.addr %s167, 32
      %s169 = smul.addr %s168, 8
      %s170 = scalar_lea.vmem %s3, %s169
      %vm172 = vcmask 31744
      %173 = vst.msk [vmem:[#allocation2] sm:$0xff] %vm172, -inf
      %174 = vst.msk [vmem:[#allocation2 + $0x8] sm:$0xff] %vm172, -inf
      %vm175 = vcmask 25600
      %176 = vst.msk [vmem:[#allocation2 + $0x10] sm:$0x3] %vm175, -inf
      %177 = vst.msk [vmem:[#allocation2 + $0x18] sm:$0xff] %vm172, -inf
      %178 = vst.msk [vmem:[#allocation2 + $0x20] sm:$0xff] %vm172, -inf
      %179 = vst.msk [vmem:[#allocation2 + $0x28] sm:$0x3] %vm175, -inf
      %180 = vst.msk [vmem:[#allocation2 + $0x30] sm:$0xff] %vm172, -inf
      %181 = vst.msk [vmem:[#allocation2 + $0x38] sm:$0xff] %vm172, -inf
      %182 = vst.msk [vmem:[#allocation2 + $0x40] sm:$0x3] %vm175, -inf
      %183 = vst.msk [vmem:[#allocation2 + $0x48] sm:$0xff] %vm172, -inf
      %184 = vst.msk [vmem:[#allocation2 + $0x50] sm:$0xff] %vm172, -inf
      %185 = vst.msk [vmem:[#allocation2 + $0x58] sm:$0x3] %vm175, -inf
      %186 = vst.msk [vmem:[#allocation2 + $0x60] sm:$0xff] %vm172, -inf
      %187 = vst.msk [vmem:[#allocation2 + $0x68] sm:$0xff] %vm172, -inf
      %188 = vst.msk [vmem:[#allocation2 + $0x70] sm:$0x3] %vm175, -inf
      %189 = vst.msk [vmem:[#allocation2 + $0x78] sm:$0xff] %vm172, -inf
      %190 = vst.msk [vmem:[#allocation2 + $0x80] sm:$0xff] %vm172, -inf
      %191 = vst.msk [vmem:[#allocation2 + $0x88] sm:$0x3] %vm175, -inf
      %192 = vst.msk [vmem:[#allocation2 + $0x90] sm:$0xff] %vm172, -inf
      %193 = vst.msk [vmem:[#allocation2 + $0x98] sm:$0xff] %vm172, -inf
      %194 = vst.msk [vmem:[#allocation2 + $0xa0] sm:$0x3] %vm175, -inf
      %195 = vst.msk [vmem:[#allocation2 + $0xa8] sm:$0xff] %vm172, -inf
      %196 = vst.msk [vmem:[#allocation2 + $0xb0] sm:$0xff] %vm172, -inf
      %197 = vst.msk [vmem:[#allocation2 + $0xb8] sm:$0x3] %vm175, -inf
      %198 = vst.msk [vmem:[#allocation2 + $0xc0] sm:$0xff] %vm172, -inf
      %199 = vst.msk [vmem:[#allocation2 + $0xc8] sm:$0xff] %vm172, -inf
      %200 = vst.msk [vmem:[#allocation2 + $0xd0] sm:$0x3] %vm175, -inf
      %201 = vst.msk [vmem:[#allocation2 + $0xd8] sm:$0xff] %vm172, -inf
      %202 = vst.msk [vmem:[#allocation2 + $0xe0] sm:$0xff] %vm172, -inf
      %203 = vst.msk [vmem:[#allocation2 + $0xe8] sm:$0x3] %vm175, -inf
      %204 = vst.msk [vmem:[#allocation2 + $0xf0] sm:$0xff] %vm172, -inf
      %205 = vst.msk [vmem:[#allocation2 + $0xf8] sm:$0xff] %vm172, -inf
      %206 = vst.msk [vmem:[#allocation2 + $0x100] sm:$0x3] %vm175, -inf
      %207 = vst.msk [vmem:[#allocation2 + $0x108] sm:$0xff] %vm172, -inf
      %208 = vst.msk [vmem:[#allocation2 + $0x110] sm:$0xff] %vm172, -inf
      %209 = vst.msk [vmem:[#allocation2 + $0x118] sm:$0x3] %vm175, -inf
      %210 = vst.msk [vmem:[#allocation2 + $0x120] sm:$0xff] %vm172, -inf
      %211 = vst.msk [vmem:[#allocation2 + $0x128] sm:$0xff] %vm172, -inf
      %212 = vst.msk [vmem:[#allocation2 + $0x130] sm:$0x3] %vm175, -inf
      %213 = vst.msk [vmem:[#allocation2 + $0x138] sm:$0xff] %vm172, -inf
      %214 = vst.msk [vmem:[#allocation2 + $0x140] sm:$0xff] %vm172, -inf
      %215 = vst.msk [vmem:[#allocation2 + $0x148] sm:$0x3] %vm175, -inf
      %216 = vst.msk [vmem:[#allocation2 + $0x150] sm:$0xff] %vm172, -inf
      %217 = vst.msk [vmem:[#allocation2 + $0x158] sm:$0xff] %vm172, -inf
      %218 = vst.msk [vmem:[#allocation2 + $0x160] sm:$0x3] %vm175, -inf
      %219 = vst.msk [vmem:[#allocation2 + $0x168] sm:$0xff] %vm172, -inf
      %220 = vst.msk [vmem:[#allocation2 + $0x170] sm:$0xff] %vm172, -inf
      %221 = vst.msk [vmem:[#allocation2 + $0x178] sm:$0x3] %vm175, -inf
      %222 = vst.msk [vmem:[#allocation2 + $0x180] sm:$0xff] %vm172, -inf
      %223 = vst.msk [vmem:[#allocation2 + $0x188] sm:$0xff] %vm172, -inf
      %224 = vst.msk [vmem:[#allocation2 + $0x190] sm:$0x3] %vm175, -inf
      %225 = vst.msk [vmem:[#allocation2 + $0x198] sm:$0xff] %vm172, -inf
      %226 = vst.msk [vmem:[#allocation2 + $0x1a0] sm:$0xff] %vm172, -inf
      %227 = vst.msk [vmem:[#allocation2 + $0x1a8] sm:$0x3] %vm175, -inf
      %v228 = vld [vmem:[%s165] sm:$0xf]
      %v229 = vld [vmem:[%s165 + $0x4] sm:$0xf]
      %v230 = vld [vmem:[%s165 + $0x8] sm:$0xf]
      %v231 = vld [vmem:[%s165 + $0xc] sm:$0xf]
      %v232 = vld [vmem:[%s165 + $0x10] sm:$0xf]
      %v233 = vld [vmem:[%s165 + $0x14] sm:$0xf]
      %v234 = vld [vmem:[%s165 + $0x18] sm:$0xf]
      %v235 = vld [vmem:[%s165 + $0x1c] sm:$0xf]
      %v236 = vld [vmem:[%s165 + $0x20] sm:$0xf]
      %v237 = vld [vmem:[%s165 + $0x24] sm:$0xf]
      %v238 = vld [vmem:[%s165 + $0x28] sm:$0xf]
      %v239 = vld [vmem:[%s165 + $0x2c] sm:$0xf]
      %v240 = vld [vmem:[%s165 + $0x30] sm:$0xf]
      %v241 = vld [vmem:[%s165 + $0x34] sm:$0xf]
      %v242 = vld [vmem:[%s165 + $0x38] sm:$0xf]
      %v243 = vld [vmem:[%s165 + $0x3c] sm:$0xf]
      %v244 = vld [vmem:[%s165 + $0x40] sm:$0xf]
      %v245 = vld [vmem:[%s165 + $0x44] sm:$0xf]
      %v246 = vld [vmem:[%s165 + $0x48] sm:$0xf]
      %v247 = vld [vmem:[%s165 + $0x4c] sm:$0xf]
      %v248 = vld [vmem:[%s165 + $0x50] sm:$0xf]
      %v249 = vld [vmem:[%s165 + $0x54] sm:$0xf]
      %v250 = vld [vmem:[%s165 + $0x58] sm:$0xf]
      %v251 = vld [vmem:[%s165 + $0x5c] sm:$0xf]
      %v252 = vld [vmem:[%s165 + $0x60] sm:$0xf]
      %v253 = vld [vmem:[%s165 + $0x64] sm:$0xf]
      %v254 = vld [vmem:[%s165 + $0x68] sm:$0xf]
      %v255 = vld [vmem:[%s165 + $0x6c] sm:$0xf]
      %v256 = vld [vmem:[%s165 + $0x70] sm:$0xf]
      %v257 = vld [vmem:[%s165 + $0x74] sm:$0xf]
      %v258 = vld [vmem:[%s165 + $0x78] sm:$0xf]
      %v259 = vld [vmem:[%s165 + $0x7c] sm:$0xf]
      %v260 = vunpack.c.l.bf16 %v228
      %v261 = vunpack.c.l.bf16 %v229
      %v262 = vunpack.c.l.bf16 %v230
      %v263 = vunpack.c.l.bf16 %v231
      %v264 = vunpack.c.l.bf16 %v232
      %v265 = vunpack.c.l.bf16 %v233
      %v266 = vunpack.c.l.bf16 %v234
      %v267 = vunpack.c.l.bf16 %v235
      %v268 = vunpack.c.l.bf16 %v236
      %v269 = vunpack.c.l.bf16 %v237
      %v270 = vunpack.c.l.bf16 %v238
      %v271 = vunpack.c.l.bf16 %v239
      %v272 = vunpack.c.l.bf16 %v240
      %v273 = vunpack.c.l.bf16 %v241
      %v274 = vunpack.c.l.bf16 %v242
      %v275 = vunpack.c.l.bf16 %v243
      %v276 = vunpack.c.l.bf16 %v244
      %v277 = vunpack.c.l.bf16 %v245
      %v278 = vunpack.c.l.bf16 %v246
      %v279 = vunpack.c.l.bf16 %v247
      %v280 = vunpack.c.l.bf16 %v248
      %v281 = vunpack.c.l.bf16 %v249
      %v282 = vunpack.c.l.bf16 %v250
      %v283 = vunpack.c.l.bf16 %v251
      %v284 = vunpack.c.l.bf16 %v252
      %v285 = vunpack.c.l.bf16 %v253
      %v286 = vunpack.c.l.bf16 %v254
      %v287 = vunpack.c.l.bf16 %v255
      %v288 = vunpack.c.l.bf16 %v256
      %v289 = vunpack.c.l.bf16 %v257
      %v290 = vunpack.c.l.bf16 %v258
      %v291 = vunpack.c.l.bf16 %v259
      %s292 = scalar_lea.vmem [#allocation2], 24
      %293 = vst.msk [vmem:[%s292 + $0x1] sm:$0xff] %vm172, %v260
      %294 = vst.msk [vmem:[%s292 + $0x9] sm:$0xff] %vm172, %v261
      %295 = vst.msk [vmem:[%s292 + $0x19] sm:$0xff] %vm172, %v262
      %296 = vst.msk [vmem:[%s292 + $0x21] sm:$0xff] %vm172, %v263
      %297 = vst.msk [vmem:[%s292 + $0x31] sm:$0xff] %vm172, %v264
      %298 = vst.msk [vmem:[%s292 + $0x39] sm:$0xff] %vm172, %v265
      %299 = vst.msk [vmem:[%s292 + $0x49] sm:$0xff] %vm172, %v266
      %300 = vst.msk [vmem:[%s292 + $0x51] sm:$0xff] %vm172, %v267
      %301 = vst.msk [vmem:[%s292 + $0x61] sm:$0xff] %vm172, %v268
      %302 = vst.msk [vmem:[%s292 + $0x69] sm:$0xff] %vm172, %v269
      %303 = vst.msk [vmem:[%s292 + $0x79] sm:$0xff] %vm172, %v270
      %304 = vst.msk [vmem:[%s292 + $0x81] sm:$0xff] %vm172, %v271
      %305 = vst.msk [vmem:[%s292 + $0x91] sm:$0xff] %vm172, %v272
      %306 = vst.msk [vmem:[%s292 + $0x99] sm:$0xff] %vm172, %v273
      %307 = vst.msk [vmem:[%s292 + $0xa9] sm:$0xff] %vm172, %v274
      %308 = vst.msk [vmem:[%s292 + $0xb1] sm:$0xff] %vm172, %v275
      %309 = vst.msk [vmem:[%s292 + $0xc1] sm:$0xff] %vm172, %v276
      %310 = vst.msk [vmem:[%s292 + $0xc9] sm:$0xff] %vm172, %v277
      %311 = vst.msk [vmem:[%s292 + $0xd9] sm:$0xff] %vm172, %v278
      %312 = vst.msk [vmem:[%s292 + $0xe1] sm:$0xff] %vm172, %v279
      %313 = vst.msk [vmem:[%s292 + $0xf1] sm:$0xff] %vm172, %v280
      %314 = vst.msk [vmem:[%s292 + $0xf9] sm:$0xff] %vm172, %v281
      %315 = vst.msk [vmem:[%s292 + $0x109] sm:$0xff] %vm172, %v282
      %316 = vst.msk [vmem:[%s292 + $0x111] sm:$0xff] %vm172, %v283
      %317 = vst.msk [vmem:[%s292 + $0x121] sm:$0xff] %vm172, %v284
      %318 = vst.msk [vmem:[%s292 + $0x129] sm:$0xff] %vm172, %v285
      %319 = vst.msk [vmem:[%s292 + $0x139] sm:$0xff] %vm172, %v286
      %320 = vst.msk [vmem:[%s292 + $0x141] sm:$0xff] %vm172, %v287
      %321 = vst.msk [vmem:[%s292 + $0x151] sm:$0xff] %vm172, %v288
      %322 = vst.msk [vmem:[%s292 + $0x159] sm:$0xff] %vm172, %v289
      %323 = vst.msk [vmem:[%s292 + $0x169] sm:$0xff] %vm172, %v290
      %324 = vst.msk [vmem:[%s292 + $0x171] sm:$0xff] %vm172, %v291
      %v325 = vld [vmem:[#allocation2] sm:$0xff]
      %v326 = vld [vmem:[#allocation2 + $0x8] sm:$0xff]
      %v327 = vld [vmem:[#allocation2 + $0x18] sm:$0xff]
      %v328 = vld [vmem:[#allocation2 + $0x20] sm:$0xff]
      %v329 = vld [vmem:[#allocation2 + $0x30] sm:$0xff]
      %v330 = vld [vmem:[#allocation2 + $0x38] sm:$0xff]
      %v331 = vld [vmem:[#allocation2 + $0x48] sm:$0xff]
      %v332 = vld [vmem:[#allocation2 + $0x50] sm:$0xff]
      %v333 = vld [vmem:[#allocation2 + $0x60] sm:$0xff]
      %v334 = vld [vmem:[#allocation2 + $0x68] sm:$0xff]
      %v335 = vld [vmem:[#allocation2 + $0x78] sm:$0xff]
      %v336 = vld [vmem:[#allocation2 + $0x80] sm:$0xff]
      %v337 = vld [vmem:[#allocation2 + $0x90] sm:$0xff]
      %v338 = vld [vmem:[#allocation2 + $0x98] sm:$0xff]
      %v339 = vld [vmem:[#allocation2 + $0xa8] sm:$0xff]
      %v340 = vld [vmem:[#allocation2 + $0xb0] sm:$0xff]
      %v341 = vld [vmem:[#allocation2 + $0xc0] sm:$0xff]
      %v342 = vld [vmem:[#allocation2 + $0xc8] sm:$0xff]
      %v343 = vld [vmem:[#allocation2 + $0xd8] sm:$0xff]
      %v344 = vld [vmem:[#allocation2 + $0xe0] sm:$0xff]
      %v345 = vld [vmem:[#allocation2 + $0xf0] sm:$0xff]
      %v346 = vld [vmem:[#allocation2 + $0xf8] sm:$0xff]
      %v347 = vld [vmem:[#allocation2 + $0x108] sm:$0xff]
      %v348 = vld [vmem:[#allocation2 + $0x110] sm:$0xff]
      %v349 = vld [vmem:[#allocation2 + $0x120] sm:$0xff]
      %v350 = vld [vmem:[#allocation2 + $0x128] sm:$0xff]
      %v351 = vld [vmem:[#allocation2 + $0x138] sm:$0xff]
      %v352 = vld [vmem:[#allocation2 + $0x140] sm:$0xff]
      %v353 = vld [vmem:[#allocation2 + $0x150] sm:$0xff]
      %v354 = vld [vmem:[#allocation2 + $0x158] sm:$0xff]
      %v355 = vld [vmem:[#allocation2 + $0x168] sm:$0xff]
      %v356 = vld [vmem:[#allocation2 + $0x170] sm:$0xff]
      %v357 = vld [vmem:[#allocation2 + $0x180] sm:$0xff]
      %v358 = vld [vmem:[#allocation2 + $0x188] sm:$0xff]
      %v359 = vld [vmem:[#allocation2 + $0x198] sm:$0xff]
      %v360 = vld [vmem:[#allocation2 + $0x1a0] sm:$0xff]
      %v361 = vld [vmem:[#allocation2 + $0x1] sm:$0xff]
      %v362 = vld [vmem:[#allocation2 + $0x9] sm:$0xff]
      %v363 = vld [vmem:[#allocation2 + $0x19] sm:$0xff]
      %v364 = vld [vmem:[#allocation2 + $0x21] sm:$0xff]
      %v365 = vld [vmem:[#allocation2 + $0x31] sm:$0xff]
      %v366 = vld [vmem:[#allocation2 + $0x39] sm:$0xff]
      %v367 = vld [vmem:[#allocation2 + $0x49] sm:$0xff]
      %v368 = vld [vmem:[#allocation2 + $0x51] sm:$0xff]
      %v369 = vld [vmem:[#allocation2 + $0x61] sm:$0xff]
      %v370 = vld [vmem:[#allocation2 + $0x69] sm:$0xff]
      %v371 = vld [vmem:[#allocation2 + $0x79] sm:$0xff]
      %v372 = vld [vmem:[#allocation2 + $0x81] sm:$0xff]
      %v373 = vld [vmem:[#allocation2 + $0x91] sm:$0xff]
      %v374 = vld [vmem:[#allocation2 + $0x99] sm:$0xff]
      %v375 = vld [vmem:[#allocation2 + $0xa9] sm:$0xff]
      %v376 = vld [vmem:[#allocation2 + $0xb1] sm:$0xff]
      %v377 = vld [vmem:[#allocation2 + $0xc1] sm:$0xff]
      %v378 = vld [vmem:[#allocation2 + $0xc9] sm:$0xff]
      %v379 = vld [vmem:[#allocation2 + $0xd9] sm:$0xff]
      %v380 = vld [vmem:[#allocation2 + $0xe1] sm:$0xff]
      %v381 = vld [vmem:[#allocation2 + $0xf1] sm:$0xff]
      %v382 = vld [vmem:[#allocation2 + $0xf9] sm:$0xff]
      %v383 = vld [vmem:[#allocation2 + $0x109] sm:$0xff]
      %v384 = vld [vmem:[#allocation2 + $0x111] sm:$0xff]
      %v385 = vld [vmem:[#allocation2 + $0x121] sm:$0xff]
      %v386 = vld [vmem:[#allocation2 + $0x129] sm:$0xff]
      %v387 = vld [vmem:[#allocation2 + $0x139] sm:$0xff]
      %v388 = vld [vmem:[#allocation2 + $0x141] sm:$0xff]
      %v389 = vld [vmem:[#allocation2 + $0x151] sm:$0xff]
      %v390 = vld [vmem:[#allocation2 + $0x159] sm:$0xff]
      %v391 = vld [vmem:[#allocation2 + $0x169] sm:$0xff]
      %v392 = vld [vmem:[#allocation2 + $0x171] sm:$0xff]
      %v393 = vld [vmem:[#allocation2 + $0x181] sm:$0xff]
      %v394 = vld [vmem:[#allocation2 + $0x189] sm:$0xff]
      %v395 = vld [vmem:[#allocation2 + $0x199] sm:$0xff]
      %v396 = vld [vmem:[#allocation2 + $0x1a1] sm:$0xff]
      %v397 = vmax.f32 %v325, %v361
      %v398 = vmax.f32 %v326, %v362
      %v399 = vmax.f32 %v327, %v363
      %v400 = vmax.f32 %v328, %v364
      %v401 = vmax.f32 %v329, %v365
      %v402 = vmax.f32 %v330, %v366
      %v403 = vmax.f32 %v331, %v367
      %v404 = vmax.f32 %v332, %v368
      %v405 = vmax.f32 %v333, %v369
      %v406 = vmax.f32 %v334, %v370
      %v407 = vmax.f32 %v335, %v371
      %v408 = vmax.f32 %v336, %v372
      %v409 = vmax.f32 %v337, %v373
      %v410 = vmax.f32 %v338, %v374
      %v411 = vmax.f32 %v339, %v375
      %v412 = vmax.f32 %v340, %v376
      %v413 = vmax.f32 %v341, %v377
      %v414 = vmax.f32 %v342, %v378
      %v415 = vmax.f32 %v343, %v379
      %v416 = vmax.f32 %v344, %v380
      %v417 = vmax.f32 %v345, %v381
      %v418 = vmax.f32 %v346, %v382
      %v419 = vmax.f32 %v347, %v383
      %v420 = vmax.f32 %v348, %v384
      %v421 = vmax.f32 %v349, %v385
      %v422 = vmax.f32 %v350, %v386
      %v423 = vmax.f32 %v351, %v387
      %v424 = vmax.f32 %v352, %v388
      %v425 = vmax.f32 %v353, %v389
      %v426 = vmax.f32 %v354, %v390
      %v427 = vmax.f32 %v355, %v391
      %v428 = vmax.f32 %v356, %v392
      %v429 = vmax.f32 %v357, %v393
      %v430 = vmax.f32 %v358, %v394
      %v431 = vmax.f32 %v359, %v395
      %v432 = vmax.f32 %v360, %v396
      %v433 = vld [vmem:[#allocation2 + $0x2] sm:$0xff]
      %v434 = vld [vmem:[#allocation2 + $0xa] sm:$0xff]
      %v435 = vld [vmem:[#allocation2 + $0x1a] sm:$0xff]
      %v436 = vld [vmem:[#allocation2 + $0x22] sm:$0xff]
      %v437 = vld [vmem:[#allocation2 + $0x32] sm:$0xff]
      %v438 = vld [vmem:[#allocation2 + $0x3a] sm:$0xff]
      %v439 = vld [vmem:[#allocation2 + $0x4a] sm:$0xff]
      %v440 = vld [vmem:[#allocation2 + $0x52] sm:$0xff]
      %v441 = vld [vmem:[#allocation2 + $0x62] sm:$0xff]
      %v442 = vld [vmem:[#allocation2 + $0x6a] sm:$0xff]
      %v443 = vld [vmem:[#allocation2 + $0x7a] sm:$0xff]
      %v444 = vld [vmem:[#allocation2 + $0x82] sm:$0xff]
      %v445 = vld [vmem:[#allocation2 + $0x92] sm:$0xff]
      %v446 = vld [vmem:[#allocation2 + $0x9a] sm:$0xff]
      %v447 = vld [vmem:[#allocation2 + $0xaa] sm:$0xff]
      %v448 = vld [vmem:[#allocation2 + $0xb2] sm:$0xff]
      %v449 = vld [vmem:[#allocation2 + $0xc2] sm:$0xff]
      %v450 = vld [vmem:[#allocation2 + $0xca] sm:$0xff]
      %v451 = vld [vmem:[#allocation2 + $0xda] sm:$0xff]
      %v452 = vld [vmem:[#allocation2 + $0xe2] sm:$0xff]
      %v453 = vld [vmem:[#allocation2 + $0xf2] sm:$0xff]
      %v454 = vld [vmem:[#allocation2 + $0xfa] sm:$0xff]
      %v455 = vld [vmem:[#allocation2 + $0x10a] sm:$0xff]
      %v456 = vld [vmem:[#allocation2 + $0x112] sm:$0xff]
      %v457 = vld [vmem:[#allocation2 + $0x122] sm:$0xff]
      %v458 = vld [vmem:[#allocation2 + $0x12a] sm:$0xff]
      %v459 = vld [vmem:[#allocation2 + $0x13a] sm:$0xff]
      %v460 = vld [vmem:[#allocation2 + $0x142] sm:$0xff]
      %v461 = vld [vmem:[#allocation2 + $0x152] sm:$0xff]
      %v462 = vld [vmem:[#allocation2 + $0x15a] sm:$0xff]
      %v463 = vld [vmem:[#allocation2 + $0x16a] sm:$0xff]
      %v464 = vld [vmem:[#allocation2 + $0x172] sm:$0xff]
      %v465 = vld [vmem:[#allocation2 + $0x182] sm:$0xff]
      %v466 = vld [vmem:[#allocation2 + $0x18a] sm:$0xff]
      %v467 = vld [vmem:[#allocation2 + $0x19a] sm:$0xff]
      %v468 = vld [vmem:[#allocation2 + $0x1a2] sm:$0xff]
      %v469 = vmax.f32 %v397, %v433
      %v470 = vmax.f32 %v398, %v434
      %v471 = vmax.f32 %v399, %v435
      %v472 = vmax.f32 %v400, %v436
      %v473 = vmax.f32 %v401, %v437
      %v474 = vmax.f32 %v402, %v438
      %v475 = vmax.f32 %v403, %v439
      %v476 = vmax.f32 %v404, %v440
      %v477 = vmax.f32 %v405, %v441
      %v478 = vmax.f32 %v406, %v442
      %v479 = vmax.f32 %v407, %v443
      %v480 = vmax.f32 %v408, %v444
      %v481 = vmax.f32 %v409, %v445
      %v482 = vmax.f32 %v410, %v446
      %v483 = vmax.f32 %v411, %v447
      %v484 = vmax.f32 %v412, %v448
      %v485 = vmax.f32 %v413, %v449
      %v486 = vmax.f32 %v414, %v450
      %v487 = vmax.f32 %v415, %v451
      %v488 = vmax.f32 %v416, %v452
      %v489 = vmax.f32 %v417, %v453
      %v490 = vmax.f32 %v418, %v454
      %v491 = vmax.f32 %v419, %v455
      %v492 = vmax.f32 %v420, %v456
      %v493 = vmax.f32 %v421, %v457
      %v494 = vmax.f32 %v422, %v458
      %v495 = vmax.f32 %v423, %v459
      %v496 = vmax.f32 %v424, %v460
      %v497 = vmax.f32 %v425, %v461
      %v498 = vmax.f32 %v426, %v462
      %v499 = vmax.f32 %v427, %v463
      %v500 = vmax.f32 %v428, %v464
      %v501 = vmax.f32 %v429, %v465
      %v502 = vmax.f32 %v430, %v466
      %v503 = vmax.f32 %v431, %v467
      %v504 = vmax.f32 %v432, %v468
      %v505 = vmax.f32 %v469, %v471
      %v506 = vmax.f32 %v470, %v472
      %v507 = vmax.f32 %v471, %v473
      %v508 = vmax.f32 %v472, %v474
      %v509 = vmax.f32 %v473, %v475
      %v510 = vmax.f32 %v474, %v476
      %v511 = vmax.f32 %v475, %v477
      %v512 = vmax.f32 %v476, %v478
      %v513 = vmax.f32 %v477, %v479
      %v514 = vmax.f32 %v478, %v480
      %v515 = vmax.f32 %v479, %v481
      %v516 = vmax.f32 %v480, %v482
      %v517 = vmax.f32 %v481, %v483
      %v518 = vmax.f32 %v482, %v484
      %v519 = vmax.f32 %v483, %v485
      %v520 = vmax.f32 %v484, %v486
      %v521 = vmax.f32 %v485, %v487
      %v522 = vmax.f32 %v486, %v488
      %v523 = vmax.f32 %v487, %v489
      %v524 = vmax.f32 %v488, %v490
      %v525 = vmax.f32 %v489, %v491
      %v526 = vmax.f32 %v490, %v492
      %v527 = vmax.f32 %v491, %v493
      %v528 = vmax.f32 %v492, %v494
      %v529 = vmax.f32 %v493, %v495
      %v530 = vmax.f32 %v494, %v496
      %v531 = vmax.f32 %v495, %v497
      %v532 = vmax.f32 %v496, %v498
      %v533 = vmax.f32 %v497, %v499
      %v534 = vmax.f32 %v498, %v500
      %v535 = vmax.f32 %v499, %v501
      %v536 = vmax.f32 %v500, %v502
      %v537 = vmax.f32 %v505, %v473
      %v538 = vmax.f32 %v506, %v474
      %v539 = vmax.f32 %v507, %v475
      %v540 = vmax.f32 %v508, %v476
      %v541 = vmax.f32 %v509, %v477
      %v542 = vmax.f32 %v510, %v478
      %v543 = vmax.f32 %v511, %v479
      %v544 = vmax.f32 %v512, %v480
      %v545 = vmax.f32 %v513, %v481
      %v546 = vmax.f32 %v514, %v482
      %v547 = vmax.f32 %v515, %v483
      %v548 = vmax.f32 %v516, %v484
      %v549 = vmax.f32 %v517, %v485
      %v550 = vmax.f32 %v518, %v486
      %v551 = vmax.f32 %v519, %v487
      %v552 = vmax.f32 %v520, %v488
      %v553 = vmax.f32 %v521, %v489
      %v554 = vmax.f32 %v522, %v490
      %v555 = vmax.f32 %v523, %v491
      %v556 = vmax.f32 %v524, %v492
      %v557 = vmax.f32 %v525, %v493
      %v558 = vmax.f32 %v526, %v494
      %v559 = vmax.f32 %v527, %v495
      %v560 = vmax.f32 %v528, %v496
      %v561 = vmax.f32 %v529, %v497
      %v562 = vmax.f32 %v530, %v498
      %v563 = vmax.f32 %v531, %v499
      %v564 = vmax.f32 %v532, %v500
      %v565 = vmax.f32 %v533, %v501
      %v566 = vmax.f32 %v534, %v502
      %v567 = vmax.f32 %v535, %v503
      %v568 = vmax.f32 %v536, %v504
      %v569 = vpack.c.bf16 %v538, %v537
      %v570 = vpack.c.bf16 %v540, %v539
      %v571 = vpack.c.bf16 %v542, %v541
      %v572 = vpack.c.bf16 %v544, %v543
      %v573 = vpack.c.bf16 %v546, %v545
      %v574 = vpack.c.bf16 %v548, %v547
      %v575 = vpack.c.bf16 %v550, %v549
      %v576 = vpack.c.bf16 %v552, %v551
      %v577 = vpack.c.bf16 %v554, %v553
      %v578 = vpack.c.bf16 %v556, %v555
      %v579 = vpack.c.bf16 %v558, %v557
      %v580 = vpack.c.bf16 %v560, %v559
      %v581 = vpack.c.bf16 %v562, %v561
      %v582 = vpack.c.bf16 %v564, %v563
      %v583 = vpack.c.bf16 %v566, %v565
      %v584 = vpack.c.bf16 %v568, %v567
      %v585 = vld [vmem:[%s1] sm:$0x3]
      %v586 = vld [vmem:[%s2] sm:$0x1]
      %v588 = vlaneseq
      %v589 = vshrl.u32 %v588, 7
      %v590 = vsub.s32 0, %v589
      %v591 = vrot.slane %v586, %v590
      %v594 = vsel %vm172, %v569, 0
      %v597 = vsel %vm172, %v570, 0
      %v600 = vsel %vm172, %v571, 0
      %v603 = vsel %vm172, %v572, 0
      %v606 = vsel %vm172, %v573, 0
      %v609 = vsel %vm172, %v574, 0
      %v612 = vsel %vm172, %v575, 0
      %v615 = vsel %vm172, %v576, 0
      %v618 = vsel %vm172, %v577, 0
      %v621 = vsel %vm172, %v578, 0
      %v624 = vsel %vm172, %v579, 0
      %v627 = vsel %vm172, %v580, 0
      %v630 = vsel %vm172, %v581, 0
      %v633 = vsel %vm172, %v582, 0
      %v636 = vsel %vm172, %v583, 0
      %v639 = vsel %vm172, %v584, 0
      %vm641 = vcmask 1041408
      %v643 = vsel %vm641, %v585, 0
      %645 = vmatprep.subr.bf16.mxu0 0
      %646 = vmatpush1.bf16.msra.mxu0 %v643
      %647 = vmatprep.subr.bf16.mxu0 0
      %648 = vmatpush1.bf16.msra.mxu0 0
      %649 = vmatprep.subr.bf16.mxu0 0
      %650 = vmatpush1.bf16.msra.mxu0 0
      %651 = vmatprep.subr.bf16.mxu0 0
      %652 = vmatpush1.bf16.msra.mxu0 0
      %653 = vmatprep.subr.bf16.mxu0 0
      %654 = vmatpush1.bf16.msra.mxu0 0
      %655 = vmatprep.subr.bf16.mxu0 0
      %656 = vmatpush1.bf16.msra.mxu0 0
      %657 = vmatprep.subr.bf16.mxu0 0
      %658 = vmatpush1.bf16.msra.mxu0 0
      %659 = vmatprep.subr.bf16.mxu0 0
      %660 = vmatpush1.bf16.msra.mxu0 0
      %661 = vmatprep.subr.bf16.mxu0 0
      %662 = vmatpush1.bf16.msra.mxu0 0
      %663 = vmatprep.subr.bf16.mxu0 0
      %664 = vmatpush1.bf16.msra.mxu0 0
      %665 = vmatprep.subr.bf16.mxu0 0
      %666 = vmatpush1.bf16.msra.mxu0 0
      %667 = vmatprep.subr.bf16.mxu0 0
      %668 = vmatpush1.bf16.msra.mxu0 0
      %669 = vmatprep.subr.bf16.mxu0 0
      %670 = vmatpush1.bf16.msra.mxu0 0
      %671 = vmatprep.subr.bf16.mxu0 0
      %672 = vmatpush1.bf16.msra.mxu0 0
      %673 = vmatprep.subr.bf16.mxu0 0
      %674 = vmatpush1.bf16.msra.mxu0 0
      %675 = vmatprep.subr.bf16.mxu0 0
      %676 = vmatpush1.bf16.msra.mxu0 0
      %677 = vmatprep.mubr.bf16.mxu0 0
      %678 = vmatmul.mubr.bf16.gmra.mrb[0].mxu0 %v594
      %v679 = vpop.f32.mrb[0].mxu0
      %v680 = vadd.f32 %v591, %v679
      %v681 = vpop.f32.mrb[0].mxu0
      %v682 = vpop.f32.mrb[0].mxu0
      %v683 = vadd.f32 %v591, %v682
      %v684 = vpop.f32.mrb[0].mxu0
      %685 = vmatprep.mubr.bf16.mxu0 0
      %686 = vmatmul.mubr.bf16.gmra.mrb[0].mxu0 %v597
      %v687 = vpop.f32.mrb[0].mxu0
      %v688 = vadd.f32 %v591, %v687
      %v689 = vpop.f32.mrb[0].mxu0
      %v690 = vpop.f32.mrb[0].mxu0
      %v691 = vadd.f32 %v591, %v690
      %v692 = vpop.f32.mrb[0].mxu0
      %693 = vmatprep.mubr.bf16.mxu0 0
      %694 = vmatmul.mubr.bf16.gmra.mrb[0].mxu0 %v600
      %v695 = vpop.f32.mrb[0].mxu0
      %v696 = vadd.f32 %v591, %v695
      %v697 = vpop.f32.mrb[0].mxu0
      %v698 = vpop.f32.mrb[0].mxu0
      %v699 = vadd.f32 %v591, %v698
      %v700 = vpop.f32.mrb[0].mxu0
      %701 = vmatprep.mubr.bf16.mxu0 0
      %702 = vmatmul.mubr.bf16.gmra.mrb[0].mxu0 %v603
      %v703 = vpop.f32.mrb[0].mxu0
      %v704 = vadd.f32 %v591, %v703
      %v705 = vpop.f32.mrb[0].mxu0
      %v706 = vpop.f32.mrb[0].mxu0
      %v707 = vadd.f32 %v591, %v706
      %v708 = vpop.f32.mrb[0].mxu0
      %709 = vmatprep.mubr.bf16.mxu0 0
      %710 = vmatmul.mubr.bf16.gmra.mrb[0].mxu0 %v606
      %v711 = vpop.f32.mrb[0].mxu0
      %v712 = vadd.f32 %v591, %v711
      %v713 = vpop.f32.mrb[0].mxu0
      %v714 = vpop.f32.mrb[0].mxu0
      %v715 = vadd.f32 %v591, %v714
      %v716 = vpop.f32.mrb[0].mxu0
      %717 = vmatprep.mubr.bf16.mxu0 0
      %718 = vmatmul.mubr.bf16.gmra.mrb[0].mxu0 %v609
      %v719 = vpop.f32.mrb[0].mxu0
      %v720 = vadd.f32 %v591, %v719
      %v721 = vpop.f32.mrb[0].mxu0
      %v722 = vpop.f32.mrb[0].mxu0
      %v723 = vadd.f32 %v591, %v722
      %v724 = vpop.f32.mrb[0].mxu0
      %725 = vmatprep.mubr.bf16.mxu0 0
      %726 = vmatmul.mubr.bf16.gmra.mrb[0].mxu0 %v612
      %v727 = vpop.f32.mrb[0].mxu0
      %v728 = vadd.f32 %v591, %v727
      %v729 = vpop.f32.mrb[0].mxu0
      %v730 = vpop.f32.mrb[0].mxu0
      %v731 = vadd.f32 %v591, %v730
      %v732 = vpop.f32.mrb[0].mxu0
      %733 = vmatprep.mubr.bf16.mxu0 0
      %734 = vmatmul.mubr.bf16.gmra.mrb[0].mxu0 %v615
      %v735 = vpop.f32.mrb[0].mxu0
      %v736 = vadd.f32 %v591, %v735
      %v737 = vpop.f32.mrb[0].mxu0
      %v738 = vpop.f32.mrb[0].mxu0
      %v739 = vadd.f32 %v591, %v738
      %v740 = vpop.f32.mrb[0].mxu0
      %741 = vmatprep.mubr.bf16.mxu0 0
      %742 = vmatmul.mubr.bf16.gmra.mrb[0].mxu0 %v618
      %v743 = vpop.f32.mrb[0].mxu0
      %v744 = vadd.f32 %v591, %v743
      %v745 = vpop.f32.mrb[0].mxu0
      %v746 = vpop.f32.mrb[0].mxu0
      %v747 = vadd.f32 %v591, %v746
      %v748 = vpop.f32.mrb[0].mxu0
      %749 = vmatprep.mubr.bf16.mxu0 0
      %750 = vmatmul.mubr.bf16.gmra.mrb[0].mxu0 %v621
      %v751 = vpop.f32.mrb[0].mxu0
      %v752 = vadd.f32 %v591, %v751
      %v753 = vpop.f32.mrb[0].mxu0
      %v754 = vpop.f32.mrb[0].mxu0
      %v755 = vadd.f32 %v591, %v754
      %v756 = vpop.f32.mrb[0].mxu0
      %757 = vmatprep.mubr.bf16.mxu0 0
      %758 = vmatmul.mubr.bf16.gmra.mrb[0].mxu0 %v624
      %v759 = vpop.f32.mrb[0].mxu0
      %v760 = vadd.f32 %v591, %v759
      %v761 = vpop.f32.mrb[0].mxu0
      %v762 = vpop.f32.mrb[0].mxu0
      %v763 = vadd.f32 %v591, %v762
      %v764 = vpop.f32.mrb[0].mxu0
      %765 = vmatprep.mubr.bf16.mxu0 0
      %766 = vmatmul.mubr.bf16.gmra.mrb[0].mxu0 %v627
      %v767 = vpop.f32.mrb[0].mxu0
      %v768 = vadd.f32 %v591, %v767
      %v769 = vpop.f32.mrb[0].mxu0
      %v770 = vpop.f32.mrb[0].mxu0
      %v771 = vadd.f32 %v591, %v770
      %v772 = vpop.f32.mrb[0].mxu0
      %773 = vmatprep.mubr.bf16.mxu0 0
      %774 = vmatmul.mubr.bf16.gmra.mrb[0].mxu0 %v630
      %v775 = vpop.f32.mrb[0].mxu0
      %v776 = vadd.f32 %v591, %v775
      %v777 = vpop.f32.mrb[0].mxu0
      %v778 = vpop.f32.mrb[0].mxu0
      %v779 = vadd.f32 %v591, %v778
      %v780 = vpop.f32.mrb[0].mxu0
      %781 = vmatprep.mubr.bf16.mxu0 0
      %782 = vmatmul.mubr.bf16.gmra.mrb[0].mxu0 %v633
      %v783 = vpop.f32.mrb[0].mxu0
      %v784 = vadd.f32 %v591, %v783
      %v785 = vpop.f32.mrb[0].mxu0
      %v786 = vpop.f32.mrb[0].mxu0
      %v787 = vadd.f32 %v591, %v786
      %v788 = vpop.f32.mrb[0].mxu0
      %789 = vmatprep.mubr.bf16.mxu0 0
      %790 = vmatmul.mubr.bf16.gmra.mrb[0].mxu0 %v636
      %v791 = vpop.f32.mrb[0].mxu0
      %v792 = vadd.f32 %v591, %v791
      %v793 = vpop.f32.mrb[0].mxu0
      %v794 = vpop.f32.mrb[0].mxu0
      %v795 = vadd.f32 %v591, %v794
      %v796 = vpop.f32.mrb[0].mxu0
      %797 = vmatprep.mubr.bf16.mxu0 0
      %798 = vmatmul.mubr.bf16.gmra.mrb[0].mxu0 %v639
      %v799 = vpop.f32.mrb[0].mxu0
      %v800 = vadd.f32 %v591, %v799
      %v801 = vpop.f32.mrb[0].mxu0
      %v802 = vpop.f32.mrb[0].mxu0
      %v803 = vadd.f32 %v591, %v802
      %v804 = vpop.f32.mrb[0].mxu0
      %805 = vdwg.mxu0
      %v806 = vmax.f32 %v680, 0.0
      %v807 = vmax.f32 %v683, 0.0
      %v808 = vmax.f32 %v688, 0.0
      %v809 = vmax.f32 %v691, 0.0
      %v810 = vmax.f32 %v696, 0.0
      %v811 = vmax.f32 %v699, 0.0
      %v812 = vmax.f32 %v704, 0.0
      %v813 = vmax.f32 %v707, 0.0
      %v814 = vmax.f32 %v712, 0.0
      %v815 = vmax.f32 %v715, 0.0
      %v816 = vmax.f32 %v720, 0.0
      %v817 = vmax.f32 %v723, 0.0
      %v818 = vmax.f32 %v728, 0.0
      %v819 = vmax.f32 %v731, 0.0
      %v820 = vmax.f32 %v736, 0.0
      %v821 = vmax.f32 %v739, 0.0
      %v822 = vmax.f32 %v744, 0.0
      %v823 = vmax.f32 %v747, 0.0
      %v824 = vmax.f32 %v752, 0.0
      %v825 = vmax.f32 %v755, 0.0
      %v826 = vmax.f32 %v760, 0.0
      %v827 = vmax.f32 %v763, 0.0
      %v828 = vmax.f32 %v768, 0.0
      %v829 = vmax.f32 %v771, 0.0
      %v830 = vmax.f32 %v776, 0.0
      %v831 = vmax.f32 %v779, 0.0
      %v832 = vmax.f32 %v784, 0.0
      %v833 = vmax.f32 %v787, 0.0
      %v834 = vmax.f32 %v792, 0.0
      %v835 = vmax.f32 %v795, 0.0
      %v836 = vmax.f32 %v800, 0.0
      %v837 = vmax.f32 %v803, 0.0
      %vm838 = vcmask 64512
      %839 = vst.msk [vmem:[%s170] sm:$0xff] %vm838, %v806
      %840 = vst.msk [vmem:[%s170 + $0x8] sm:$0xff] %vm838, %v807
      %841 = vst.msk [vmem:[%s170 + $0x10] sm:$0xff] %vm838, %v808
      %842 = vst.msk [vmem:[%s170 + $0x18] sm:$0xff] %vm838, %v809
      %843 = vst.msk [vmem:[%s170 + $0x20] sm:$0xff] %vm838, %v810
      %844 = vst.msk [vmem:[%s170 + $0x28] sm:$0xff] %vm838, %v811
      %845 = vst.msk [vmem:[%s170 + $0x30] sm:$0xff] %vm838, %v812
      %846 = vst.msk [vmem:[%s170 + $0x38] sm:$0xff] %vm838, %v813
      %847 = vst.msk [vmem:[%s170 + $0x40] sm:$0xff] %vm838, %v814
      %848 = vst.msk [vmem:[%s170 + $0x48] sm:$0xff] %vm838, %v815
      %849 = vst.msk [vmem:[%s170 + $0x50] sm:$0xff] %vm838, %v816
      %850 = vst.msk [vmem:[%s170 + $0x58] sm:$0xff] %vm838, %v817
      %851 = vst.msk [vmem:[%s170 + $0x60] sm:$0xff] %vm838, %v818
      %852 = vst.msk [vmem:[%s170 + $0x68] sm:$0xff] %vm838, %v819
      %853 = vst.msk [vmem:[%s170 + $0x70] sm:$0xff] %vm838, %v820
      %854 = vst.msk [vmem:[%s170 + $0x78] sm:$0xff] %vm838, %v821
      %855 = vst.msk [vmem:[%s170 + $0x80] sm:$0xff] %vm838, %v822
      %856 = vst.msk [vmem:[%s170 + $0x88] sm:$0xff] %vm838, %v823
      %857 = vst.msk [vmem:[%s170 + $0x90] sm:$0xff] %vm838, %v824
      %858 = vst.msk [vmem:[%s170 + $0x98] sm:$0xff] %vm838, %v825
      %859 = vst.msk [vmem:[%s170 + $0xa0] sm:$0xff] %vm838, %v826
      %860 = vst.msk [vmem:[%s170 + $0xa8] sm:$0xff] %vm838, %v827
      %861 = vst.msk [vmem:[%s170 + $0xb0] sm:$0xff] %vm838, %v828
      %862 = vst.msk [vmem:[%s170 + $0xb8] sm:$0xff] %vm838, %v829
      %863 = vst.msk [vmem:[%s170 + $0xc0] sm:$0xff] %vm838, %v830
      %864 = vst.msk [vmem:[%s170 + $0xc8] sm:$0xff] %vm838, %v831
      %865 = vst.msk [vmem:[%s170 + $0xd0] sm:$0xff] %vm838, %v832
      %866 = vst.msk [vmem:[%s170 + $0xd8] sm:$0xff] %vm838, %v833
      %867 = vst.msk [vmem:[%s170 + $0xe0] sm:$0xff] %vm838, %v834
      %868 = vst.msk [vmem:[%s170 + $0xe8] sm:$0xff] %vm838, %v835
      %869 = vst.msk [vmem:[%s170 + $0xf0] sm:$0xff] %vm838, %v836
      %870 = vst.msk [vmem:[%s170 + $0xf8] sm:$0xff] %vm838, %v837
      %p871 = scmp.lt.s32.totalorder %s14, 1
      %s872 = scalar_select %p871, %s14, 1
      %s873 = smul.addr %s872, 32
      %s874 = smul.addr %s873, 8
      %s875 = scalar_lea.vmem %s3, %s874
      // Predicated region
      $region33: #{inception_forward.7} parent=31 // pred_check
        %p876 = pneg %p100
      $region34: #{inception_forward.7} parent=31 // pred_check_branch
        %878 = sbr.rel (%p876) target = $region36
      $region35: #{inception_forward.7} parent=31 // pred_region
        _
      $region36: #{inception_forward.7} parent=31 // pred_fallthru
        _
    $region32: #{inception_forward.7} parent=5 // pred_fallthru
      _
    %p879 = scmp.le.s32.totalorder 2, %s9
    // Predicated region
    $region37: #{inception_forward.7} parent=5 // pred_check
      %p880 = pneg %p879
    $region38: #{inception_forward.7} parent=5 // pred_check_branch
      %882 = sbr.rel (%p880) target = $region40
    $region39: #{inception_forward.7} parent=5 // pred_region
      %s883 = ssub.s32 %s9, 2
      // Predicated region
      $region41: #{inception_forward.7} parent=39 // pred_check
        %p884 = pneg %p106
      $region42: #{inception_forward.7} parent=39 // pred_check_branch
        %886 = sbr.rel (%p884) target = $region44
      $region43: #{inception_forward.7} parent=39 // pred_region
        %p887 = scmp.lt.s32.totalorder %s15, 1
        %s888 = scalar_select %p887, %s15, 1
        %s889 = smul.addr %s888, 32
        %s890 = smul.addr %s889, 8
        %s891 = scalar_lea.vmem %s3, %s890
      $region44: #{inception_forward.7} parent=39 // pred_fallthru
        _
    $region40: #{inception_forward.7} parent=5 // pred_fallthru
      _
  $region6: #{inception_forward.7} parent=0 // loop_footer
    %s13 = sadd.s32 1, %s9
  $region7: #{inception_forward.7} parent=0 // loop_footer_branch
    %8 = sbr.rel target = $region3
  $region8: #{inception_forward.7} parent=0 // loop_exit
    _

// kernel: inception_forward.5
$region0: #{inception_forward.5}
  #allocation0 [shape = 'u32[]', space=smem, size = 0x4, offset = 0x4, fixed_abs, tag = 'smem constant byte address 0x4 - core index']
  #allocation1 [shape = 'u32[144,128]{1,0:T(1,128)}', space=vmem, size = 0x12000, scoped, tag = 'internal scratch']
  #allocation2 [shape = 'f32[18,18,4]{2,1,0:T(8,128)}', space=vmem, size = 0x36000, scoped, tag = 'scratch operand']
  %s0 = inlined_call_operand.vmem [shape: bf16[2,16,16,4], index: 0, kind: input, shape index: {}]
  %s1 = inlined_call_operand.vmem [shape: bf16[9,4,8], index: 1, kind: input, shape index: {}]
  %s2 = inlined_call_operand.vmem [shape: f32[1,8], index: 2, kind: input, shape index: {}]
  %s3 = inlined_call_operand.vmem [shape: f32[2,16,16,8], index: 3, kind: output, shape index: {}]
  %s4 = sld [smem:[#allocation0]]
  $region45: #{inception_forward.5} parent=0
    _
  %s6 = ssub.s32 1, %s4
  %s7 = scalar_select 0, %s6, %s4
  loop: start=0, step=1, limit=4
  $region2: #{inception_forward.5} parent=0 // loop_pre_header
    _
  $region3: #{inception_forward.5} parent=0 // loop_header
    %s9 = sphi 0, %s13
    %p10 = scmp.ge.s32.totalorder %s9, 4
    %s19 = sphi 0, %s21
    %s22 = sphi 0, %s19
    %s23 = sphi 0, %s22
    %s39 = sphi 0, %s23
    %s43 = sphi 0, %s43
    %s45 = sphi 0, %s43
    %s46 = sphi 0, %s45
    %s60 = sphi 0, %s46
    %s64 = sphi 0, %s64
    %s66 = sphi 0, %s64
    %s67 = sphi 0, %s66
    %s81 = sphi 0, %s67
    %s87 = sphi 0, %s89
    %s90 = sphi 0, %s87
    %s91 = sphi 0, %s90
    %s107 = sphi 0, %s91
  $region4: #{inception_forward.5} parent=0 // loop_header_branch
    %12 = sbr.rel (%p10) target = $region8
  $region5: #{inception_forward.5} parent=0 // loop_body
    %s14 = ssub.s32 %s9, 1
    %s15 = ssub.s32 %s9, 2
    %s16 = sadd.s32 %s9, 1
    %s17 = ssub.s32 %s9, %s16
    %p18 = scmp.eq.s32.totalorder %s17, 0
    %s20 = sadd.s32 %s19, 1
    %s21 = scalar_select %p18, %s19, %s20
    %p24 = pneg %p18
    %p25 = scmp.eq.s32.totalorder %s9, 1
    %p26 = por %p24, %p25
    %p27 = scmp.ne.s32.totalorder %s19, %s22
    %p28 = scmp.eq.s32.totalorder %s9, 0
    %p29 = por %p27, %p28
    %p30 = scmp.ne.s32.totalorder %s19, %s22
    %p31 = scmp.eq.s32.totalorder %s14, 1
    %p32 = por %p30, %p31
    %p33 = scmp.ne.s32.totalorder %s22, %s23
    %p34 = scmp.eq.s32.totalorder %s14, 0
    %p35 = por %p33, %p34
    %p36 = scmp.ne.s32.totalorder %s22, %s23
    %p37 = scmp.eq.s32.totalorder %s15, 1
    %p38 = por %p36, %p37
    %p40 = scmp.ne.s32.totalorder %s23, %s39
    %p41 = scmp.eq.s32.totalorder %s15, 0
    %p42 = por %p40, %p41
    %s44 = sadd.s32 %s43, 1
    %p47 = scmp.eq.s32.totalorder %s9, 1
    %p48 = scmp.ne.s32.totalorder %s43, %s45
    %p49 = scmp.eq.s32.totalorder %s9, 0
    %p50 = por %p48, %p49
    %p51 = scmp.ne.s32.totalorder %s43, %s45
    %p52 = scmp.eq.s32.totalorder %s14, 1
    %p53 = por %p51, %p52
    %p54 = scmp.ne.s32.totalorder %s45, %s46
    %p55 = scmp.eq.s32.totalorder %s14, 0
    %p56 = por %p54, %p55
    %p57 = scmp.ne.s32.totalorder %s45, %s46
    %p58 = scmp.eq.s32.totalorder %s15, 1
    %p59 = por %p57, %p58
    %p61 = scmp.ne.s32.totalorder %s46, %s60
    %p62 = scmp.eq.s32.totalorder %s15, 0
    %p63 = por %p61, %p62
    %s65 = sadd.s32 %s64, 1
    %p68 = scmp.eq.s32.totalorder %s9, 1
    %p69 = scmp.ne.s32.totalorder %s64, %s66
    %p70 = scmp.eq.s32.totalorder %s9, 0
    %p71 = por %p69, %p70
    %p72 = scmp.ne.s32.totalorder %s64, %s66
    %p73 = scmp.eq.s32.totalorder %s14, 1
    %p74 = por %p72, %p73
    %p75 = scmp.ne.s32.totalorder %s66, %s67
    %p76 = scmp.eq.s32.totalorder %s14, 0
    %p77 = por %p75, %p76
    %p78 = scmp.ne.s32.totalorder %s66, %s67
    %p79 = scmp.eq.s32.totalorder %s15, 1
    %p80 = por %p78, %p79
    %p82 = scmp.ne.s32.totalorder %s67, %s81
    %p83 = scmp.eq.s32.totalorder %s15, 0
    %p84 = por %p82, %p83
    %s85 = ssub.s32 %s9, %s16
    %p86 = scmp.eq.s32.totalorder %s85, 0
    %s88 = sadd.s32 %s87, 1
    %s89 = scalar_select %p86, %s87, %s88
    %p92 = pneg %p86
    %p93 = scmp.eq.s32.totalorder %s9, 1
    %p94 = por %p92, %p93
    %p95 = scmp.ne.s32.totalorder %s87, %s90
    %p96 = scmp.eq.s32.totalorder %s9, 0
    %p97 = por %p95, %p96
    %p98 = scmp.ne.s32.totalorder %s87, %s90
    %p99 = scmp.eq.s32.totalorder %s14, 1
    %p100 = por %p98, %p99
    %p101 = scmp.ne.s32.totalorder %s90, %s91
    %p102 = scmp.eq.s32.totalorder %s14, 0
    %p103 = por %p101, %p102
    %p104 = scmp.ne.s32.totalorder %s90, %s91
    %p105 = scmp.eq.s32.totalorder %s15, 1
    %p106 = por %p104, %p105
    %p108 = scmp.ne.s32.totalorder %s91, %s107
    %p109 = scmp.eq.s32.totalorder %s15, 0
    %p110 = por %p108, %p109
    %p111 = scmp.le.s32.totalorder 1, %s9
    %p112 = scmp.lt.s32.totalorder %s9, 3
    %p113 = pnand %p111, %p112
    %p114 = pneg %p113
    // Predicated region
    $region9: #{inception_forward.5} parent=5 // pred_check
      _
    $region10: #{inception_forward.5} parent=5 // pred_check_branch
      %116 = sbr.rel (%p113) target = $region12
    $region11: #{inception_forward.5} parent=5 // pred_region
      %s117 = ssub.s32 %s9, 1
      // Predicated region
      $region13: #{inception_forward.5} parent=11 // pred_check
        %p118 = pneg %p56
      $region14: #{inception_forward.5} parent=11 // pred_check_branch
        %120 = sbr.rel (%p118) target = $region16
      $region15: #{inception_forward.5} parent=11 // pred_region
        _
      $region16: #{inception_forward.5} parent=11 // pred_fallthru
        _
      // Predicated region
      $region17: #{inception_forward.5} parent=11 // pred_check
        %p121 = pneg %p77
      $region18: #{inception_forward.5} parent=11 // pred_check_branch
        %123 = sbr.rel (%p121) target = $region20
      $region19: #{inception_forward.5} parent=11 // pred_region
        _
      $region20: #{inception_forward.5} parent=11 // pred_fallthru
        _
    $region12: #{inception_forward.5} parent=5 // pred_fallthru
      _
    %p124 = scmp.lt.s32.totalorder %s9, 2
    // Predicated region
    $region21: #{inception_forward.5} parent=5 // pred_check
      %p125 = pneg %p124
    $region22: #{inception_forward.5} parent=5 // pred_check_branch
      %127 = sbr.rel (%p125) target = $region24
    $region23: #{inception_forward.5} parent=5 // pred_region
      // Predicated region
      $region25: #{inception_forward.5} parent=23 // pred_check
        %p128 = pneg %p29
      $region26: #{inception_forward.5} parent=23 // pred_check_branch
        %130 = sbr.rel (%p128) target = $region28
      $region27: #{inception_forward.5} parent=23 // pred_region
        %p131 = scmp.lt.s32.totalorder %s9, 1
        %s132 = scalar_select %p131, %s9, 1
        %s133 = smul.addr %s132, 32
        %s134 = smul.addr %s133, 4
        %s135 = scalar_lea.vmem %s0, %s134
      $region28: #{inception_forward.5} parent=23 // pred_fallthru
        _
    $region24: #{inception_forward.5} parent=5 // pred_fallthru
      _
    %p136 = scmp.le.s32.totalorder 1, %s9
    %p137 = scmp.lt.s32.totalorder %s9, 3
    %p138 = pnand %p136, %p137
    %p139 = pneg %p138
    // Predicated region
    $region29: #{inception_forward.5} parent=5 // pred_check
      _
    $region30: #{inception_forward.5} parent=5 // pred_check_branch
      %141 = sbr.rel (%p138) target = $region32
    $region31: #{inception_forward.5} parent=5 // pred_region
      %s142 = ssub.s32 %s9, 1
      %p143 = scmp.lt.s32.totalorder %s14, 1
      %s144 = scalar_select %p143, %s14, 1
      %s145 = smul.addr %s144, 32
      %s146 = smul.addr %s145, 4
      %s147 = scalar_lea.vmem %s0, %s146
      %p148 = pneg %p35
      %p149 = pneg %p32
      %p150 = pneg %p56
      %p151 = pneg %p53
      %p152 = pneg %p77
      %p153 = pneg %p74
      %p154 = pneg %p103
      %p155 = pneg %p100
      %p156 = scmp.lt.s32.totalorder %s14, 1
      %s157 = scalar_select %p156, %s14, 1
      %s158 = smul.addr %s157, 32
      %s159 = smul.addr %s158, 8
      %s160 = scalar_lea.vmem %s3, %s159
      %p161 = scmp.lt.s32.totalorder %s14, 1
      %s162 = scalar_select %p161, %s14, 1
      %s163 = smul.addr %s162, 32
      %s164 = smul.addr %s163, 4
      %s165 = scalar_lea.vmem %s0, %s164
      %p166 = scmp.lt.s32.totalorder %s14, 1
      %s167 = scalar_select %p166, %s14, 1
      %s168 = smul.addr %s167, 32
      %s169 = smul.addr %s168, 8
      %s170 = scalar_lea.vmem %s3, %s169
      %vm172 = vcmask 31744
      %173 = vst.msk [vmem:[#allocation2] sm:$0xff] %vm172, 0.0
      %174 = vst.msk [vmem:[#allocation2 + $0x8] sm:$0xff] %vm172, 0.0
      %vm175 = vcmask 25600
      %176 = vst.msk [vmem:[#allocation2 + $0x10] sm:$0x3] %vm175, 0.0
      %177 = vst.msk [vmem:[#allocation2 + $0x18] sm:$0xff] %vm172, 0.0
      %178 = vst.msk [vmem:[#allocation2 + $0x20] sm:$0xff] %vm172, 0.0
      %179 = vst.msk [vmem:[#allocation2 + $0x28] sm:$0x3] %vm175, 0.0
      %180 = vst.msk [vmem:[#allocation2 + $0x30] sm:$0xff] %vm172, 0.0
      %181 = vst.msk [vmem:[#allocation2 + $0x38] sm:$0xff] %vm172, 0.0
      %182 = vst.msk [vmem:[#allocation2 + $0x40] sm:$0x3] %vm175, 0.0
      %183 = vst.msk [vmem:[#allocation2 + $0x48] sm:$0xff] %vm172, 0.0
      %184 = vst.msk [vmem:[#allocation2 + $0x50] sm:$0xff] %vm172, 0.0
      %185 = vst.msk [vmem:[#allocation2 + $0x58] sm:$0x3] %vm175, 0.0
      %186 = vst.msk [vmem:[#allocation2 + $0x60] sm:$0xff] %vm172, 0.0
      %187 = vst.msk [vmem:[#allocation2 + $0x68] sm:$0xff] %vm172, 0.0
      %188 = vst.msk [vmem:[#allocation2 + $0x70] sm:$0x3] %vm175, 0.0
      %189 = vst.msk [vmem:[#allocation2 + $0x78] sm:$0xff] %vm172, 0.0
      %190 = vst.msk [vmem:[#allocation2 + $0x80] sm:$0xff] %vm172, 0.0
      %191 = vst.msk [vmem:[#allocation2 + $0x88] sm:$0x3] %vm175, 0.0
      %192 = vst.msk [vmem:[#allocation2 + $0x90] sm:$0xff] %vm172, 0.0
      %193 = vst.msk [vmem:[#allocation2 + $0x98] sm:$0xff] %vm172, 0.0
      %194 = vst.msk [vmem:[#allocation2 + $0xa0] sm:$0x3] %vm175, 0.0
      %195 = vst.msk [vmem:[#allocation2 + $0xa8] sm:$0xff] %vm172, 0.0
      %196 = vst.msk [vmem:[#allocation2 + $0xb0] sm:$0xff] %vm172, 0.0
      %197 = vst.msk [vmem:[#allocation2 + $0xb8] sm:$0x3] %vm175, 0.0
      %198 = vst.msk [vmem:[#allocation2 + $0xc0] sm:$0xff] %vm172, 0.0
      %199 = vst.msk [vmem:[#allocation2 + $0xc8] sm:$0xff] %vm172, 0.0
      %200 = vst.msk [vmem:[#allocation2 + $0xd0] sm:$0x3] %vm175, 0.0
      %201 = vst.msk [vmem:[#allocation2 + $0xd8] sm:$0xff] %vm172, 0.0
      %202 = vst.msk [vmem:[#allocation2 + $0xe0] sm:$0xff] %vm172, 0.0
      %203 = vst.msk [vmem:[#allocation2 + $0xe8] sm:$0x3] %vm175, 0.0
      %204 = vst.msk [vmem:[#allocation2 + $0xf0] sm:$0xff] %vm172, 0.0
      %205 = vst.msk [vmem:[#allocation2 + $0xf8] sm:$0xff] %vm172, 0.0
      %206 = vst.msk [vmem:[#allocation2 + $0x100] sm:$0x3] %vm175, 0.0
      %207 = vst.msk [vmem:[#allocation2 + $0x108] sm:$0xff] %vm172, 0.0
      %208 = vst.msk [vmem:[#allocation2 + $0x110] sm:$0xff] %vm172, 0.0
      %209 = vst.msk [vmem:[#allocation2 + $0x118] sm:$0x3] %vm175, 0.0
      %210 = vst.msk [vmem:[#allocation2 + $0x120] sm:$0xff] %vm172, 0.0
      %211 = vst.msk [vmem:[#allocation2 + $0x128] sm:$0xff] %vm172, 0.0
      %212 = vst.msk [vmem:[#allocation2 + $0x130] sm:$0x3] %vm175, 0.0
      %213 = vst.msk [vmem:[#allocation2 + $0x138] sm:$0xff] %vm172, 0.0
      %214 = vst.msk [vmem:[#allocation2 + $0x140] sm:$0xff] %vm172, 0.0
      %215 = vst.msk [vmem:[#allocation2 + $0x148] sm:$0x3] %vm175, 0.0
      %216 = vst.msk [vmem:[#allocation2 + $0x150] sm:$0xff] %vm172, 0.0
      %217 = vst.msk [vmem:[#allocation2 + $0x158] sm:$0xff] %vm172, 0.0
      %218 = vst.msk [vmem:[#allocation2 + $0x160] sm:$0x3] %vm175, 0.0
      %219 = vst.msk [vmem:[#allocation2 + $0x168] sm:$0xff] %vm172, 0.0
      %220 = vst.msk [vmem:[#allocation2 + $0x170] sm:$0xff] %vm172, 0.0
      %221 = vst.msk [vmem:[#allocation2 + $0x178] sm:$0x3] %vm175, 0.0
      %222 = vst.msk [vmem:[#allocation2 + $0x180] sm:$0xff] %vm172, 0.0
      %223 = vst.msk [vmem:[#allocation2 + $0x188] sm:$0xff] %vm172, 0.0
      %224 = vst.msk [vmem:[#allocation2 + $0x190] sm:$0x3] %vm175, 0.0
      %225 = vst.msk [vmem:[#allocation2 + $0x198] sm:$0xff] %vm172, 0.0
      %226 = vst.msk [vmem:[#allocation2 + $0x1a0] sm:$0xff] %vm172, 0.0
      %227 = vst.msk [vmem:[#allocation2 + $0x1a8] sm:$0x3] %vm175, 0.0
      %v228 = vld [vmem:[%s165] sm:$0xf]
      %v229 = vld [vmem:[%s165 + $0x4] sm:$0xf]
      %v230 = vld [vmem:[%s165 + $0x8] sm:$0xf]
      %v231 = vld [vmem:[%s165 + $0xc] sm:$0xf]
      %v232 = vld [vmem:[%s165 + $0x10] sm:$0xf]
      %v233 = vld [vmem:[%s165 + $0x14] sm:$0xf]
      %v234 = vld [vmem:[%s165 + $0x18] sm:$0xf]
      %v235 = vld [vmem:[%s165 + $0x1c] sm:$0xf]
      %v236 = vld [vmem:[%s165 + $0x20] sm:$0xf]
      %v237 = vld [vmem:[%s165 + $0x24] sm:$0xf]
      %v238 = vld [vmem:[%s165 + $0x28] sm:$0xf]
      %v239 = vld [vmem:[%s165 + $0x2c] sm:$0xf]
      %v240 = vld [vmem:[%s165 + $0x30] sm:$0xf]
      %v241 = vld [vmem:[%s165 + $0x34] sm:$0xf]
      %v242 = vld [vmem:[%s165 + $0x38] sm:$0xf]
      %v243 = vld [vmem:[%s165 + $0x3c] sm:$0xf]
      %v244 = vld [vmem:[%s165 + $0x40] sm:$0xf]
      %v245 = vld [vmem:[%s165 + $0x44] sm:$0xf]
      %v246 = vld [vmem:[%s165 + $0x48] sm:$0xf]
      %v247 = vld [vmem:[%s165 + $0x4c] sm:$0xf]
      %v248 = vld [vmem:[%s165 + $0x50] sm:$0xf]
      %v249 = vld [vmem:[%s165 + $0x54] sm:$0xf]
      %v250 = vld [vmem:[%s165 + $0x58] sm:$0xf]
      %v251 = vld [vmem:[%s165 + $0x5c] sm:$0xf]
      %v252 = vld [vmem:[%s165 + $0x60] sm:$0xf]
      %v253 = vld [vmem:[%s165 + $0x64] sm:$0xf]
      %v254 = vld [vmem:[%s165 + $0x68] sm:$0xf]
      %v255 = vld [vmem:[%s165 + $0x6c] sm:$0xf]
      %v256 = vld [vmem:[%s165 + $0x70] sm:$0xf]
      %v257 = vld [vmem:[%s165 + $0x74] sm:$0xf]
      %v258 = vld [vmem:[%s165 + $0x78] sm:$0xf]
      %v259 = vld [vmem:[%s165 + $0x7c] sm:$0xf]
      %v260 = vunpack.c.l.bf16 %v228
      %v261 = vunpack.c.l.bf16 %v229
      %v262 = vunpack.c.l.bf16 %v230
      %v263 = vunpack.c.l.bf16 %v231
      %v264 = vunpack.c.l.bf16 %v232
      %v265 = vunpack.c.l.bf16 %v233
      %v266 = vunpack.c.l.bf16 %v234
      %v267 = vunpack.c.l.bf16 %v235
      %v268 = vunpack.c.l.bf16 %v236
      %v269 = vunpack.c.l.bf16 %v237
      %v270 = vunpack.c.l.bf16 %v238
      %v271 = vunpack.c.l.bf16 %v239
      %v272 = vunpack.c.l.bf16 %v240
      %v273 = vunpack.c.l.bf16 %v241
      %v274 = vunpack.c.l.bf16 %v242
      %v275 = vunpack.c.l.bf16 %v243
      %v276 = vunpack.c.l.bf16 %v244
      %v277 = vunpack.c.l.bf16 %v245
      %v278 = vunpack.c.l.bf16 %v246
      %v279 = vunpack.c.l.bf16 %v247
      %v280 = vunpack.c.l.bf16 %v248
      %v281 = vunpack.c.l.bf16 %v249
      %v282 = vunpack.c.l.bf16 %v250
      %v283 = vunpack.c.l.bf16 %v251
      %v284 = vunpack.c.l.bf16 %v252
      %v285 = vunpack.c.l.bf16 %v253
      %v286 = vunpack.c.l.bf16 %v254
      %v287 = vunpack.c.l.bf16 %v255
      %v288 = vunpack.c.l.bf16 %v256
      %v289 = vunpack.c.l.bf16 %v257
      %v290 = vunpack.c.l.bf16 %v258
      %v291 = vunpack.c.l.bf16 %v259
      %s292 = scalar_lea.vmem [#allocation2], 24
      %293 = vst.msk [vmem:[%s292 + $0x1] sm:$0xff] %vm172, %v260
      %294 = vst.msk [vmem:[%s292 + $0x9] sm:$0xff] %vm172, %v261
      %295 = vst.msk [vmem:[%s292 + $0x19] sm:$0xff] %vm172, %v262
      %296 = vst.msk [vmem:[%s292 + $0x21] sm:$0xff] %vm172, %v263
      %297 = vst.msk [vmem:[%s292 + $0x31] sm:$0xff] %vm172, %v264
      %298 = vst.msk [vmem:[%s292 + $0x39] sm:$0xff] %vm172, %v265
      %299 = vst.msk [vmem:[%s292 + $0x49] sm:$0xff] %vm172, %v266
      %300 = vst.msk [vmem:[%s292 + $0x51] sm:$0xff] %vm172, %v267
      %301 = vst.msk [vmem:[%s292 + $0x61] sm:$0xff] %vm172, %v268
      %302 = vst.msk [vmem:[%s292 + $0x69] sm:$0xff] %vm172, %v269
      %303 = vst.msk [vmem:[%s292 + $0x79] sm:$0xff] %vm172, %v270
      %304 = vst.msk [vmem:[%s292 + $0x81] sm:$0xff] %vm172, %v271
      %305 = vst.msk [vmem:[%s292 + $0x91] sm:$0xff] %vm172, %v272
      %306 = vst.msk [vmem:[%s292 + $0x99] sm:$0xff] %vm172, %v273
      %307 = vst.msk [vmem:[%s292 + $0xa9] sm:$0xff] %vm172, %v274
      %308 = vst.msk [vmem:[%s292 + $0xb1] sm:$0xff] %vm172, %v275
      %309 = vst.msk [vmem:[%s292 + $0xc1] sm:$0xff] %vm172, %v276
      %310 = vst.msk [vmem:[%s292 + $0xc9] sm:$0xff] %vm172, %v277
      %311 = vst.msk [vmem:[%s292 + $0xd9] sm:$0xff] %vm172, %v278
      %312 = vst.msk [vmem:[%s292 + $0xe1] sm:$0xff] %vm172, %v279
      %313 = vst.msk [vmem:[%s292 + $0xf1] sm:$0xff] %vm172, %v280
      %314 = vst.msk [vmem:[%s292 + $0xf9] sm:$0xff] %vm172, %v281
      %315 = vst.msk [vmem:[%s292 + $0x109] sm:$0xff] %vm172, %v282
      %316 = vst.msk [vmem:[%s292 + $0x111] sm:$0xff] %vm172, %v283
      %317 = vst.msk [vmem:[%s292 + $0x121] sm:$0xff] %vm172, %v284
      %318 = vst.msk [vmem:[%s292 + $0x129] sm:$0xff] %vm172, %v285
      %319 = vst.msk [vmem:[%s292 + $0x139] sm:$0xff] %vm172, %v286
      %320 = vst.msk [vmem:[%s292 + $0x141] sm:$0xff] %vm172, %v287
      %321 = vst.msk [vmem:[%s292 + $0x151] sm:$0xff] %vm172, %v288
      %322 = vst.msk [vmem:[%s292 + $0x159] sm:$0xff] %vm172, %v289
      %323 = vst.msk [vmem:[%s292 + $0x169] sm:$0xff] %vm172, %v290
      %324 = vst.msk [vmem:[%s292 + $0x171] sm:$0xff] %vm172, %v291
      %v325 = vld [vmem:[#allocation2] sm:$0xff]
      %v326 = vld [vmem:[#allocation2 + $0x8] sm:$0xff]
      %v327 = vld [vmem:[#allocation2 + $0x18] sm:$0xff]
      %v328 = vld [vmem:[#allocation2 + $0x20] sm:$0xff]
      %v329 = vld [vmem:[#allocation2 + $0x30] sm:$0xff]
      %v330 = vld [vmem:[#allocation2 + $0x38] sm:$0xff]
      %v331 = vld [vmem:[#allocation2 + $0x48] sm:$0xff]
      %v332 = vld [vmem:[#allocation2 + $0x50] sm:$0xff]
      %v333 = vld [vmem:[#allocation2 + $0x60] sm:$0xff]
      %v334 = vld [vmem:[#allocation2 + $0x68] sm:$0xff]
      %v335 = vld [vmem:[#allocation2 + $0x78] sm:$0xff]
      %v336 = vld [vmem:[#allocation2 + $0x80] sm:$0xff]
      %v337 = vld [vmem:[#allocation2 + $0x90] sm:$0xff]
      %v338 = vld [vmem:[#allocation2 + $0x98] sm:$0xff]
      %v339 = vld [vmem:[#allocation2 + $0xa8] sm:$0xff]
      %v340 = vld [vmem:[#allocation2 + $0xb0] sm:$0xff]
      %v341 = vld [vmem:[#allocation2 + $0xc0] sm:$0xff]
      %v342 = vld [vmem:[#allocation2 + $0xc8] sm:$0xff]
      %v343 = vld [vmem:[#allocation2 + $0xd8] sm:$0xff]
      %v344 = vld [vmem:[#allocation2 + $0xe0] sm:$0xff]
      %v345 = vld [vmem:[#allocation2 + $0xf0] sm:$0xff]
      %v346 = vld [vmem:[#allocation2 + $0xf8] sm:$0xff]
      %v347 = vld [vmem:[#allocation2 + $0x108] sm:$0xff]
      %v348 = vld [vmem:[#allocation2 + $0x110] sm:$0xff]
      %v349 = vld [vmem:[#allocation2 + $0x120] sm:$0xff]
      %v350 = vld [vmem:[#allocation2 + $0x128] sm:$0xff]
      %v351 = vld [vmem:[#allocation2 + $0x138] sm:$0xff]
      %v352 = vld [vmem:[#allocation2 + $0x140] sm:$0xff]
      %v353 = vld [vmem:[#allocation2 + $0x150] sm:$0xff]
      %v354 = vld [vmem:[#allocation2 + $0x158] sm:$0xff]
      %v355 = vld [vmem:[#allocation2 + $0x168] sm:$0xff]
      %v356 = vld [vmem:[#allocation2 + $0x170] sm:$0xff]
      %v357 = vpack.c.bf16 %v326, %v325
      %v358 = vpack.c.bf16 %v328, %v327
      %v359 = vpack.c.bf16 %v330, %v329
      %v360 = vpack.c.bf16 %v332, %v331
      %v361 = vpack.c.bf16 %v334, %v333
      %v362 = vpack.c.bf16 %v336, %v335
      %v363 = vpack.c.bf16 %v338, %v337
      %v364 = vpack.c.bf16 %v340, %v339
      %v365 = vpack.c.bf16 %v342, %v341
      %v366 = vpack.c.bf16 %v344, %v343
      %v367 = vpack.c.bf16 %v346, %v345
      %v368 = vpack.c.bf16 %v348, %v347
      %v369 = vpack.c.bf16 %v350, %v349
      %v370 = vpack.c.bf16 %v352, %v351
      %v371 = vpack.c.bf16 %v354, %v353
      %v372 = vpack.c.bf16 %v356, %v355
      %v373 = vld [vmem:[%s1] sm:$0x3]
      %v374 = vld [vmem:[#allocation2 + $0x1] sm:$0xff]
      %v375 = vld [vmem:[#allocation2 + $0x9] sm:$0xff]
      %v376 = vld [vmem:[#allocation2 + $0x19] sm:$0xff]
      %v377 = vld [vmem:[#allocation2 + $0x21] sm:$0xff]
      %v378 = vld [vmem:[#allocation2 + $0x31] sm:$0xff]
      %v379 = vld [vmem:[#allocation2 + $0x39] sm:$0xff]
      %v380 = vld [vmem:[#allocation2 + $0x49] sm:$0xff]
      %v381 = vld [vmem:[#allocation2 + $0x51] sm:$0xff]
      %v382 = vld [vmem:[#allocation2 + $0x61] sm:$0xff]
      %v383 = vld [vmem:[#allocation2 + $0x69] sm:$0xff]
      %v384 = vld [vmem:[#allocation2 + $0x79] sm:$0xff]
      %v385 = vld [vmem:[#allocation2 + $0x81] sm:$0xff]
      %v386 = vld [vmem:[#allocation2 + $0x91] sm:$0xff]
      %v387 = vld [vmem:[#allocation2 + $0x99] sm:$0xff]
      %v388 = vld [vmem:[#allocation2 + $0xa9] sm:$0xff]
      %v389 = vld [vmem:[#allocation2 + $0xb1] sm:$0xff]
      %v390 = vld [vmem:[#allocation2 + $0xc1] sm:$0xff]
      %v391 = vld [vmem:[#allocation2 + $0xc9] sm:$0xff]
      %v392 = vld [vmem:[#allocation2 + $0xd9] sm:$0xff]
      %v393 = vld [vmem:[#allocation2 + $0xe1] sm:$0xff]
      %v394 = vld [vmem:[#allocation2 + $0xf1] sm:$0xff]
      %v395 = vld [vmem:[#allocation2 + $0xf9] sm:$0xff]
      %v396 = vld [vmem:[#allocation2 + $0x109] sm:$0xff]
      %v397 = vld [vmem:[#allocation2 + $0x111] sm:$0xff]
      %v398 = vld [vmem:[#allocation2 + $0x121] sm:$0xff]
      %v399 = vld [vmem:[#allocation2 + $0x129] sm:$0xff]
      %v400 = vld [vmem:[#allocation2 + $0x139] sm:$0xff]
      %v401 = vld [vmem:[#allocation2 + $0x141] sm:$0xff]
      %v402 = vld [vmem:[#allocation2 + $0x151] sm:$0xff]
      %v403 = vld [vmem:[#allocation2 + $0x159] sm:$0xff]
      %v404 = vld [vmem:[#allocation2 + $0x169] sm:$0xff]
      %v405 = vld [vmem:[#allocation2 + $0x171] sm:$0xff]
      %v406 = vpack.c.bf16 %v375, %v374
      %v407 = vpack.c.bf16 %v377, %v376
      %v408 = vpack.c.bf16 %v379, %v378
      %v409 = vpack.c.bf16 %v381, %v380
      %v410 = vpack.c.bf16 %v383, %v382
      %v411 = vpack.c.bf16 %v385, %v384
      %v412 = vpack.c.bf16 %v387, %v386
      %v413 = vpack.c.bf16 %v389, %v388
      %v414 = vpack.c.bf16 %v391, %v390
      %v415 = vpack.c.bf16 %v393, %v392
      %v416 = vpack.c.bf16 %v395, %v394
      %v417 = vpack.c.bf16 %v397, %v396
      %v418 = vpack.c.bf16 %v399, %v398
      %v419 = vpack.c.bf16 %v401, %v400
      %v420 = vpack.c.bf16 %v403, %v402
      %v421 = vpack.c.bf16 %v405, %v404
      %s422 = scalar_lea.vmem %s1, 2
      %v423 = vld [vmem:[%s422] sm:$0x3]
      %v425 = vsel %vm172, %v406, 0
      %v428 = vsel %vm172, %v407, 0
      %v431 = vsel %vm172, %v408, 0
      %v434 = vsel %vm172, %v409, 0
      %v437 = vsel %vm172, %v410, 0
      %v440 = vsel %vm172, %v411, 0
      %v443 = vsel %vm172, %v412, 0
      %v446 = vsel %vm172, %v413, 0
      %v449 = vsel %vm172, %v414, 0
      %v452 = vsel %vm172, %v415, 0
      %v455 = vsel %vm172, %v416, 0
      %v458 = vsel %vm172, %v417, 0
      %v461 = vsel %vm172, %v418, 0
      %v464 = vsel %vm172, %v419, 0
      %v467 = vsel %vm172, %v420, 0
      %v470 = vsel %vm172, %v421, 0
      %vm472 = vcmask 1041408
      %v474 = vsel %vm472, %v423, 0
      %476 = vmatprep.subr.bf16.mxu0 0
      %477 = vmatpush1.bf16.msra.mxu0 %v474
      %478 = vmatprep.subr.bf16.mxu0 0
      %479 = vmatpush1.bf16.msra.mxu0 0
      %480 = vmatprep.subr.bf16.mxu0 0
      %481 = vmatpush1.bf16.msra.mxu0 0
      %482 = vmatprep.subr.bf16.mxu0 0
      %483 = vmatpush1.bf16.msra.mxu0 0
      %484 = vmatprep.subr.bf16.mxu0 0
      %485 = vmatpush1.bf16.msra.mxu0 0
      %486 = vmatprep.subr.bf16.mxu0 0
      %487 = vmatpush1.bf16.msra.mxu0 0
      %488 = vmatprep.subr.bf16.mxu0 0
      %489 = vmatpush1.bf16.msra.mxu0 0
      %490 = vmatprep.subr.bf16.mxu0 0
      %491 = vmatpush1.bf16.msra.mxu0 0
      %492 = vmatprep.subr.bf16.mxu0 0
      %493 = vmatpush1.bf16.msra.mxu0 0
      %494 = vmatprep.subr.bf16.mxu0 0
      %495 = vmatpush1.bf16.msra.mxu0 0
      %496 = vmatprep.subr.bf16.mxu0 0
      %497 = vmatpush1.bf16.msra.mxu0 0
      %498 = vmatprep.subr.bf16.mxu0 0
      %499 = vmatpush1.bf16.msra.mxu0 0
      %500 = vmatprep.subr.bf16.mxu0 0
      %501 = vmatpush1.bf16.msra.mxu0 0
      %502 = vmatprep.subr.bf16.mxu0 0
      %503 = vmatpush1.bf16.msra.mxu0 0
      %504 = vmatprep.subr.bf16.mxu0 0
      %505 = vmatpush1.bf16.msra.mxu0 0
      %506 = vmatprep.subr.bf16.mxu0 0
      %507 = vmatpush1.bf16.msra.mxu0 0
      %508 = vmatprep.mubr.bf16.mxu0 0
      %509 = vmatmul.mubr.bf16.gmra.mrb[0].mxu0 %v425
      %v510 = vpop.f32.mrb[0].mxu0
      %v511 = vadd.f32 0.0, %v510
      %v512 = vpop.f32.mrb[0].mxu0
      %v513 = vpop.f32.mrb[0].mxu0
      %v514 = vadd.f32 0.0, %v513
      %v515 = vpop.f32.mrb[0].mxu0
      %516 = vmatprep.mubr.bf16.mxu0 0
      %517 = vmatmul.mubr.bf16.gmra.mrb[0].mxu0 %v428
      %v518 = vpop.f32.mrb[0].mxu0
      %v519 = vadd.f32 0.0, %v518
      %v520 = vpop.f32.mrb[0].mxu0
      %v521 = vpop.f32.mrb[0].mxu0
      %v522 = vadd.f32 0.0, %v521
      %v523 = vpop.f32.mrb[0].mxu0
      %524 = vmatprep.mubr.bf16.mxu0 0
      %525 = vmatmul.mubr.bf16.gmra.mrb[0].mxu0 %v431
      %v526 = vpop.f32.mrb[0].mxu0
      %v527 = vadd.f32 0.0, %v526
      %v528 = vpop.f32.mrb[0].mxu0
      %v529 = vpop.f32.mrb[0].mxu0
      %v530 = vadd.f32 0.0, %v529
      %v531 = vpop.f32.mrb[0].mxu0
      %532 = vmatprep.mubr.bf16.mxu0 0
      %533 = vmatmul.mubr.bf16.gmra.mrb[0].mxu0 %v434
      %v534 = vpop.f32.mrb[0].mxu0
      %v535 = vadd.f32 0.0, %v534
      %v536 = vpop.f32.mrb[0].mxu0
      %v537 = vpop.f32.mrb[0].mxu0
      %v538 = vadd.f32 0.0, %v537
      %v539 = vpop.f32.mrb[0].mxu0
      %540 = vmatprep.mubr.bf16.mxu0 0
      %541 = vmatmul.mubr.bf16.gmra.mrb[0].mxu0 %v437
      %v542 = vpop.f32.mrb[0].mxu0
      %v543 = vadd.f32 0.0, %v542
      %v544 = vpop.f32.mrb[0].mxu0
      %v545 = vpop.f32.mrb[0].mxu0
      %v546 = vadd.f32 0.0, %v545
      %v547 = vpop.f32.mrb[0].mxu0
      %548 = vmatprep.mubr.bf16.mxu0 0
      %549 = vmatmul.mubr.bf16.gmra.mrb[0].mxu0 %v440
      %v550 = vpop.f32.mrb[0].mxu0
      %v551 = vadd.f32 0.0, %v550
      %v552 = vpop.f32.mrb[0].mxu0
      %v553 = vpop.f32.mrb[0].mxu0
      %v554 = vadd.f32 0.0, %v553
      %v555 = vpop.f32.mrb[0].mxu0
      %556 = vmatprep.mubr.bf16.mxu0 0
      %557 = vmatmul.mubr.bf16.gmra.mrb[0].mxu0 %v443
      %v558 = vpop.f32.mrb[0].mxu0
      %v559 = vadd.f32 0.0, %v558
      %v560 = vpop.f32.mrb[0].mxu0
      %v561 = vpop.f32.mrb[0].mxu0
      %v562 = vadd.f32 0.0, %v561
      %v563 = vpop.f32.mrb[0].mxu0
      %564 = vmatprep.mubr.bf16.mxu0 0
      %565 = vmatmul.mubr.bf16.gmra.mrb[0].mxu0 %v446
      %v566 = vpop.f32.mrb[0].mxu0
      %v567 = vadd.f32 0.0, %v566
      %v568 = vpop.f32.mrb[0].mxu0
      %v569 = vpop.f32.mrb[0].mxu0
      %v570 = vadd.f32 0.0, %v569
      %v571 = vpop.f32.mrb[0].mxu0
      %572 = vmatprep.mubr.bf16.mxu0 0
      %573 = vmatmul.mubr.bf16.gmra.mrb[0].mxu0 %v449
      %v574 = vpop.f32.mrb[0].mxu0
      %v575 = vadd.f32 0.0, %v574
      %v576 = vpop.f32.mrb[0].mxu0
      %v577 = vpop.f32.mrb[0].mxu0
      %v578 = vadd.f32 0.0, %v577
      %v579 = vpop.f32.mrb[0].mxu0
      %580 = vmatprep.mubr.bf16.mxu0 0
      %581 = vmatmul.mubr.bf16.gmra.mrb[0].mxu0 %v452
      %v582 = vpop.f32.mrb[0].mxu0
      %v583 = vadd.f32 0.0, %v582
      %v584 = vpop.f32.mrb[0].mxu0
      %v585 = vpop.f32.mrb[0].mxu0
      %v586 = vadd.f32 0.0, %v585
      %v587 = vpop.f32.mrb[0].mxu0
      %588 = vmatprep.mubr.bf16.mxu0 0
      %589 = vmatmul.mubr.bf16.gmra.mrb[0].mxu0 %v455
      %v590 = vpop.f32.mrb[0].mxu0
      %v591 = vadd.f32 0.0, %v590
      %v592 = vpop.f32.mrb[0].mxu0
      %v593 = vpop.f32.mrb[0].mxu0
      %v594 = vadd.f32 0.0, %v593
      %v595 = vpop.f32.mrb[0].mxu0
      %596 = vmatprep.mubr.bf16.mxu0 0
      %597 = vmatmul.mubr.bf16.gmra.mrb[0].mxu0 %v458
      %v598 = vpop.f32.mrb[0].mxu0
      %v599 = vadd.f32 0.0, %v598
      %v600 = vpop.f32.mrb[0].mxu0
      %v601 = vpop.f32.mrb[0].mxu0
      %v602 = vadd.f32 0.0, %v601
      %v603 = vpop.f32.mrb[0].mxu0
      %604 = vmatprep.mubr.bf16.mxu0 0
      %605 = vmatmul.mubr.bf16.gmra.mrb[0].mxu0 %v461
      %v606 = vpop.f32.mrb[0].mxu0
      %v607 = vadd.f32 0.0, %v606
      %v608 = vpop.f32.mrb[0].mxu0
      %v609 = vpop.f32.mrb[0].mxu0
      %v610 = vadd.f32 0.0, %v609
      %v611 = vpop.f32.mrb[0].mxu0
      %612 = vmatprep.mubr.bf16.mxu0 0
      %613 = vmatmul.mubr.bf16.gmra.mrb[0].mxu0 %v464
      %v614 = vpop.f32.mrb[0].mxu0
      %v615 = vadd.f32 0.0, %v614
      %v616 = vpop.f32.mrb[0].mxu0
      %v617 = vpop.f32.mrb[0].mxu0
      %v618 = vadd.f32 0.0, %v617
      %v619 = vpop.f32.mrb[0].mxu0
      %620 = vmatprep.mubr.bf16.mxu0 0
      %621 = vmatmul.mubr.bf16.gmra.mrb[0].mxu0 %v467
      %v622 = vpop.f32.mrb[0].mxu0
      %v623 = vadd.f32 0.0, %v622
      %v624 = vpop.f32.mrb[0].mxu0
      %v625 = vpop.f32.mrb[0].mxu0
      %v626 = vadd.f32 0.0, %v625
      %v627 = vpop.f32.mrb[0].mxu0
      %628 = vmatprep.mubr.bf16.mxu0 0
      %629 = vmatmul.mubr.bf16.gmra.mrb[0].mxu0 %v470
      %v630 = vpop.f32.mrb[0].mxu0
      %v631 = vadd.f32 0.0, %v630
      %v632 = vpop.f32.mrb[0].mxu0
      %v633 = vpop.f32.mrb[0].mxu0
      %v634 = vadd.f32 0.0, %v633
      %v635 = vpop.f32.mrb[0].mxu0
      %636 = vdwg.mxu0
      %v638 = vsel %vm172, %v357, 0
      %v641 = vsel %vm172, %v358, 0
      %v644 = vsel %vm172, %v359, 0
      %v647 = vsel %vm172, %v360, 0
      %v650 = vsel %vm172, %v361, 0
      %v653 = vsel %vm172, %v362, 0
      %v656 = vsel %vm172, %v363, 0
      %v659 = vsel %vm172, %v364, 0
      %v662 = vsel %vm172, %v365, 0
      %v665 = vsel %vm172, %v366, 0
      %v668 = vsel %vm172, %v367, 0
      %v671 = vsel %vm172, %v368, 0
      %v674 = vsel %vm172, %v369, 0
      %v677 = vsel %vm172, %v370, 0
      %v680 = vsel %vm172, %v371, 0
      %v683 = vsel %vm172, %v372, 0
      %v686 = vsel %vm472, %v373, 0
      %688 = vmatprep.subr.bf16.mxu0 0
      %689 = vmatpush1.bf16.msra.mxu0 %v686
      %690 = vmatprep.subr.bf16.mxu0 0
      %691 = vmatpush1.bf16.msra.mxu0 0
      %692 = vmatprep.subr.bf16.mxu0 0
      %693 = vmatpush1.bf16.msra.mxu0 0
      %694 = vmatprep.subr.bf16.mxu0 0
      %695 = vmatpush1.bf16.msra.mxu0 0
      %696 = vmatprep.subr.bf16.mxu0 0
      %697 = vmatpush1.bf16.msra.mxu0 0
      %698 = vmatprep.subr.bf16.mxu0 0
      %699 = vmatpush1.bf16.msra.mxu0 0
      %700 = vmatprep.subr.bf16.mxu0 0
      %701 = vmatpush1.bf16.msra.mxu0 0
      %702 = vmatprep.subr.bf16.mxu0 0
      %703 = vmatpush1.bf16.msra.mxu0 0
      %704 = vmatprep.subr.bf16.mxu0 0
      %705 = vmatpush1.bf16.msra.mxu0 0
      %706 = vmatprep.subr.bf16.mxu0 0
      %707 = vmatpush1.bf16.msra.mxu0 0
      %708 = vmatprep.subr.bf16.mxu0 0
      %709 = vmatpush1.bf16.msra.mxu0 0
      %710 = vmatprep.subr.bf16.mxu0 0
      %711 = vmatpush1.bf16.msra.mxu0 0
      %712 = vmatprep.subr.bf16.mxu0 0
      %713 = vmatpush1.bf16.msra.mxu0 0
      %714 = vmatprep.subr.bf16.mxu0 0
      %715 = vmatpush1.bf16.msra.mxu0 0
      %716 = vmatprep.subr.bf16.mxu0 0
      %717 = vmatpush1.bf16.msra.mxu0 0
      %718 = vmatprep.subr.bf16.mxu0 0
      %719 = vmatpush1.bf16.msra.mxu0 0
      %720 = vmatprep.mubr.bf16.mxu0 0
      %721 = vmatmul.mubr.bf16.gmra.mrb[0].mxu0 %v638
      %v722 = vpop.f32.mrb[0].mxu0
      %v723 = vadd.f32 %v511, %v722
      %v724 = vpop.f32.mrb[0].mxu0
      %v725 = vpop.f32.mrb[0].mxu0
      %v726 = vadd.f32 %v514, %v725
      %v727 = vpop.f32.mrb[0].mxu0
      %728 = vmatprep.mubr.bf16.mxu0 0
      %729 = vmatmul.mubr.bf16.gmra.mrb[0].mxu0 %v641
      %v730 = vpop.f32.mrb[0].mxu0
      %v731 = vadd.f32 %v519, %v730
      %v732 = vpop.f32.mrb[0].mxu0
      %v733 = vpop.f32.mrb[0].mxu0
      %v734 = vadd.f32 %v522, %v733
      %v735 = vpop.f32.mrb[0].mxu0
      %736 = vmatprep.mubr.bf16.mxu0 0
      %737 = vmatmul.mubr.bf16.gmra.mrb[0].mxu0 %v644
      %v738 = vpop.f32.mrb[0].mxu0
      %v739 = vadd.f32 %v527, %v738
      %v740 = vpop.f32.mrb[0].mxu0
      %v741 = vpop.f32.mrb[0].mxu0
      %v742 = vadd.f32 %v530, %v741
      %v743 = vpop.f32.mrb[0].mxu0
      %744 = vmatprep.mubr.bf16.mxu0 0
      %745 = vmatmul.mubr.bf16.gmra.mrb[0].mxu0 %v647
      %v746 = vpop.f32.mrb[0].mxu0
      %v747 = vadd.f32 %v535, %v746
      %v748 = vpop.f32.mrb[0].mxu0
      %v749 = vpop.f32.mrb[0].mxu0
      %v750 = vadd.f32 %v538, %v749
      %v751 = vpop.f32.mrb[0].mxu0
      %752 = vmatprep.mubr.bf16.mxu0 0
      %753 = vmatmul.mubr.bf16.gmra.mrb[0].mxu0 %v650
      %v754 = vpop.f32.mrb[0].mxu0
      %v755 = vadd.f32 %v543, %v754
      %v756 = vpop.f32.mrb[0].mxu0
      %v757 = vpop.f32.mrb[0].mxu0
      %v758 = vadd.f32 %v546, %v757
      %v759 = vpop.f32.mrb[0].mxu0
      %760 = vmatprep.mubr.bf16.mxu0 0
      %761 = vmatmul.mubr.bf16.gmra.mrb[0].mxu0 %v653
      %v762 = vpop.f32.mrb[0].mxu0
      %v763 = vadd.f32 %v551, %v762
      %v764 = vpop.f32.mrb[0].mxu0
      %v765 = vpop.f32.mrb[0].mxu0
      %v766 = vadd.f32 %v554, %v765
      %v767 = vpop.f32.mrb[0].mxu0
      %768 = vmatprep.mubr.bf16.mxu0 0
      %769 = vmatmul.mubr.bf16.gmra.mrb[0].mxu0 %v656
      %v770 = vpop.f32.mrb[0].mxu0
      %v771 = vadd.f32 %v559, %v770
      %v772 = vpop.f32.mrb[0].mxu0
      %v773 = vpop.f32.mrb[0].mxu0
      %v774 = vadd.f32 %v562, %v773
      %v775 = vpop.f32.mrb[0].mxu0
      %776 = vmatprep.mubr.bf16.mxu0 0
      %777 = vmatmul.mubr.bf16.gmra.mrb[0].mxu0 %v659
      %v778 = vpop.f32.mrb[0].mxu0
      %v779 = vadd.f32 %v567, %v778
      %v780 = vpop.f32.mrb[0].mxu0
      %v781 = vpop.f32.mrb[0].mxu0
      %v782 = vadd.f32 %v570, %v781
      %v783 = vpop.f32.mrb[0].mxu0
      %784 = vmatprep.mubr.bf16.mxu0 0
      %785 = vmatmul.mubr.bf16.gmra.mrb[0].mxu0 %v662
      %v786 = vpop.f32.mrb[0].mxu0
      %v787 = vadd.f32 %v575, %v786
      %v788 = vpop.f32.mrb[0].mxu0
      %v789 = vpop.f32.mrb[0].mxu0
      %v790 = vadd.f32 %v578, %v789
      %v791 = vpop.f32.mrb[0].mxu0
      %792 = vmatprep.mubr.bf16.mxu0 0
      %793 = vmatmul.mubr.bf16.gmra.mrb[0].mxu0 %v665
      %v794 = vpop.f32.mrb[0].mxu0
      %v795 = vadd.f32 %v583, %v794
      %v796 = vpop.f32.mrb[0].mxu0
      %v797 = vpop.f32.mrb[0].mxu0
      %v798 = vadd.f32 %v586, %v797
      %v799 = vpop.f32.mrb[0].mxu0
      %800 = vmatprep.mubr.bf16.mxu0 0
      %801 = vmatmul.mubr.bf16.gmra.mrb[0].mxu0 %v668
      %v802 = vpop.f32.mrb[0].mxu0
      %v803 = vadd.f32 %v591, %v802
      %v804 = vpop.f32.mrb[0].mxu0
      %v805 = vpop.f32.mrb[0].mxu0
      %v806 = vadd.f32 %v594, %v805
      %v807 = vpop.f32.mrb[0].mxu0
      %808 = vmatprep.mubr.bf16.mxu0 0
      %809 = vmatmul.mubr.bf16.gmra.mrb[0].mxu0 %v671
      %v810 = vpop.f32.mrb[0].mxu0
      %v811 = vadd.f32 %v599, %v810
      %v812 = vpop.f32.mrb[0].mxu0
      %v813 = vpop.f32.mrb[0].mxu0
      %v814 = vadd.f32 %v602, %v813
      %v815 = vpop.f32.mrb[0].mxu0
      %816 = vmatprep.mubr.bf16.mxu0 0
      %817 = vmatmul.mubr.bf16.gmra.mrb[0].mxu0 %v674
      %v818 = vpop.f32.mrb[0].mxu0
      %v819 = vadd.f32 %v607, %v818
      %v820 = vpop.f32.mrb[0].mxu0
      %v821 = vpop.f32.mrb[0].mxu0
      %v822 = vadd.f32 %v610, %v821
      %v823 = vpop.f32.mrb[0].mxu0
      %824 = vmatprep.mubr.bf16.mxu0 0
      %825 = vmatmul.mubr.bf16.gmra.mrb[0].mxu0 %v677
      %v826 = vpop.f32.mrb[0].mxu0
      %v827 = vadd.f32 %v615, %v826
      %v828 = vpop.f32.mrb[0].mxu0
      %v829 = vpop.f32.mrb[0].mxu0
      %v830 = vadd.f32 %v618, %v829
      %v831 = vpop.f32.mrb[0].mxu0
      %832 = vmatprep.mubr.bf16.mxu0 0
      %833 = vmatmul.mubr.bf16.gmra.mrb[0].mxu0 %v680
      %v834 = vpop.f32.mrb[0].mxu0
      %v835 = vadd.f32 %v623, %v834
      %v836 = vpop.f32.mrb[0].mxu0
      %v837 = vpop.f32.mrb[0].mxu0
      %v838 = vadd.f32 %v626, %v837
      %v839 = vpop.f32.mrb[0].mxu0
      %840 = vmatprep.mubr.bf16.mxu0 0
      %841 = vmatmul.mubr.bf16.gmra.mrb[0].mxu0 %v683
      %v842 = vpop.f32.mrb[0].mxu0
      %v843 = vadd.f32 %v631, %v842
      %v844 = vpop.f32.mrb[0].mxu0
      %v845 = vpop.f32.mrb[0].mxu0
      %v846 = vadd.f32 %v634, %v845
      %v847 = vpop.f32.mrb[0].mxu0
      %848 = vdwg.mxu0
      %v849 = vld [vmem:[#allocation2 + $0x2] sm:$0xff]
      %v850 = vld [vmem:[#allocation2 + $0xa] sm:$0xff]
      %v851 = vld [vmem:[#allocation2 + $0x1a] sm:$0xff]
      %v852 = vld [vmem:[#allocation2 + $0x22] sm:$0xff]
      %v853 = vld [vmem:[#allocation2 + $0x32] sm:$0xff]
      %v854 = vld [vmem:[#allocation2 + $0x3a] sm:$0xff]
      %v855 = vld [vmem:[#allocation2 + $0x4a] sm:$0xff]
      %v856 = vld [vmem:[#allocation2 + $0x52] sm:$0xff]
      %v857 = vld [vmem:[#allocation2 + $0x62] sm:$0xff]
      %v858 = vld [vmem:[#allocation2 + $0x6a] sm:$0xff]
      %v859 = vld [vmem:[#allocation2 + $0x7a] sm:$0xff]
      %v860 = vld [vmem:[#allocation2 + $0x82] sm:$0xff]
      %v861 = vld [vmem:[#allocation2 + $0x92] sm:$0xff]
      %v862 = vld [vmem:[#allocation2 + $0x9a] sm:$0xff]
      %v863 = vld [vmem:[#allocation2 + $0xaa] sm:$0xff]
      %v864 = vld [vmem:[#allocation2 + $0xb2] sm:$0xff]
      %v865 = vld [vmem:[#allocation2 + $0xc2] sm:$0xff]
      %v866 = vld [vmem:[#allocation2 + $0xca] sm:$0xff]
      %v867 = vld [vmem:[#allocation2 + $0xda] sm:$0xff]
      %v868 = vld [vmem:[#allocation2 + $0xe2] sm:$0xff]
      %v869 = vld [vmem:[#allocation2 + $0xf2] sm:$0xff]
      %v870 = vld [vmem:[#allocation2 + $0xfa] sm:$0xff]
      %v871 = vld [vmem:[#allocation2 + $0x10a] sm:$0xff]
      %v872 = vld [vmem:[#allocation2 + $0x112] sm:$0xff]
      %v873 = vld [vmem:[#allocation2 + $0x122] sm:$0xff]
      %v874 = vld [vmem:[#allocation2 + $0x12a] sm:$0xff]
      %v875 = vld [vmem:[#allocation2 + $0x13a] sm:$0xff]
      %v876 = vld [vmem:[#allocation2 + $0x142] sm:$0xff]
      %v877 = vld [vmem:[#allocation2 + $0x152] sm:$0xff]
      %v878 = vld [vmem:[#allocation2 + $0x15a] sm:$0xff]
      %v879 = vld [vmem:[#allocation2 + $0x16a] sm:$0xff]
      %v880 = vld [vmem:[#allocation2 + $0x172] sm:$0xff]
      %v881 = vpack.c.bf16 %v850, %v849
      %v882 = vpack.c.bf16 %v852, %v851
      %v883 = vpack.c.bf16 %v854, %v853
      %v884 = vpack.c.bf16 %v856, %v855
      %v885 = vpack.c.bf16 %v858, %v857
      %v886 = vpack.c.bf16 %v860, %v859
      %v887 = vpack.c.bf16 %v862, %v861
      %v888 = vpack.c.bf16 %v864, %v863
      %v889 = vpack.c.bf16 %v866, %v865
      %v890 = vpack.c.bf16 %v868, %v867
      %v891 = vpack.c.bf16 %v870, %v869
      %v892 = vpack.c.bf16 %v872, %v871
      %v893 = vpack.c.bf16 %v874, %v873
      %v894 = vpack.c.bf16 %v876, %v875
      %v895 = vpack.c.bf16 %v878, %v877
      %v896 = vpack.c.bf16 %v880, %v879
      %s897 = scalar_lea.vmem %s1, 4
      %v898 = vld [vmem:[%s897] sm:$0x3]
      %v900 = vsel %vm172, %v881, 0
      %v903 = vsel %vm172, %v882, 0
      %v906 = vsel %vm172, %v883, 0
      %v909 = vsel %vm172, %v884, 0
      %v912 = vsel %vm172, %v885, 0
      %v915 = vsel %vm172, %v886, 0
      %v918 = vsel %vm172, %v887, 0
      %v921 = vsel %vm172, %v888, 0
      %v924 = vsel %vm172, %v889, 0
      %v927 = vsel %vm172, %v890, 0
      %v930 = vsel %vm172, %v891, 0
      %v933 = vsel %vm172, %v892, 0
      %v936 = vsel %vm172, %v893, 0
      %v939 = vsel %vm172, %v894, 0
      %v942 = vsel %vm172, %v895, 0
      %v945 = vsel %vm172, %v896, 0
      %v948 = vsel %vm472, %v898, 0
      %950 = vmatprep.subr.bf16.mxu0 0
      %951 = vmatpush1.bf16.msra.mxu0 %v948
      %952 = vmatprep.subr.bf16.mxu0 0
      %953 = vmatpush1.bf16.msra.mxu0 0
      %954 = vmatprep.subr.bf16.mxu0 0
      %955 = vmatpush1.bf16.msra.mxu0 0
      %956 = vmatprep.subr.bf16.mxu0 0
      %957 = vmatpush1.bf16.msra.mxu0 0
      %958 = vmatprep.subr.bf16.mxu0 0
      %959 = vmatpush1.bf16.msra.mxu0 0
      %960 = vmatprep.subr.bf16.mxu0 0
      %961 = vmatpush1.bf16.msra.mxu0 0
      %962 = vmatprep.subr.bf16.mxu0 0
      %963 = vmatpush1.bf16.msra.mxu0 0
      %964 = vmatprep.subr.bf16.mxu0 0
      %965 = vmatpush1.bf16.msra.mxu0 0
      %966 = vmatprep.subr.bf16.mxu0 0
      %967 = vmatpush1.bf16.msra.mxu0 0
      %968 = vmatprep.subr.bf16.mxu0 0
      %969 = vmatpush1.bf16.msra.mxu0 0
      %970 = vmatprep.subr.bf16.mxu0 0
      %971 = vmatpush1.bf16.msra.mxu0 0
      %972 = vmatprep.subr.bf16.mxu0 0
      %973 = vmatpush1.bf16.msra.mxu0 0
      %974 = vmatprep.subr.bf16.mxu0 0
      %975 = vmatpush1.bf16.msra.mxu0 0
      %976 = vmatprep.subr.bf16.mxu0 0
      %977 = vmatpush1.bf16.msra.mxu0 0
      %978 = vmatprep.subr.bf16.mxu0 0
      %979 = vmatpush1.bf16.msra.mxu0 0
      %980 = vmatprep.subr.bf16.mxu0 0
      %981 = vmatpush1.bf16.msra.mxu0 0
      %982 = vmatprep.mubr.bf16.mxu0 0
      %983 = vmatmul.mubr.bf16.gmra.mrb[0].mxu0 %v900
      %v984 = vpop.f32.mrb[0].mxu0
      %v985 = vadd.f32 0.0, %v984
      %v986 = vpop.f32.mrb[0].mxu0
      %v987 = vpop.f32.mrb[0].mxu0
      %v988 = vadd.f32 0.0, %v987
      %v989 = vpop.f32.mrb[0].mxu0
      %990 = vmatprep.mubr.bf16.mxu0 0
      %991 = vmatmul.mubr.bf16.gmra.mrb[0].mxu0 %v903
      %v992 = vpop.f32.mrb[0].mxu0
      %v993 = vadd.f32 0.0, %v992
      %v994 = vpop.f32.mrb[0].mxu0
      %v995 = vpop.f32.mrb[0].mxu0
      %v996 = vadd.f32 0.0, %v995
      %v997 = vpop.f32.mrb[0].mxu0
      %998 = vmatprep.mubr.bf16.mxu0 0
      %999 = vmatmul.mubr.bf16.gmra.mrb[0].mxu0 %v906
      %v1000 = vpop.f32.mrb[0].mxu0
      %v1001 = vadd.f32 0.0, %v1000
      %v1002 = vpop.f32.mrb[0].mxu0
      %v1003 = vpop.f32.mrb[0].mxu0
      %v1004 = vadd.f32 0.0, %v1003
      %v1005 = vpop.f32.mrb[0].mxu0
      %1006 = vmatprep.mubr.bf16.mxu0 0
      %1007 = vmatmul.mubr.bf16.gmra.mrb[0].mxu0 %v909
      %v1008 = vpop.f32.mrb[0].mxu0
      %v1009 = vadd.f32 0.0, %v1008
      %v1010 = vpop.f32.mrb[0].mxu0
      %v1011 = vpop.f32.mrb[0].mxu0
      %v1012 = vadd.f32 0.0, %v1011
      %v1013 = vpop.f32.mrb[0].mxu0
      %1014 = vmatprep.mubr.bf16.mxu0 0
      %1015 = vmatmul.mubr.bf16.gmra.mrb[0].mxu0 %v912
      %v1016 = vpop.f32.mrb[0].mxu0
      %v1017 = vadd.f32 0.0, %v1016
      %v1018 = vpop.f32.mrb[0].mxu0
      %v1019 = vpop.f32.mrb[0].mxu0
      %v1020 = vadd.f32 0.0, %v1019
      %v1021 = vpop.f32.mrb[0].mxu0
      %1022 = vmatprep.mubr.bf16.mxu0 0
      %1023 = vmatmul.mubr.bf16.gmra.mrb[0].mxu0 %v915
      %v1024 = vpop.f32.mrb[0].mxu0
      %v1025 = vadd.f32 0.0, %v1024
      %v1026 = vpop.f32.mrb[0].mxu0
      %v1027 = vpop.f32.mrb[0].mxu0
      %v1028 = vadd.f32 0.0, %v1027
      %v1029 = vpop.f32.mrb[0].mxu0
      %1030 = vmatprep.mubr.bf16.mxu0 0
      %1031 = vmatmul.mubr.bf16.gmra.mrb[0].mxu0 %v918
      %v1032 = vpop.f32.mrb[0].mxu0
      %v1033 = vadd.f32 0.0, %v1032
      %v1034 = vpop.f32.mrb[0].mxu0
      %v1035 = vpop.f32.mrb[0].mxu0
      %v1036 = vadd.f32 0.0, %v1035
      %v1037 = vpop.f32.mrb[0].mxu0
      %1038 = vmatprep.mubr.bf16.mxu0 0
      %1039 = vmatmul.mubr.bf16.gmra.mrb[0].mxu0 %v921
      %v1040 = vpop.f32.mrb[0].mxu0
      %v1041 = vadd.f32 0.0, %v1040
      %v1042 = vpop.f32.mrb[0].mxu0
      %v1043 = vpop.f32.mrb[0].mxu0
      %v1044 = vadd.f32 0.0, %v1043
      %v1045 = vpop.f32.mrb[0].mxu0
      %1046 = vmatprep.mubr.bf16.mxu0 0
      %1047 = vmatmul.mubr.bf16.gmra.mrb[0].mxu0 %v924
      %v1048 = vpop.f32.mrb[0].mxu0
      %v1049 = vadd.f32 0.0, %v1048
      %v1050 = vpop.f32.mrb[0].mxu0
      %v1051 = vpop.f32.mrb[0].mxu0
      %v1052 = vadd.f32 0.0, %v1051
      %v1053 = vpop.f32.mrb[0].mxu0
      %1054 = vmatprep.mubr.bf16.mxu0 0
      %1055 = vmatmul.mubr.bf16.gmra.mrb[0].mxu0 %v927
      %v1056 = vpop.f32.mrb[0].mxu0
      %v1057 = vadd.f32 0.0, %v1056
      %v1058 = vpop.f32.mrb[0].mxu0
      %v1059 = vpop.f32.mrb[0].mxu0
      %v1060 = vadd.f32 0.0, %v1059
      %v1061 = vpop.f32.mrb[0].mxu0
      %1062 = vmatprep.mubr.bf16.mxu0 0
      %1063 = vmatmul.mubr.bf16.gmra.mrb[0].mxu0 %v930
      %v1064 = vpop.f32.mrb[0].mxu0
      %v1065 = vadd.f32 0.0, %v1064
      %v1066 = vpop.f32.mrb[0].mxu0
      %v1067 = vpop.f32.mrb[0].mxu0
      %v1068 = vadd.f32 0.0, %v1067
      %v1069 = vpop.f32.mrb[0].mxu0
      %1070 = vmatprep.mubr.bf16.mxu0 0
      %1071 = vmatmul.mubr.bf16.gmra.mrb[0].mxu0 %v933
      %v1072 = vpop.f32.mrb[0].mxu0
      %v1073 = vadd.f32 0.0, %v1072
      %v1074 = vpop.f32.mrb[0].mxu0
      %v1075 = vpop.f32.mrb[0].mxu0
      %v1076 = vadd.f32 0.0, %v1075
      %v1077 = vpop.f32.mrb[0].mxu0
      %1078 = vmatprep.mubr.bf16.mxu0 0
      %1079 = vmatmul.mubr.bf16.gmra.mrb[0].mxu0 %v936
      %v1080 = vpop.f32.mrb[0].mxu0
      %v1081 = vadd.f32 0.0, %v1080
      %v1082 = vpop.f32.mrb[0].mxu0
      %v1083 = vpop.f32.mrb[0].mxu0
      %v1084 = vadd.f32 0.0, %v1083
      %v1085 = vpop.f32.mrb[0].mxu0
      %1086 = vmatprep.mubr.bf16.mxu0 0
      %1087 = vmatmul.mubr.bf16.gmra.mrb[0].mxu0 %v939
      %v1088 = vpop.f32.mrb[0].mxu0
      %v1089 = vadd.f32 0.0, %v1088
      %v1090 = vpop.f32.mrb[0].mxu0
      %v1091 = vpop.f32.mrb[0].mxu0
      %v1092 = vadd.f32 0.0, %v1091
      %v1093 = vpop.f32.mrb[0].mxu0
      %1094 = vmatprep.mubr.bf16.mxu0 0
      %1095 = vmatmul.mubr.bf16.gmra.mrb[0].mxu0 %v942
      %v1096 = vpop.f32.mrb[0].mxu0
      %v1097 = vadd.f32 0.0, %v1096
      %v1098 = vpop.f32.mrb[0].mxu0
      %v1099 = vpop.f32.mrb[0].mxu0
      %v1100 = vadd.f32 0.0, %v1099
      %v1101 = vpop.f32.mrb[0].mxu0
      %1102 = vmatprep.mubr.bf16.mxu0 0
      %1103 = vmatmul.mubr.bf16.gmra.mrb[0].mxu0 %v945
      %v1104 = vpop.f32.mrb[0].mxu0
      %v1105 = vadd.f32 0.0, %v1104
      %v1106 = vpop.f32.mrb[0].mxu0
      %v1107 = vpop.f32.mrb[0].mxu0
      %v1108 = vadd.f32 0.0, %v1107
      %v1109 = vpop.f32.mrb[0].mxu0
      %1110 = vdwg.mxu0
      %v1111 = vadd.f32 %v723, %v985
      %v1112 = vadd.f32 %v726, %v988
      %v1113 = vadd.f32 %v731, %v993
      %v1114 = vadd.f32 %v734, %v996
      %v1115 = vadd.f32 %v739, %v1001
      %v1116 = vadd.f32 %v742, %v1004
      %v1117 = vadd.f32 %v747, %v1009
      %v1118 = vadd.f32 %v750, %v1012
      %v1119 = vadd.f32 %v755, %v1017
      %v1120 = vadd.f32 %v758, %v1020
      %v1121 = vadd.f32 %v763, %v1025
      %v1122 = vadd.f32 %v766, %v1028
      %v1123 = vadd.f32 %v771, %v1033
      %v1124 = vadd.f32 %v774, %v1036
      %v1125 = vadd.f32 %v779, %v1041
      %v1126 = vadd.f32 %v782, %v1044
      %v1127 = vadd.f32 %v787, %v1049
      %v1128 = vadd.f32 %v790, %v1052
      %v1129 = vadd.f32 %v795, %v1057
      %v1130 = vadd.f32 %v798, %v1060
      %v1131 = vadd.f32 %v803, %v1065
      %v1132 = vadd.f32 %v806, %v1068
      %v1133 = vadd.f32 %v811, %v1073
      %v1134 = vadd.f32 %v814, %v1076
      %v1135 = vadd.f32 %v819, %v1081
      %v1136 = vadd.f32 %v822, %v1084
      %v1137 = vadd.f32 %v827, %v1089
      %v1138 = vadd.f32 %v830, %v1092
      %v1139 = vadd.f32 %v835, %v1097
      %v1140 = vadd.f32 %v838, %v1100
      %v1141 = vadd.f32 %v843, %v1105
      %v1142 = vadd.f32 %v846, %v1108
      %v1143 = vld [vmem:[%s292] sm:$0xff]
      %v1144 = vld [vmem:[%s292 + $0x8] sm:$0xff]
      %v1145 = vld [vmem:[%s292 + $0x18] sm:$0xff]
      %v1146 = vld [vmem:[%s292 + $0x20] sm:$0xff]
      %v1147 = vld [vmem:[%s292 + $0x30] sm:$0xff]
      %v1148 = vld [vmem:[%s292 + $0x38] sm:$0xff]
      %v1149 = vld [vmem:[%s292 + $0x48] sm:$0xff]
      %v1150 = vld [vmem:[%s292 + $0x50] sm:$0xff]
      %v1151 = vld [vmem:[%s292 + $0x60] sm:$0xff]
      %v1152 = vld [vmem:[%s292 + $0x68] sm:$0xff]
      %v1153 = vld [vmem:[%s292 + $0x78] sm:$0xff]
      %v1154 = vld [vmem:[%s292 + $0x80] sm:$0xff]
      %v1155 = vld [vmem:[%s292 + $0x90] sm:$0xff]
      %v1156 = vld [vmem:[%s292 + $0x98] sm:$0xff]
      %v1157 = vld [vmem:[%s292 + $0xa8] sm:$0xff]
      %v1158 = vld [vmem:[%s292 + $0xb0] sm:$0xff]
      %v1159 = vld [vmem:[%s292 + $0xc0] sm:$0xff]
      %v1160 = vld [vmem:[%s292 + $0xc8] sm:$0xff]
      %v1161 = vld [vmem:[%s292 + $0xd8] sm:$0xff]
      %v1162 = vld [vmem:[%s292 + $0xe0] sm:$0xff]
      %v1163 = vld [vmem:[%s292 + $0xf0] sm:$0xff]
      %v1164 = vld [vmem:[%s292 + $0xf8] sm:$0xff]
      %v1165 = vld [vmem:[%s292 + $0x108] sm:$0xff]
      %v1166 = vld [vmem:[%s292 + $0x110] sm:$0xff]
      %v1167 = vld [vmem:[%s292 + $0x120] sm:$0xff]
      %v1168 = vld [vmem:[%s292 + $0x128] sm:$0xff]
      %v1169 = vld [vmem:[%s292 + $0x138] sm:$0xff]
      %v1170 = vld [vmem:[%s292 + $0x140] sm:$0xff]
      %v1171 = vld [vmem:[%s292 + $0x150] sm:$0xff]
      %v1172 = vld [vmem:[%s292 + $0x158] sm:$0xff]
      %v1173 = vld [vmem:[%s292 + $0x168] sm:$0xff]
      %v1174 = vld [vmem:[%s292 + $0x170] sm:$0xff]
      %v1175 = vpack.c.bf16 %v1144, %v1143
      %v1176 = vpack.c.bf16 %v1146, %v1145
      %v1177 = vpack.c.bf16 %v1148, %v1147
      %v1178 = vpack.c.bf16 %v1150, %v1149
      %v1179 = vpack.c.bf16 %v1152, %v1151
      %v1180 = vpack.c.bf16 %v1154, %v1153
      %v1181 = vpack.c.bf16 %v1156, %v1155
      %v1182 = vpack.c.bf16 %v1158, %v1157
      %v1183 = vpack.c.bf16 %v1160, %v1159
      %v1184 = vpack.c.bf16 %v1162, %v1161
      %v1185 = vpack.c.bf16 %v1164, %v1163
      %v1186 = vpack.c.bf16 %v1166, %v1165
      %v1187 = vpack.c.bf16 %v1168, %v1167
      %v1188 = vpack.c.bf16 %v1170, %v1169
      %v1189 = vpack.c.bf16 %v1172, %v1171
      %v1190 = vpack.c.bf16 %v1174, %v1173
      %s1191 = scalar_lea.vmem %s1, 6
      %v1192 = vld [vmem:[%s1191] sm:$0x3]
      %v1194 = vsel %vm172, %v1175, 0
      %v1197 = vsel %vm172, %v1176, 0
      %v1200 = vsel %vm172, %v1177, 0
      %v1203 = vsel %vm172, %v1178, 0
      %v1206 = vsel %vm172, %v1179, 0
      %v1209 = vsel %vm172, %v1180, 0
      %v1212 = vsel %vm172, %v1181, 0
      %v1215 = vsel %vm172, %v1182, 0
      %v1218 = vsel %vm172, %v1183, 0
      %v1221 = vsel %vm172, %v1184, 0
      %v1224 = vsel %vm172, %v1185, 0
      %v1227 = vsel %vm172, %v1186, 0
      %v1230 = vsel %vm172, %v1187, 0
      %v1233 = vsel %vm172, %v1188, 0
      %v1236 = vsel %vm172, %v1189, 0
      %v1239 = vsel %vm172, %v1190, 0
      %v1242 = vsel %vm472, %v1192, 0
      %1244 = vmatprep.subr.bf16.mxu0 0
      %1245 = vmatpush1.bf16.msra.mxu0 %v1242
      %1246 = vmatprep.subr.bf16.mxu0 0
      %1247 = vmatpush1.bf16.msra.mxu0 0
      %1248 = vmatprep.subr.bf16.mxu0 0
      %1249 = vmatpush1.bf16.msra.mxu0 0
      %1250 = vmatprep.subr.bf16.mxu0 0
      %1251 = vmatpush1.bf16.msra.mxu0 0
      %1252 = vmatprep.subr.bf16.mxu0 0
      %1253 = vmatpush1.bf16.msra.mxu0 0
      %1254 = vmatprep.subr.bf16.mxu0 0
      %1255 = vmatpush1.bf16.msra.mxu0 0
      %1256 = vmatprep.subr.bf16.mxu0 0
      %1257 = vmatpush1.bf16.msra.mxu0 0
      %1258 = vmatprep.subr.bf16.mxu0 0
      %1259 = vmatpush1.bf16.msra.mxu0 0
      %1260 = vmatprep.subr.bf16.mxu0 0
      %1261 = vmatpush1.bf16.msra.mxu0 0
      %1262 = vmatprep.subr.bf16.mxu0 0
      %1263 = vmatpush1.bf16.msra.mxu0 0
      %1264 = vmatprep.subr.bf16.mxu0 0
      %1265 = vmatpush1.bf16.msra.mxu0 0
      %1266 = vmatprep.subr.bf16.mxu0 0
      %1267 = vmatpush1.bf16.msra.mxu0 0
      %1268 = vmatprep.subr.bf16.mxu0 0
      %1269 = vmatpush1.bf16.msra.mxu0 0
      %1270 = vmatprep.subr.bf16.mxu0 0
      %1271 = vmatpush1.bf16.msra.mxu0 0
      %1272 = vmatprep.subr.bf16.mxu0 0
      %1273 = vmatpush1.bf16.msra.mxu0 0
      %1274 = vmatprep.subr.bf16.mxu0 0
      %1275 = vmatpush1.bf16.msra.mxu0 0
      %1276 = vmatprep.mubr.bf16.mxu0 0
      %1277 = vmatmul.mubr.bf16.gmra.mrb[0].mxu0 %v1194
      %v1278 = vpop.f32.mrb[0].mxu0
      %v1279 = vadd.f32 0.0, %v1278
      %v1280 = vpop.f32.mrb[0].mxu0
      %v1281 = vpop.f32.mrb[0].mxu0
      %v1282 = vadd.f32 0.0, %v1281
      %v1283 = vpop.f32.mrb[0].mxu0
      %1284 = vmatprep.mubr.bf16.mxu0 0
      %1285 = vmatmul.mubr.bf16.gmra.mrb[0].mxu0 %v1197
      %v1286 = vpop.f32.mrb[0].mxu0
      %v1287 = vadd.f32 0.0, %v1286
      %v1288 = vpop.f32.mrb[0].mxu0
      %v1289 = vpop.f32.mrb[0].mxu0
      %v1290 = vadd.f32 0.0, %v1289
      %v1291 = vpop.f32.mrb[0].mxu0
      %1292 = vmatprep.mubr.bf16.mxu0 0
      %1293 = vmatmul.mubr.bf16.gmra.mrb[0].mxu0 %v1200
      %v1294 = vpop.f32.mrb[0].mxu0
      %v1295 = vadd.f32 0.0, %v1294
      %v1296 = vpop.f32.mrb[0].mxu0
      %v1297 = vpop.f32.mrb[0].mxu0
      %v1298 = vadd.f32 0.0, %v1297
      %v1299 = vpop.f32.mrb[0].mxu0
      %1300 = vmatprep.mubr.bf16.mxu0 0
      %1301 = vmatmul.mubr.bf16.gmra.mrb[0].mxu0 %v1203
      %v1302 = vpop.f32.mrb[0].mxu0
      %v1303 = vadd.f32 0.0, %v1302
      %v1304 = vpop.f32.mrb[0].mxu0
      %v1305 = vpop.f32.mrb[0].mxu0
      %v1306 = vadd.f32 0.0, %v1305
      %v1307 = vpop.f32.mrb[0].mxu0
      %1308 = vmatprep.mubr.bf16.mxu0 0
      %1309 = vmatmul.mubr.bf16.gmra.mrb[0].mxu0 %v1206
      %v1310 = vpop.f32.mrb[0].mxu0
      %v1311 = vadd.f32 0.0, %v1310
      %v1312 = vpop.f32.mrb[0].mxu0
      %v1313 = vpop.f32.mrb[0].mxu0
      %v1314 = vadd.f32 0.0, %v1313
      %v1315 = vpop.f32.mrb[0].mxu0
      %1316 = vmatprep.mubr.bf16.mxu0 0
      %1317 = vmatmul.mubr.bf16.gmra.mrb[0].mxu0 %v1209
      %v1318 = vpop.f32.mrb[0].mxu0
      %v1319 = vadd.f32 0.0, %v1318
      %v1320 = vpop.f32.mrb[0].mxu0
      %v1321 = vpop.f32.mrb[0].mxu0
      %v1322 = vadd.f32 0.0, %v1321
      %v1323 = vpop.f32.mrb[0].mxu0
      %1324 = vmatprep.mubr.bf16.mxu0 0
      %1325 = vmatmul.mubr.bf16.gmra.mrb[0].mxu0 %v1212
      %v1326 = vpop.f32.mrb[0].mxu0
      %v1327 = vadd.f32 0.0, %v1326
      %v1328 = vpop.f32.mrb[0].mxu0
      %v1329 = vpop.f32.mrb[0].mxu0
      %v1330 = vadd.f32 0.0, %v1329
      %v1331 = vpop.f32.mrb[0].mxu0
      %1332 = vmatprep.mubr.bf16.mxu0 0
      %1333 = vmatmul.mubr.bf16.gmra.mrb[0].mxu0 %v1215
      %v1334 = vpop.f32.mrb[0].mxu0
      %v1335 = vadd.f32 0.0, %v1334
      %v1336 = vpop.f32.mrb[0].mxu0
      %v1337 = vpop.f32.mrb[0].mxu0
      %v1338 = vadd.f32 0.0, %v1337
      %v1339 = vpop.f32.mrb[0].mxu0
      %1340 = vmatprep.mubr.bf16.mxu0 0
      %1341 = vmatmul.mubr.bf16.gmra.mrb[0].mxu0 %v1218
      %v1342 = vpop.f32.mrb[0].mxu0
      %v1343 = vadd.f32 0.0, %v1342
      %v1344 = vpop.f32.mrb[0].mxu0
      %v1345 = vpop.f32.mrb[0].mxu0
      %v1346 = vadd.f32 0.0, %v1345
      %v1347 = vpop.f32.mrb[0].mxu0
      %1348 = vmatprep.mubr.bf16.mxu0 0
      %1349 = vmatmul.mubr.bf16.gmra.mrb[0].mxu0 %v1221
      %v1350 = vpop.f32.mrb[0].mxu0
      %v1351 = vadd.f32 0.0, %v1350
      %v1352 = vpop.f32.mrb[0].mxu0
      %v1353 = vpop.f32.mrb[0].mxu0
      %v1354 = vadd.f32 0.0, %v1353
      %v1355 = vpop.f32.mrb[0].mxu0
      %1356 = vmatprep.mubr.bf16.mxu0 0
      %1357 = vmatmul.mubr.bf16.gmra.mrb[0].mxu0 %v1224
      %v1358 = vpop.f32.mrb[0].mxu0
      %v1359 = vadd.f32 0.0, %v1358
      %v1360 = vpop.f32.mrb[0].mxu0
      %v1361 = vpop.f32.mrb[0].mxu0
      %v1362 = vadd.f32 0.0, %v1361
      %v1363 = vpop.f32.mrb[0].mxu0
      %1364 = vmatprep.mubr.bf16.mxu0 0
      %1365 = vmatmul.mubr.bf16.gmra.mrb[0].mxu0 %v1227
      %v1366 = vpop.f32.mrb[0].mxu0
      %v1367 = vadd.f32 0.0, %v1366
      %v1368 = vpop.f32.mrb[0].mxu0
      %v1369 = vpop.f32.mrb[0].mxu0
      %v1370 = vadd.f32 0.0, %v1369
      %v1371 = vpop.f32.mrb[0].mxu0
      %1372 = vmatprep.mubr.bf16.mxu0 0
      %1373 = vmatmul.mubr.bf16.gmra.mrb[0].mxu0 %v1230
      %v1374 = vpop.f32.mrb[0].mxu0
      %v1375 = vadd.f32 0.0, %v1374
      %v1376 = vpop.f32.mrb[0].mxu0
      %v1377 = vpop.f32.mrb[0].mxu0
      %v1378 = vadd.f32 0.0, %v1377
      %v1379 = vpop.f32.mrb[0].mxu0
      %1380 = vmatprep.mubr.bf16.mxu0 0
      %1381 = vmatmul.mubr.bf16.gmra.mrb[0].mxu0 %v1233
      %v1382 = vpop.f32.mrb[0].mxu0
      %v1383 = vadd.f32 0.0, %v1382
      %v1384 = vpop.f32.mrb[0].mxu0
      %v1385 = vpop.f32.mrb[0].mxu0
      %v1386 = vadd.f32 0.0, %v1385
      %v1387 = vpop.f32.mrb[0].mxu0
      %1388 = vmatprep.mubr.bf16.mxu0 0
      %1389 = vmatmul.mubr.bf16.gmra.mrb[0].mxu0 %v1236
      %v1390 = vpop.f32.mrb[0].mxu0
      %v1391 = vadd.f32 0.0, %v1390
      %v1392 = vpop.f32.mrb[0].mxu0
      %v1393 = vpop.f32.mrb[0].mxu0
      %v1394 = vadd.f32 0.0, %v1393
      %v1395 = vpop.f32.mrb[0].mxu0
      %1396 = vmatprep.mubr.bf16.mxu0 0
      %1397 = vmatmul.mubr.bf16.gmra.mrb[0].mxu0 %v1239
      %v1398 = vpop.f32.mrb[0].mxu0
      %v1399 = vadd.f32 0.0, %v1398
      %v1400 = vpop.f32.mrb[0].mxu0
      %v1401 = vpop.f32.mrb[0].mxu0
      %v1402 = vadd.f32 0.0, %v1401
      %v1403 = vpop.f32.mrb[0].mxu0
      %1404 = vdwg.mxu0
      %v1405 = vadd.f32 %v1111, %v1279
      %v1406 = vadd.f32 %v1112, %v1282
      %v1407 = vadd.f32 %v1113, %v1287
      %v1408 = vadd.f32 %v1114, %v1290
      %v1409 = vadd.f32 %v1115, %v1295
      %v1410 = vadd.f32 %v1116, %v1298
      %v1411 = vadd.f32 %v1117, %v1303
      %v1412 = vadd.f32 %v1118, %v1306
      %v1413 = vadd.f32 %v1119, %v1311
      %v1414 = vadd.f32 %v1120, %v1314
      %v1415 = vadd.f32 %v1121, %v1319
      %v1416 = vadd.f32 %v1122, %v1322
      %v1417 = vadd.f32 %v1123, %v1327
      %v1418 = vadd.f32 %v1124, %v1330
      %v1419 = vadd.f32 %v1125, %v1335
      %v1420 = vadd.f32 %v1126, %v1338
      %v1421 = vadd.f32 %v1127, %v1343
      %v1422 = vadd.f32 %v1128, %v1346
      %v1423 = vadd.f32 %v1129, %v1351
      %v1424 = vadd.f32 %v1130, %v1354
      %v1425 = vadd.f32 %v1131, %v1359
      %v1426 = vadd.f32 %v1132, %v1362
      %v1427 = vadd.f32 %v1133, %v1367
      %v1428 = vadd.f32 %v1134, %v1370
      %v1429 = vadd.f32 %v1135, %v1375
      %v1430 = vadd.f32 %v1136, %v1378
      %v1431 = vadd.f32 %v1137, %v1383
      %v1432 = vadd.f32 %v1138, %v1386
      %v1433 = vadd.f32 %v1139, %v1391
      %v1434 = vadd.f32 %v1140, %v1394
      %v1435 = vadd.f32 %v1141, %v1399
      %v1436 = vadd.f32 %v1142, %v1402
      %v1437 = vld [vmem:[%s292 + $0x1] sm:$0xff]
      %v1438 = vld [vmem:[%s292 + $0x9] sm:$0xff]
      %v1439 = vld [vmem:[%s292 + $0x19] sm:$0xff]
      %v1440 = vld [vmem:[%s292 + $0x21] sm:$0xff]
      %v1441 = vld [vmem:[%s292 + $0x31] sm:$0xff]
      %v1442 = vld [vmem:[%s292 + $0x39] sm:$0xff]
      %v1443 = vld [vmem:[%s292 + $0x49] sm:$0xff]
      %v1444 = vld [vmem:[%s292 + $0x51] sm:$0xff]
      %v1445 = vld [vmem:[%s292 + $0x61] sm:$0xff]
      %v1446 = vld [vmem:[%s292 + $0x69] sm:$0xff]
      %v1447 = vld [vmem:[%s292 + $0x79] sm:$0xff]
      %v1448 = vld [vmem:[%s292 + $0x81] sm:$0xff]
      %v1449 = vld [vmem:[%s292 + $0x91] sm:$0xff]
      %v1450 = vld [vmem:[%s292 + $0x99] sm:$0xff]
      %v1451 = vld [vmem:[%s292 + $0xa9] sm:$0xff]
      %v1452 = vld [vmem:[%s292 + $0xb1] sm:$0xff]
      %v1453 = vld [vmem:[%s292 + $0xc1] sm:$0xff]
      %v1454 = vld [vmem:[%s292 + $0xc9] sm:$0xff]
      %v1455 = vld [vmem:[%s292 + $0xd9] sm:$0xff]
      %v1456 = vld [vmem:[%s292 + $0xe1] sm:$0xff]
      %v1457 = vld [vmem:[%s292 + $0xf1] sm:$0xff]
      %v1458 = vld [vmem:[%s292 + $0xf9] sm:$0xff]
      %v1459 = vld [vmem:[%s292 + $0x109] sm:$0xff]
      %v1460 = vld [vmem:[%s292 + $0x111] sm:$0xff]
      %v1461 = vld [vmem:[%s292 + $0x121] sm:$0xff]
      %v1462 = vld [vmem:[%s292 + $0x129] sm:$0xff]
      %v1463 = vld [vmem:[%s292 + $0x139] sm:$0xff]
      %v1464 = vld [vmem:[%s292 + $0x141] sm:$0xff]
      %v1465 = vld [vmem:[%s292 + $0x151] sm:$0xff]
      %v1466 = vld [vmem:[%s292 + $0x159] sm:$0xff]
      %v1467 = vld [vmem:[%s292 + $0x169] sm:$0xff]
      %v1468 = vld [vmem:[%s292 + $0x171] sm:$0xff]
      %v1469 = vpack.c.bf16 %v1438, %v1437
      %v1470 = vpack.c.bf16 %v1440, %v1439
      %v1471 = vpack.c.bf16 %v1442, %v1441
      %v1472 = vpack.c.bf16 %v1444, %v1443
      %v1473 = vpack.c.bf16 %v1446, %v1445
      %v1474 = vpack.c.bf16 %v1448, %v1447
      %v1475 = vpack.c.bf16 %v1450, %v1449
      %v1476 = vpack.c.bf16 %v1452, %v1451
      %v1477 = vpack.c.bf16 %v1454, %v1453
      %v1478 = vpack.c.bf16 %v1456, %v1455
      %v1479 = vpack.c.bf16 %v1458, %v1457
      %v1480 = vpack.c.bf16 %v1460, %v1459
      %v1481 = vpack.c.bf16 %v1462, %v1461
      %v1482 = vpack.c.bf16 %v1464, %v1463
      %v1483 = vpack.c.bf16 %v1466, %v1465
      %v1484 = vpack.c.bf16 %v1468, %v1467
      %s1485 = scalar_lea.vmem %s1, 8
      %v1486 = vld [vmem:[%s1485] sm:$0x3]
      %v1488 = vsel %vm172, %v1469, 0
      %v1491 = vsel %vm172, %v1470, 0
      %v1494 = vsel %vm172, %v1471, 0
      %v1497 = vsel %vm172, %v1472, 0
      %v1500 = vsel %vm172, %v1473, 0
      %v1503 = vsel %vm172, %v1474, 0
      %v1506 = vsel %vm172, %v1475, 0
      %v1509 = vsel %vm172, %v1476, 0
      %v1512 = vsel %vm172, %v1477, 0
      %v1515 = vsel %vm172, %v1478, 0
      %v1518 = vsel %vm172, %v1479, 0
      %v1521 = vsel %vm172, %v1480, 0
      %v1524 = vsel %vm172, %v1481, 0
      %v1527 = vsel %vm172, %v1482, 0
      %v1530 = vsel %vm172, %v1483, 0
      %v1533 = vsel %vm172, %v1484, 0
      %v1536 = vsel %vm472, %v1486, 0
      %1538 = vmatprep.subr.bf16.mxu0 0
      %1539 = vmatpush1.bf16.msra.mxu0 %v1536
      %1540 = vmatprep.subr.bf16.mxu0 0
      %1541 = vmatpush1.bf16.msra.mxu0 0
      %1542 = vmatprep.subr.bf16.mxu0 0
      %1543 = vmatpush1.bf16.msra.mxu0 0
      %1544 = vmatprep.subr.bf16.mxu0 0
      %1545 = vmatpush1.bf16.msra.mxu0 0
      %1546 = vmatprep.subr.bf16.mxu0 0
      %1547 = vmatpush1.bf16.msra.mxu0 0
      %1548 = vmatprep.subr.bf16.mxu0 0
      %1549 = vmatpush1.bf16.msra.mxu0 0
      %1550 = vmatprep.subr.bf16.mxu0 0
      %1551 = vmatpush1.bf16.msra.mxu0 0
      %1552 = vmatprep.subr.bf16.mxu0 0
      %1553 = vmatpush1.bf16.msra.mxu0 0
      %1554 = vmatprep.subr.bf16.mxu0 0
      %1555 = vmatpush1.bf16.msra.mxu0 0
      %1556 = vmatprep.subr.bf16.mxu0 0
      %1557 = vmatpush1.bf16.msra.mxu0 0
      %1558 = vmatprep.subr.bf16.mxu0 0
      %1559 = vmatpush1.bf16.msra.mxu0 0
      %1560 = vmatprep.subr.bf16.mxu0 0
      %1561 = vmatpush1.bf16.msra.mxu0 0
      %1562 = vmatprep.subr.bf16.mxu0 0
      %1563 = vmatpush1.bf16.msra.mxu0 0
      %1564 = vmatprep.subr.bf16.mxu0 0
      %1565 = vmatpush1.bf16.msra.mxu0 0
      %1566 = vmatprep.subr.bf16.mxu0 0
      %1567 = vmatpush1.bf16.msra.mxu0 0
      %1568 = vmatprep.subr.bf16.mxu0 0
      %1569 = vmatpush1.bf16.msra.mxu0 0
      %1570 = vmatprep.mubr.bf16.mxu0 0
      %1571 = vmatmul.mubr.bf16.gmra.mrb[0].mxu0 %v1488
      %v1572 = vpop.f32.mrb[0].mxu0
      %v1573 = vadd.f32 0.0, %v1572
      %v1574 = vpop.f32.mrb[0].mxu0
      %v1575 = vpop.f32.mrb[0].mxu0
      %v1576 = vadd.f32 0.0, %v1575
      %v1577 = vpop.f32.mrb[0].mxu0
      %1578 = vmatprep.mubr.bf16.mxu0 0
      %1579 = vmatmul.mubr.bf16.gmra.mrb[0].mxu0 %v1491
      %v1580 = vpop.f32.mrb[0].mxu0
      %v1581 = vadd.f32 0.0, %v1580
      %v1582 = vpop.f32.mrb[0].mxu0
      %v1583 = vpop.f32.mrb[0].mxu0
      %v1584 = vadd.f32 0.0, %v1583
      %v1585 = vpop.f32.mrb[0].mxu0
      %1586 = vmatprep.mubr.bf16.mxu0 0
      %1587 = vmatmul.mubr.bf16.gmra.mrb[0].mxu0 %v1494
      %v1588 = vpop.f32.mrb[0].mxu0
      %v1589 = vadd.f32 0.0, %v1588
      %v1590 = vpop.f32.mrb[0].mxu0
      %v1591 = vpop.f32.mrb[0].mxu0
      %v1592 = vadd.f32 0.0, %v1591
      %v1593 = vpop.f32.mrb[0].mxu0
      %1594 = vmatprep.mubr.bf16.mxu0 0
      %1595 = vmatmul.mubr.bf16.gmra.mrb[0].mxu0 %v1497
      %v1596 = vpop.f32.mrb[0].mxu0
      %v1597 = vadd.f32 0.0, %v1596
      %v1598 = vpop.f32.mrb[0].mxu0
      %v1599 = vpop.f32.mrb[0].mxu0
      %v1600 = vadd.f32 0.0, %v1599
      %v1601 = vpop.f32.mrb[0].mxu0
      %1602 = vmatprep.mubr.bf16.mxu0 0
      %1603 = vmatmul.mubr.bf16.gmra.mrb[0].mxu0 %v1500
      %v1604 = vpop.f32.mrb[0].mxu0
      %v1605 = vadd.f32 0.0, %v1604
      %v1606 = vpop.f32.mrb[0].mxu0
      %v1607 = vpop.f32.mrb[0].mxu0
      %v1608 = vadd.f32 0.0, %v1607
      %v1609 = vpop.f32.mrb[0].mxu0
      %1610 = vmatprep.mubr.bf16.mxu0 0
      %1611 = vmatmul.mubr.bf16.gmra.mrb[0].mxu0 %v1503
      %v1612 = vpop.f32.mrb[0].mxu0
      %v1613 = vadd.f32 0.0, %v1612
      %v1614 = vpop.f32.mrb[0].mxu0
      %v1615 = vpop.f32.mrb[0].mxu0
      %v1616 = vadd.f32 0.0, %v1615
      %v1617 = vpop.f32.mrb[0].mxu0
      %1618 = vmatprep.mubr.bf16.mxu0 0
      %1619 = vmatmul.mubr.bf16.gmra.mrb[0].mxu0 %v1506
      %v1620 = vpop.f32.mrb[0].mxu0
      %v1621 = vadd.f32 0.0, %v1620
      %v1622 = vpop.f32.mrb[0].mxu0
      %v1623 = vpop.f32.mrb[0].mxu0
      %v1624 = vadd.f32 0.0, %v1623
      %v1625 = vpop.f32.mrb[0].mxu0
      %1626 = vmatprep.mubr.bf16.mxu0 0
      %1627 = vmatmul.mubr.bf16.gmra.mrb[0].mxu0 %v1509
      %v1628 = vpop.f32.mrb[0].mxu0
      %v1629 = vadd.f32 0.0, %v1628
      %v1630 = vpop.f32.mrb[0].mxu0
      %v1631 = vpop.f32.mrb[0].mxu0
      %v1632 = vadd.f32 0.0, %v1631
      %v1633 = vpop.f32.mrb[0].mxu0
      %1634 = vmatprep.mubr.bf16.mxu0 0
      %1635 = vmatmul.mubr.bf16.gmra.mrb[0].mxu0 %v1512
      %v1636 = vpop.f32.mrb[0].mxu0
      %v1637 = vadd.f32 0.0, %v1636
      %v1638 = vpop.f32.mrb[0].mxu0
      %v1639 = vpop.f32.mrb[0].mxu0
      %v1640 = vadd.f32 0.0, %v1639
      %v1641 = vpop.f32.mrb[0].mxu0
      %1642 = vmatprep.mubr.bf16.mxu0 0
      %1643 = vmatmul.mubr.bf16.gmra.mrb[0].mxu0 %v1515
      %v1644 = vpop.f32.mrb[0].mxu0
      %v1645 = vadd.f32 0.0, %v1644
      %v1646 = vpop.f32.mrb[0].mxu0
      %v1647 = vpop.f32.mrb[0].mxu0
      %v1648 = vadd.f32 0.0, %v1647
      %v1649 = vpop.f32.mrb[0].mxu0
      %1650 = vmatprep.mubr.bf16.mxu0 0
      %1651 = vmatmul.mubr.bf16.gmra.mrb[0].mxu0 %v1518
      %v1652 = vpop.f32.mrb[0].mxu0
      %v1653 = vadd.f32 0.0, %v1652
      %v1654 = vpop.f32.mrb[0].mxu0
      %v1655 = vpop.f32.mrb[0].mxu0
      %v1656 = vadd.f32 0.0, %v1655
      %v1657 = vpop.f32.mrb[0].mxu0
      %1658 = vmatprep.mubr.bf16.mxu0 0
      %1659 = vmatmul.mubr.bf16.gmra.mrb[0].mxu0 %v1521
      %v1660 = vpop.f32.mrb[0].mxu0
      %v1661 = vadd.f32 0.0, %v1660
      %v1662 = vpop.f32.mrb[0].mxu0
      %v1663 = vpop.f32.mrb[0].mxu0
      %v1664 = vadd.f32 0.0, %v1663
      %v1665 = vpop.f32.mrb[0].mxu0
      %1666 = vmatprep.mubr.bf16.mxu0 0
      %1667 = vmatmul.mubr.bf16.gmra.mrb[0].mxu0 %v1524
      %v1668 = vpop.f32.mrb[0].mxu0
      %v1669 = vadd.f32 0.0, %v1668
      %v1670 = vpop.f32.mrb[0].mxu0
      %v1671 = vpop.f32.mrb[0].mxu0
      %v1672 = vadd.f32 0.0, %v1671
      %v1673 = vpop.f32.mrb[0].mxu0
      %1674 = vmatprep.mubr.bf16.mxu0 0
      %1675 = vmatmul.mubr.bf16.gmra.mrb[0].mxu0 %v1527
      %v1676 = vpop.f32.mrb[0].mxu0
      %v1677 = vadd.f32 0.0, %v1676
      %v1678 = vpop.f32.mrb[0].mxu0
      %v1679 = vpop.f32.mrb[0].mxu0
      %v1680 = vadd.f32 0.0, %v1679
      %v1681 = vpop.f32.mrb[0].mxu0
      %1682 = vmatprep.mubr.bf16.mxu0 0
      %1683 = vmatmul.mubr.bf16.gmra.mrb[0].mxu0 %v1530
      %v1684 = vpop.f32.mrb[0].mxu0
      %v1685 = vadd.f32 0.0, %v1684
      %v1686 = vpop.f32.mrb[0].mxu0
      %v1687 = vpop.f32.mrb[0].mxu0
      %v1688 = vadd.f32 0.0, %v1687
      %v1689 = vpop.f32.mrb[0].mxu0
      %1690 = vmatprep.mubr.bf16.mxu0 0
      %1691 = vmatmul.mubr.bf16.gmra.mrb[0].mxu0 %v1533
      %v1692 = vpop.f32.mrb[0].mxu0
      %v1693 = vadd.f32 0.0, %v1692
      %v1694 = vpop.f32.mrb[0].mxu0
      %v1695 = vpop.f32.mrb[0].mxu0
      %v1696 = vadd.f32 0.0, %v1695
      %v1697 = vpop.f32.mrb[0].mxu0
      %1698 = vdwg.mxu0
      %v1699 = vadd.f32 %v1405, %v1573
      %v1700 = vadd.f32 %v1406, %v1576
      %v1701 = vadd.f32 %v1407, %v1581
      %v1702 = vadd.f32 %v1408, %v1584
      %v1703 = vadd.f32 %v1409, %v1589
      %v1704 = vadd.f32 %v1410, %v1592
      %v1705 = vadd.f32 %v1411, %v1597
      %v1706 = vadd.f32 %v1412, %v1600
      %v1707 = vadd.f32 %v1413, %v1605
      %v1708 = vadd.f32 %v1414, %v1608
      %v1709 = vadd.f32 %v1415, %v1613
      %v1710 = vadd.f32 %v1416, %v1616
      %v1711 = vadd.f32 %v1417, %v1621
      %v1712 = vadd.f32 %v1418, %v1624
      %v1713 = vadd.f32 %v1419, %v1629
      %v1714 = vadd.f32 %v1420, %v1632
      %v1715 = vadd.f32 %v1421, %v1637
      %v1716 = vadd.f32 %v1422, %v1640
      %v1717 = vadd.f32 %v1423, %v1645
      %v1718 = vadd.f32 %v1424, %v1648
      %v1719 = vadd.f32 %v1425, %v1653
      %v1720 = vadd.f32 %v1426, %v1656
      %v1721 = vadd.f32 %v1427, %v1661
      %v1722 = vadd.f32 %v1428, %v1664
      %v1723 = vadd.f32 %v1429, %v1669
      %v1724 = vadd.f32 %v1430, %v1672
      %v1725 = vadd.f32 %v1431, %v1677
      %v1726 = vadd.f32 %v1432, %v1680
      %v1727 = vadd.f32 %v1433, %v1685
      %v1728 = vadd.f32 %v1434, %v1688
      %v1729 = vadd.f32 %v1435, %v1693
      %v1730 = vadd.f32 %v1436, %v1696
      %v1731 = vld [vmem:[%s292 + $0x2] sm:$0xff]
      %v1732 = vld [vmem:[%s292 + $0xa] sm:$0xff]
      %v1733 = vld [vmem:[%s292 + $0x1a] sm:$0xff]
      %v1734 = vld [vmem:[%s292 + $0x22] sm:$0xff]
      %v1735 = vld [vmem:[%s292 + $0x32] sm:$0xff]
      %v1736 = vld [vmem:[%s292 + $0x3a] sm:$0xff]
      %v1737 = vld [vmem:[%s292 + $0x4a] sm:$0xff]
      %v1738 = vld [vmem:[%s292 + $0x52] sm:$0xff]
      %v1739 = vld [vmem:[%s292 + $0x62] sm:$0xff]
      %v1740 = vld [vmem:[%s292 + $0x6a] sm:$0xff]
      %v1741 = vld [vmem:[%s292 + $0x7a] sm:$0xff]
      %v1742 = vld [vmem:[%s292 + $0x82] sm:$0xff]
      %v1743 = vld [vmem:[%s292 + $0x92] sm:$0xff]
      %v1744 = vld [vmem:[%s292 + $0x9a] sm:$0xff]
      %v1745 = vld [vmem:[%s292 + $0xaa] sm:$0xff]
      %v1746 = vld [vmem:[%s292 + $0xb2] sm:$0xff]
      %v1747 = vld [vmem:[%s292 + $0xc2] sm:$0xff]
      %v1748 = vld [vmem:[%s292 + $0xca] sm:$0xff]
      %v1749 = vld [vmem:[%s292 + $0xda] sm:$0xff]
      %v1750 = vld [vmem:[%s292 + $0xe2] sm:$0xff]
      %v1751 = vld [vmem:[%s292 + $0xf2] sm:$0xff]
      %v1752 = vld [vmem:[%s292 + $0xfa] sm:$0xff]
      %v1753 = vld [vmem:[%s292 + $0x10a] sm:$0xff]
      %v1754 = vld [vmem:[%s292 + $0x112] sm:$0xff]
      %v1755 = vld [vmem:[%s292 + $0x122] sm:$0xff]
      %v1756 = vld [vmem:[%s292 + $0x12a] sm:$0xff]
      %v1757 = vld [vmem:[%s292 + $0x13a] sm:$0xff]
      %v1758 = vld [vmem:[%s292 + $0x142] sm:$0xff]
      %v1759 = vld [vmem:[%s292 + $0x152] sm:$0xff]
      %v1760 = vld [vmem:[%s292 + $0x15a] sm:$0xff]
      %v1761 = vld [vmem:[%s292 + $0x16a] sm:$0xff]
      %v1762 = vld [vmem:[%s292 + $0x172] sm:$0xff]
      %v1763 = vpack.c.bf16 %v1732, %v1731
      %v1764 = vpack.c.bf16 %v1734, %v1733
      %v1765 = vpack.c.bf16 %v1736, %v1735
      %v1766 = vpack.c.bf16 %v1738, %v1737
      %v1767 = vpack.c.bf16 %v1740, %v1739
      %v1768 = vpack.c.bf16 %v1742, %v1741
      %v1769 = vpack.c.bf16 %v1744, %v1743
      %v1770 = vpack.c.bf16 %v1746, %v1745
      %v1771 = vpack.c.bf16 %v1748, %v1747
      %v1772 = vpack.c.bf16 %v1750, %v1749
      %v1773 = vpack.c.bf16 %v1752, %v1751
      %v1774 = vpack.c.bf16 %v1754, %v1753
      %v1775 = vpack.c.bf16 %v1756, %v1755
      %v1776 = vpack.c.bf16 %v1758, %v1757
      %v1777 = vpack.c.bf16 %v1760, %v1759
      %v1778 = vpack.c.bf16 %v1762, %v1761
      %s1779 = scalar_lea.vmem %s1, 10
      %v1780 = vld [vmem:[%s1779] sm:$0x3]
      %v1782 = vsel %vm172, %v1763, 0
      %v1785 = vsel %vm172, %v1764, 0
      %v1788 = vsel %vm172, %v1765, 0
      %v1791 = vsel %vm172, %v1766, 0
      %v1794 = vsel %vm172, %v1767, 0
      %v1797 = vsel %vm172, %v1768, 0
      %v1800 = vsel %vm172, %v1769, 0
      %v1803 = vsel %vm172, %v1770, 0
      %v1806 = vsel %vm172, %v1771, 0
      %v1809 = vsel %vm172, %v1772, 0
      %v1812 = vsel %vm172, %v1773, 0
      %v1815 = vsel %vm172, %v1774, 0
      %v1818 = vsel %vm172, %v1775, 0
      %v1821 = vsel %vm172, %v1776, 0
      %v1824 = vsel %vm172, %v1777, 0
      %v1827 = vsel %vm172, %v1778, 0
      %v1830 = vsel %vm472, %v1780, 0
      %1832 = vmatprep.subr.bf16.mxu0 0
      %1833 = vmatpush1.bf16.msra.mxu0 %v1830
      %1834 = vmatprep.subr.bf16.mxu0 0
      %1835 = vmatpush1.bf16.msra.mxu0 0
      %1836 = vmatprep.subr.bf16.mxu0 0
      %1837 = vmatpush1.bf16.msra.mxu0 0
      %1838 = vmatprep.subr.bf16.mxu0 0
      %1839 = vmatpush1.bf16.msra.mxu0 0
      %1840 = vmatprep.subr.bf16.mxu0 0
      %1841 = vmatpush1.bf16.msra.mxu0 0
      %1842 = vmatprep.subr.bf16.mxu0 0
      %1843 = vmatpush1.bf16.msra.mxu0 0
      %1844 = vmatprep.subr.bf16.mxu0 0
      %1845 = vmatpush1.bf16.msra.mxu0 0
      %1846 = vmatprep.subr.bf16.mxu0 0
      %1847 = vmatpush1.bf16.msra.mxu0 0
      %1848 = vmatprep.subr.bf16.mxu0 0
      %1849 = vmatpush1.bf16.msra.mxu0 0
      %1850 = vmatprep.subr.bf16.mxu0 0
      %1851 = vmatpush1.bf16.msra.mxu0 0
      %1852 = vmatprep.subr.bf16.mxu0 0
      %1853 = vmatpush1.bf16.msra.mxu0 0
      %1854 = vmatprep.subr.bf16.mxu0 0
      %1855 = vmatpush1.bf16.msra.mxu0 0
      %1856 = vmatprep.subr.bf16.mxu0 0
      %1857 = vmatpush1.bf16.msra.mxu0 0
      %1858 = vmatprep.subr.bf16.mxu0 0
      %1859 = vmatpush1.bf16.msra.mxu0 0
      %1860 = vmatprep.subr.bf16.mxu0 0
      %1861 = vmatpush1.bf16.msra.mxu0 0
      %1862 = vmatprep.subr.bf16.mxu0 0
      %1863 = vmatpush1.bf16.msra.mxu0 0
      %1864 = vmatprep.mubr.bf16.mxu0 0
      %1865 = vmatmul.mubr.bf16.gmra.mrb[0].mxu0 %v1782
      %v1866 = vpop.f32.mrb[0].mxu0
      %v1867 = vadd.f32 0.0, %v1866
      %v1868 = vpop.f32.mrb[0].mxu0
      %v1869 = vpop.f32.mrb[0].mxu0
      %v1870 = vadd.f32 0.0, %v1869
      %v1871 = vpop.f32.mrb[0].mxu0
      %1872 = vmatprep.mubr.bf16.mxu0 0
      %1873 = vmatmul.mubr.bf16.gmra.mrb[0].mxu0 %v1785
      %v1874 = vpop.f32.mrb[0].mxu0
      %v1875 = vadd.f32 0.0, %v1874
      %v1876 = vpop.f32.mrb[0].mxu0
      %v1877 = vpop.f32.mrb[0].mxu0
      %v1878 = vadd.f32 0.0, %v1877
      %v1879 = vpop.f32.mrb[0].mxu0
      %1880 = vmatprep.mubr.bf16.mxu0 0
      %1881 = vmatmul.mubr.bf16.gmra.mrb[0].mxu0 %v1788
      %v1882 = vpop.f32.mrb[0].mxu0
      %v1883 = vadd.f32 0.0, %v1882
      %v1884 = vpop.f32.mrb[0].mxu0
      %v1885 = vpop.f32.mrb[0].mxu0
      %v1886 = vadd.f32 0.0, %v1885
      %v1887 = vpop.f32.mrb[0].mxu0
      %1888 = vmatprep.mubr.bf16.mxu0 0
      %1889 = vmatmul.mubr.bf16.gmra.mrb[0].mxu0 %v1791
      %v1890 = vpop.f32.mrb[0].mxu0
      %v1891 = vadd.f32 0.0, %v1890
      %v1892 = vpop.f32.mrb[0].mxu0
      %v1893 = vpop.f32.mrb[0].mxu0
      %v1894 = vadd.f32 0.0, %v1893
      %v1895 = vpop.f32.mrb[0].mxu0
      %1896 = vmatprep.mubr.bf16.mxu0 0
      %1897 = vmatmul.mubr.bf16.gmra.mrb[0].mxu0 %v1794
      %v1898 = vpop.f32.mrb[0].mxu0
      %v1899 = vadd.f32 0.0, %v1898
      %v1900 = vpop.f32.mrb[0].mxu0
      %v1901 = vpop.f32.mrb[0].mxu0
      %v1902 = vadd.f32 0.0, %v1901
      %v1903 = vpop.f32.mrb[0].mxu0
      %1904 = vmatprep.mubr.bf16.mxu0 0
      %1905 = vmatmul.mubr.bf16.gmra.mrb[0].mxu0 %v1797
      %v1906 = vpop.f32.mrb[0].mxu0
      %v1907 = vadd.f32 0.0, %v1906
      %v1908 = vpop.f32.mrb[0].mxu0
      %v1909 = vpop.f32.mrb[0].mxu0
      %v1910 = vadd.f32 0.0, %v1909
      %v1911 = vpop.f32.mrb[0].mxu0
      %1912 = vmatprep.mubr.bf16.mxu0 0
      %1913 = vmatmul.mubr.bf16.gmra.mrb[0].mxu0 %v1800
      %v1914 = vpop.f32.mrb[0].mxu0
      %v1915 = vadd.f32 0.0, %v1914
      %v1916 = vpop.f32.mrb[0].mxu0
      %v1917 = vpop.f32.mrb[0].mxu0
      %v1918 = vadd.f32 0.0, %v1917
      %v1919 = vpop.f32.mrb[0].mxu0
      %1920 = vmatprep.mubr.bf16.mxu0 0
      %1921 = vmatmul.mubr.bf16.gmra.mrb[0].mxu0 %v1803
      %v1922 = vpop.f32.mrb[0].mxu0
      %v1923 = vadd.f32 0.0, %v1922
      %v1924 = vpop.f32.mrb[0].mxu0
      %v1925 = vpop.f32.mrb[0].mxu0
      %v1926 = vadd.f32 0.0, %v1925
      %v1927 = vpop.f32.mrb[0].mxu0
      %1928 = vmatprep.mubr.bf16.mxu0 0
      %1929 = vmatmul.mubr.bf16.gmra.mrb[0].mxu0 %v1806
      %v1930 = vpop.f32.mrb[0].mxu0
      %v1931 = vadd.f32 0.0, %v1930
      %v1932 = vpop.f32.mrb[0].mxu0
      %v1933 = vpop.f32.mrb[0].mxu0
      %v1934 = vadd.f32 0.0, %v1933
      %v1935 = vpop.f32.mrb[0].mxu0
      %1936 = vmatprep.mubr.bf16.mxu0 0
      %1937 = vmatmul.mubr.bf16.gmra.mrb[0].mxu0 %v1809
      %v1938 = vpop.f32.mrb[0].mxu0
      %v1939 = vadd.f32 0.0, %v1938
      %v1940 = vpop.f32.mrb[0].mxu0
      %v1941 = vpop.f32.mrb[0].mxu0
      %v1942 = vadd.f32 0.0, %v1941
      %v1943 = vpop.f32.mrb[0].mxu0
      %1944 = vmatprep.mubr.bf16.mxu0 0
      %1945 = vmatmul.mubr.bf16.gmra.mrb[0].mxu0 %v1812
      %v1946 = vpop.f32.mrb[0].mxu0
      %v1947 = vadd.f32 0.0, %v1946
      %v1948 = vpop.f32.mrb[0].mxu0
      %v1949 = vpop.f32.mrb[0].mxu0
      %v1950 = vadd.f32 0.0, %v1949
      %v1951 = vpop.f32.mrb[0].mxu0
      %1952 = vmatprep.mubr.bf16.mxu0 0
      %1953 = vmatmul.mubr.bf16.gmra.mrb[0].mxu0 %v1815
      %v1954 = vpop.f32.mrb[0].mxu0
      %v1955 = vadd.f32 0.0, %v1954
      %v1956 = vpop.f32.mrb[0].mxu0
      %v1957 = vpop.f32.mrb[0].mxu0
      %v1958 = vadd.f32 0.0, %v1957
      %v1959 = vpop.f32.mrb[0].mxu0
      %1960 = vmatprep.mubr.bf16.mxu0 0
      %1961 = vmatmul.mubr.bf16.gmra.mrb[0].mxu0 %v1818
      %v1962 = vpop.f32.mrb[0].mxu0
      %v1963 = vadd.f32 0.0, %v1962
      %v1964 = vpop.f32.mrb[0].mxu0
      %v1965 = vpop.f32.mrb[0].mxu0
      %v1966 = vadd.f32 0.0, %v1965
      %v1967 = vpop.f32.mrb[0].mxu0
      %1968 = vmatprep.mubr.bf16.mxu0 0
      %1969 = vmatmul.mubr.bf16.gmra.mrb[0].mxu0 %v1821
      %v1970 = vpop.f32.mrb[0].mxu0
      %v1971 = vadd.f32 0.0, %v1970
      %v1972 = vpop.f32.mrb[0].mxu0
      %v1973 = vpop.f32.mrb[0].mxu0
      %v1974 = vadd.f32 0.0, %v1973
      %v1975 = vpop.f32.mrb[0].mxu0
      %1976 = vmatprep.mubr.bf16.mxu0 0
      %1977 = vmatmul.mubr.bf16.gmra.mrb[0].mxu0 %v1824
      %v1978 = vpop.f32.mrb[0].mxu0
      %v1979 = vadd.f32 0.0, %v1978
      %v1980 = vpop.f32.mrb[0].mxu0
      %v1981 = vpop.f32.mrb[0].mxu0
      %v1982 = vadd.f32 0.0, %v1981
      %v1983 = vpop.f32.mrb[0].mxu0
      %1984 = vmatprep.mubr.bf16.mxu0 0
      %1985 = vmatmul.mubr.bf16.gmra.mrb[0].mxu0 %v1827
      %v1986 = vpop.f32.mrb[0].mxu0
      %v1987 = vadd.f32 0.0, %v1986
      %v1988 = vpop.f32.mrb[0].mxu0
      %v1989 = vpop.f32.mrb[0].mxu0
      %v1990 = vadd.f32 0.0, %v1989
      %v1991 = vpop.f32.mrb[0].mxu0
      %1992 = vdwg.mxu0
      %v1993 = vadd.f32 %v1699, %v1867
      %v1994 = vadd.f32 %v1700, %v1870
      %v1995 = vadd.f32 %v1701, %v1875
      %v1996 = vadd.f32 %v1702, %v1878
      %v1997 = vadd.f32 %v1703, %v1883
      %v1998 = vadd.f32 %v1704, %v1886
      %v1999 = vadd.f32 %v1705, %v1891
      %v2000 = vadd.f32 %v1706, %v1894
      %v2001 = vadd.f32 %v1707, %v1899
      %v2002 = vadd.f32 %v1708, %v1902
      %v2003 = vadd.f32 %v1709, %v1907
      %v2004 = vadd.f32 %v1710, %v1910
      %v2005 = vadd.f32 %v1711, %v1915
      %v2006 = vadd.f32 %v1712, %v1918
      %v2007 = vadd.f32 %v1713, %v1923
      %v2008 = vadd.f32 %v1714, %v1926
      %v2009 = vadd.f32 %v1715, %v1931
      %v2010 = vadd.f32 %v1716, %v1934
      %v2011 = vadd.f32 %v1717, %v1939
      %v2012 = vadd.f32 %v1718, %v1942
      %v2013 = vadd.f32 %v1719, %v1947
      %v2014 = vadd.f32 %v1720, %v1950
      %v2015 = vadd.f32 %v1721, %v1955
      %v2016 = vadd.f32 %v1722, %v1958
      %v2017 = vadd.f32 %v1723, %v1963
      %v2018 = vadd.f32 %v1724, %v1966
      %v2019 = vadd.f32 %v1725, %v1971
      %v2020 = vadd.f32 %v1726, %v1974
      %v2021 = vadd.f32 %v1727, %v1979
      %v2022 = vadd.f32 %v1728, %v1982
      %v2023 = vadd.f32 %v1729, %v1987
      %v2024 = vadd.f32 %v1730, %v1990
      %s2025 = scalar_lea.vmem [#allocation2], 48
      %v2026 = vld [vmem:[%s2025] sm:$0xff]
      %v2027 = vld [vmem:[%s2025 + $0x8] sm:$0xff]
      %v2028 = vld [vmem:[%s2025 + $0x18] sm:$0xff]
      %v2029 = vld [vmem:[%s2025 + $0x20] sm:$0xff]
      %v2030 = vld [vmem:[%s2025 + $0x30] sm:$0xff]
      %v2031 = vld [vmem:[%s2025 + $0x38] sm:$0xff]
      %v2032 = vld [vmem:[%s2025 + $0x48] sm:$0xff]
      %v2033 = vld [vmem:[%s2025 + $0x50] sm:$0xff]
      %v2034 = vld [vmem:[%s2025 + $0x60] sm:$0xff]
      %v2035 = vld [vmem:[%s2025 + $0x68] sm:$0xff]
      %v2036 = vld [vmem:[%s2025 + $0x78] sm:$0xff]
      %v2037 = vld [vmem:[%s2025 + $0x80] sm:$0xff]
      %v2038 = vld [vmem:[%s2025 + $0x90] sm:$0xff]
      %v2039 = vld [vmem:[%s2025 + $0x98] sm:$0xff]
      %v2040 = vld [vmem:[%s2025 + $0xa8] sm:$0xff]
      %v2041 = vld [vmem:[%s2025 + $0xb0] sm:$0xff]
      %v2042 = vld [vmem:[%s2025 + $0xc0] sm:$0xff]
      %v2043 = vld [vmem:[%s2025 + $0xc8] sm:$0xff]
      %v2044 = vld [vmem:[%s2025 + $0xd8] sm:$0xff]
      %v2045 = vld [vmem:[%s2025 + $0xe0] sm:$0xff]
      %v2046 = vld [vmem:[%s2025 + $0xf0] sm:$0xff]
      %v2047 = vld [vmem:[%s2025 + $0xf8] sm:$0xff]
      %v2048 = vld [vmem:[%s2025 + $0x108] sm:$0xff]
      %v2049 = vld [vmem:[%s2025 + $0x110] sm:$0xff]
      %v2050 = vld [vmem:[%s2025 + $0x120] sm:$0xff]
      %v2051 = vld [vmem:[%s2025 + $0x128] sm:$0xff]
      %v2052 = vld [vmem:[%s2025 + $0x138] sm:$0xff]
      %v2053 = vld [vmem:[%s2025 + $0x140] sm:$0xff]
      %v2054 = vld [vmem:[%s2025 + $0x150] sm:$0xff]
      %v2055 = vld [vmem:[%s2025 + $0x158] sm:$0xff]
      %v2056 = vld [vmem:[%s2025 + $0x168] sm:$0xff]
      %v2057 = vld [vmem:[%s2025 + $0x170] sm:$0xff]
      %v2058 = vpack.c.bf16 %v2027, %v2026
      %v2059 = vpack.c.bf16 %v2029, %v2028
      %v2060 = vpack.c.bf16 %v2031, %v2030
      %v2061 = vpack.c.bf16 %v2033, %v2032
      %v2062 = vpack.c.bf16 %v2035, %v2034
      %v2063 = vpack.c.bf16 %v2037, %v2036
      %v2064 = vpack.c.bf16 %v2039, %v2038
      %v2065 = vpack.c.bf16 %v2041, %v2040
      %v2066 = vpack.c.bf16 %v2043, %v2042
      %v2067 = vpack.c.bf16 %v2045, %v2044
      %v2068 = vpack.c.bf16 %v2047, %v2046
      %v2069 = vpack.c.bf16 %v2049, %v2048
      %v2070 = vpack.c.bf16 %v2051, %v2050
      %v2071 = vpack.c.bf16 %v2053, %v2052
      %v2072 = vpack.c.bf16 %v2055, %v2054
      %v2073 = vpack.c.bf16 %v2057, %v2056
      %s2074 = scalar_lea.vmem %s1, 12
      %v2075 = vld [vmem:[%s2074] sm:$0x3]
      %v2077 = vsel %vm172, %v2058, 0
      %v2080 = vsel %vm172, %v2059, 0
      %v2083 = vsel %vm172, %v2060, 0
      %v2086 = vsel %vm172, %v2061, 0
      %v2089 = vsel %vm172, %v2062, 0
      %v2092 = vsel %vm172, %v2063, 0
      %v2095 = vsel %vm172, %v2064, 0
      %v2098 = vsel %vm172, %v2065, 0
      %v2101 = vsel %vm172, %v2066, 0
      %v2104 = vsel %vm172, %v2067, 0
      %v2107 = vsel %vm172, %v2068, 0
      %v2110 = vsel %vm172, %v2069, 0
      %v2113 = vsel %vm172, %v2070, 0
      %v2116 = vsel %vm172, %v2071, 0
      %v2119 = vsel %vm172, %v2072, 0
      %v2122 = vsel %vm172, %v2073, 0
      %v2125 = vsel %vm472, %v2075, 0
      %2127 = vmatprep.subr.bf16.mxu0 0
      %2128 = vmatpush1.bf16.msra.mxu0 %v2125
      %2129 = vmatprep.subr.bf16.mxu0 0
      %2130 = vmatpush1.bf16.msra.mxu0 0
      %2131 = vmatprep.subr.bf16.mxu0 0
      %2132 = vmatpush1.bf16.msra.mxu0 0
      %2133 = vmatprep.subr.bf16.mxu0 0
      %2134 = vmatpush1.bf16.msra.mxu0 0
      %2135 = vmatprep.subr.bf16.mxu0 0
      %2136 = vmatpush1.bf16.msra.mxu0 0
      %2137 = vmatprep.subr.bf16.mxu0 0
      %2138 = vmatpush1.bf16.msra.mxu0 0
      %2139 = vmatprep.subr.bf16.mxu0 0
      %2140 = vmatpush1.bf16.msra.mxu0 0
      %2141 = vmatprep.subr.bf16.mxu0 0
      %2142 = vmatpush1.bf16.msra.mxu0 0
      %2143 = vmatprep.subr.bf16.mxu0 0
      %2144 = vmatpush1.bf16.msra.mxu0 0
      %2145 = vmatprep.subr.bf16.mxu0 0
      %2146 = vmatpush1.bf16.msra.mxu0 0
      %2147 = vmatprep.subr.bf16.mxu0 0
      %2148 = vmatpush1.bf16.msra.mxu0 0
      %2149 = vmatprep.subr.bf16.mxu0 0
      %2150 = vmatpush1.bf16.msra.mxu0 0
      %2151 = vmatprep.subr.bf16.mxu0 0
      %2152 = vmatpush1.bf16.msra.mxu0 0
      %2153 = vmatprep.subr.bf16.mxu0 0
      %2154 = vmatpush1.bf16.msra.mxu0 0
      %2155 = vmatprep.subr.bf16.mxu0 0
      %2156 = vmatpush1.bf16.msra.mxu0 0
      %2157 = vmatprep.subr.bf16.mxu0 0
      %2158 = vmatpush1.bf16.msra.mxu0 0
      %2159 = vmatprep.mubr.bf16.mxu0 0
      %2160 = vmatmul.mubr.bf16.gmra.mrb[0].mxu0 %v2077
      %v2161 = vpop.f32.mrb[0].mxu0
      %v2162 = vadd.f32 0.0, %v2161
      %v2163 = vpop.f32.mrb[0].mxu0
      %v2164 = vpop.f32.mrb[0].mxu0
      %v2165 = vadd.f32 0.0, %v2164
      %v2166 = vpop.f32.mrb[0].mxu0
      %2167 = vmatprep.mubr.bf16.mxu0 0
      %2168 = vmatmul.mubr.bf16.gmra.mrb[0].mxu0 %v2080
      %v2169 = vpop.f32.mrb[0].mxu0
      %v2170 = vadd.f32 0.0, %v2169
      %v2171 = vpop.f32.mrb[0].mxu0
      %v2172 = vpop.f32.mrb[0].mxu0
      %v2173 = vadd.f32 0.0, %v2172
      %v2174 = vpop.f32.mrb[0].mxu0
      %2175 = vmatprep.mubr.bf16.mxu0 0
      %2176 = vmatmul.mubr.bf16.gmra.mrb[0].mxu0 %v2083
      %v2177 = vpop.f32.mrb[0].mxu0
      %v2178 = vadd.f32 0.0, %v2177
      %v2179 = vpop.f32.mrb[0].mxu0
      %v2180 = vpop.f32.mrb[0].mxu0
      %v2181 = vadd.f32 0.0, %v2180
      %v2182 = vpop.f32.mrb[0].mxu0
      %2183 = vmatprep.mubr.bf16.mxu0 0
      %2184 = vmatmul.mubr.bf16.gmra.mrb[0].mxu0 %v2086
      %v2185 = vpop.f32.mrb[0].mxu0
      %v2186 = vadd.f32 0.0, %v2185
      %v2187 = vpop.f32.mrb[0].mxu0
      %v2188 = vpop.f32.mrb[0].mxu0
      %v2189 = vadd.f32 0.0, %v2188
      %v2190 = vpop.f32.mrb[0].mxu0
      %2191 = vmatprep.mubr.bf16.mxu0 0
      %2192 = vmatmul.mubr.bf16.gmra.mrb[0].mxu0 %v2089
      %v2193 = vpop.f32.mrb[0].mxu0
      %v2194 = vadd.f32 0.0, %v2193
      %v2195 = vpop.f32.mrb[0].mxu0
      %v2196 = vpop.f32.mrb[0].mxu0
      %v2197 = vadd.f32 0.0, %v2196
      %v2198 = vpop.f32.mrb[0].mxu0
      %2199 = vmatprep.mubr.bf16.mxu0 0
      %2200 = vmatmul.mubr.bf16.gmra.mrb[0].mxu0 %v2092
      %v2201 = vpop.f32.mrb[0].mxu0
      %v2202 = vadd.f32 0.0, %v2201
      %v2203 = vpop.f32.mrb[0].mxu0
      %v2204 = vpop.f32.mrb[0].mxu0
      %v2205 = vadd.f32 0.0, %v2204
      %v2206 = vpop.f32.mrb[0].mxu0
      %2207 = vmatprep.mubr.bf16.mxu0 0
      %2208 = vmatmul.mubr.bf16.gmra.mrb[0].mxu0 %v2095
      %v2209 = vpop.f32.mrb[0].mxu0
      %v2210 = vadd.f32 0.0, %v2209
      %v2211 = vpop.f32.mrb[0].mxu0
      %v2212 = vpop.f32.mrb[0].mxu0
      %v2213 = vadd.f32 0.0, %v2212
      %v2214 = vpop.f32.mrb[0].mxu0
      %2215 = vmatprep.mubr.bf16.mxu0 0
      %2216 = vmatmul.mubr.bf16.gmra.mrb[0].mxu0 %v2098
      %v2217 = vpop.f32.mrb[0].mxu0
      %v2218 = vadd.f32 0.0, %v2217
      %v2219 = vpop.f32.mrb[0].mxu0
      %v2220 = vpop.f32.mrb[0].mxu0
      %v2221 = vadd.f32 0.0, %v2220
      %v2222 = vpop.f32.mrb[0].mxu0
      %2223 = vmatprep.mubr.bf16.mxu0 0
      %2224 = vmatmul.mubr.bf16.gmra.mrb[0].mxu0 %v2101
      %v2225 = vpop.f32.mrb[0].mxu0
      %v2226 = vadd.f32 0.0, %v2225
      %v2227 = vpop.f32.mrb[0].mxu0
      %v2228 = vpop.f32.mrb[0].mxu0
      %v2229 = vadd.f32 0.0, %v2228
      %v2230 = vpop.f32.mrb[0].mxu0
      %2231 = vmatprep.mubr.bf16.mxu0 0
      %2232 = vmatmul.mubr.bf16.gmra.mrb[0].mxu0 %v2104
      %v2233 = vpop.f32.mrb[0].mxu0
      %v2234 = vadd.f32 0.0, %v2233
      %v2235 = vpop.f32.mrb[0].mxu0
      %v2236 = vpop.f32.mrb[0].mxu0
      %v2237 = vadd.f32 0.0, %v2236
      %v2238 = vpop.f32.mrb[0].mxu0
      %2239 = vmatprep.mubr.bf16.mxu0 0
      %2240 = vmatmul.mubr.bf16.gmra.mrb[0].mxu0 %v2107
      %v2241 = vpop.f32.mrb[0].mxu0
      %v2242 = vadd.f32 0.0, %v2241
      %v2243 = vpop.f32.mrb[0].mxu0
      %v2244 = vpop.f32.mrb[0].mxu0
      %v2245 = vadd.f32 0.0, %v2244
      %v2246 = vpop.f32.mrb[0].mxu0
      %2247 = vmatprep.mubr.bf16.mxu0 0
      %2248 = vmatmul.mubr.bf16.gmra.mrb[0].mxu0 %v2110
      %v2249 = vpop.f32.mrb[0].mxu0
      %v2250 = vadd.f32 0.0, %v2249
      %v2251 = vpop.f32.mrb[0].mxu0
      %v2252 = vpop.f32.mrb[0].mxu0
      %v2253 = vadd.f32 0.0, %v2252
      %v2254 = vpop.f32.mrb[0].mxu0
      %2255 = vmatprep.mubr.bf16.mxu0 0
      %2256 = vmatmul.mubr.bf16.gmra.mrb[0].mxu0 %v2113
      %v2257 = vpop.f32.mrb[0].mxu0
      %v2258 = vadd.f32 0.0, %v2257
      %v2259 = vpop.f32.mrb[0].mxu0
      %v2260 = vpop.f32.mrb[0].mxu0
      %v2261 = vadd.f32 0.0, %v2260
      %v2262 = vpop.f32.mrb[0].mxu0
      %2263 = vmatprep.mubr.bf16.mxu0 0
      %2264 = vmatmul.mubr.bf16.gmra.mrb[0].mxu0 %v2116
      %v2265 = vpop.f32.mrb[0].mxu0
      %v2266 = vadd.f32 0.0, %v2265
      %v2267 = vpop.f32.mrb[0].mxu0
      %v2268 = vpop.f32.mrb[0].mxu0
      %v2269 = vadd.f32 0.0, %v2268
      %v2270 = vpop.f32.mrb[0].mxu0
      %2271 = vmatprep.mubr.bf16.mxu0 0
      %2272 = vmatmul.mubr.bf16.gmra.mrb[0].mxu0 %v2119
      %v2273 = vpop.f32.mrb[0].mxu0
      %v2274 = vadd.f32 0.0, %v2273
      %v2275 = vpop.f32.mrb[0].mxu0
      %v2276 = vpop.f32.mrb[0].mxu0
      %v2277 = vadd.f32 0.0, %v2276
      %v2278 = vpop.f32.mrb[0].mxu0
      %2279 = vmatprep.mubr.bf16.mxu0 0
      %2280 = vmatmul.mubr.bf16.gmra.mrb[0].mxu0 %v2122
      %v2281 = vpop.f32.mrb[0].mxu0
      %v2282 = vadd.f32 0.0, %v2281
      %v2283 = vpop.f32.mrb[0].mxu0
      %v2284 = vpop.f32.mrb[0].mxu0
      %v2285 = vadd.f32 0.0, %v2284
      %v2286 = vpop.f32.mrb[0].mxu0
      %2287 = vdwg.mxu0
      %v2288 = vadd.f32 %v1993, %v2162
      %v2289 = vadd.f32 %v1994, %v2165
      %v2290 = vadd.f32 %v1995, %v2170
      %v2291 = vadd.f32 %v1996, %v2173
      %v2292 = vadd.f32 %v1997, %v2178
      %v2293 = vadd.f32 %v1998, %v2181
      %v2294 = vadd.f32 %v1999, %v2186
      %v2295 = vadd.f32 %v2000, %v2189
      %v2296 = vadd.f32 %v2001, %v2194
      %v2297 = vadd.f32 %v2002, %v2197
      %v2298 = vadd.f32 %v2003, %v2202
      %v2299 = vadd.f32 %v2004, %v2205
      %v2300 = vadd.f32 %v2005, %v2210
      %v2301 = vadd.f32 %v2006, %v2213
      %v2302 = vadd.f32 %v2007, %v2218
      %v2303 = vadd.f32 %v2008, %v2221
      %v2304 = vadd.f32 %v2009, %v2226
      %v2305 = vadd.f32 %v2010, %v2229
      %v2306 = vadd.f32 %v2011, %v2234
      %v2307 = vadd.f32 %v2012, %v2237
      %v2308 = vadd.f32 %v2013, %v2242
      %v2309 = vadd.f32 %v2014, %v2245
      %v2310 = vadd.f32 %v2015, %v2250
      %v2311 = vadd.f32 %v2016, %v2253
      %v2312 = vadd.f32 %v2017, %v2258
      %v2313 = vadd.f32 %v2018, %v2261
      %v2314 = vadd.f32 %v2019, %v2266
      %v2315 = vadd.f32 %v2020, %v2269
      %v2316 = vadd.f32 %v2021, %v2274
      %v2317 = vadd.f32 %v2022, %v2277
      %v2318 = vadd.f32 %v2023, %v2282
      %v2319 = vadd.f32 %v2024, %v2285
      %v2320 = vld [vmem:[%s2025 + $0x1] sm:$0xff]
      %v2321 = vld [vmem:[%s2025 + $0x9] sm:$0xff]
      %v2322 = vld [vmem:[%s2025 + $0x19] sm:$0xff]
      %v2323 = vld [vmem:[%s2025 + $0x21] sm:$0xff]
      %v2324 = vld [vmem:[%s2025 + $0x31] sm:$0xff]
      %v2325 = vld [vmem:[%s2025 + $0x39] sm:$0xff]
      %v2326 = vld [vmem:[%s2025 + $0x49] sm:$0xff]
      %v2327 = vld [vmem:[%s2025 + $0x51] sm:$0xff]
      %v2328 = vld [vmem:[%s2025 + $0x61] sm:$0xff]
      %v2329 = vld [vmem:[%s2025 + $0x69] sm:$0xff]
      %v2330 = vld [vmem:[%s2025 + $0x79] sm:$0xff]
      %v2331 = vld [vmem:[%s2025 + $0x81] sm:$0xff]
      %v2332 = vld [vmem:[%s2025 + $0x91] sm:$0xff]
      %v2333 = vld [vmem:[%s2025 + $0x99] sm:$0xff]
      %v2334 = vld [vmem:[%s2025 + $0xa9] sm:$0xff]
      %v2335 = vld [vmem:[%s2025 + $0xb1] sm:$0xff]
      %v2336 = vld [vmem:[%s2025 + $0xc1] sm:$0xff]
      %v2337 = vld [vmem:[%s2025 + $0xc9] sm:$0xff]
      %v2338 = vld [vmem:[%s2025 + $0xd9] sm:$0xff]
      %v2339 = vld [vmem:[%s2025 + $0xe1] sm:$0xff]
      %v2340 = vld [vmem:[%s2025 + $0xf1] sm:$0xff]
      %v2341 = vld [vmem:[%s2025 + $0xf9] sm:$0xff]
      %v2342 = vld [vmem:[%s2025 + $0x109] sm:$0xff]
      %v2343 = vld [vmem:[%s2025 + $0x111] sm:$0xff]
      %v2344 = vld [vmem:[%s2025 + $0x121] sm:$0xff]
      %v2345 = vld [vmem:[%s2025 + $0x129] sm:$0xff]
      %v2346 = vld [vmem:[%s2025 + $0x139] sm:$0xff]
      %v2347 = vld [vmem:[%s2025 + $0x141] sm:$0xff]
      %v2348 = vld [vmem:[%s2025 + $0x151] sm:$0xff]
      %v2349 = vld [vmem:[%s2025 + $0x159] sm:$0xff]
      %v2350 = vld [vmem:[%s2025 + $0x169] sm:$0xff]
      %v2351 = vld [vmem:[%s2025 + $0x171] sm:$0xff]
      %v2352 = vpack.c.bf16 %v2321, %v2320
      %v2353 = vpack.c.bf16 %v2323, %v2322
      %v2354 = vpack.c.bf16 %v2325, %v2324
      %v2355 = vpack.c.bf16 %v2327, %v2326
      %v2356 = vpack.c.bf16 %v2329, %v2328
      %v2357 = vpack.c.bf16 %v2331, %v2330
      %v2358 = vpack.c.bf16 %v2333, %v2332
      %v2359 = vpack.c.bf16 %v2335, %v2334
      %v2360 = vpack.c.bf16 %v2337, %v2336
      %v2361 = vpack.c.bf16 %v2339, %v2338
      %v2362 = vpack.c.bf16 %v2341, %v2340
      %v2363 = vpack.c.bf16 %v2343, %v2342
      %v2364 = vpack.c.bf16 %v2345, %v2344
      %v2365 = vpack.c.bf16 %v2347, %v2346
      %v2366 = vpack.c.bf16 %v2349, %v2348
      %v2367 = vpack.c.bf16 %v2351, %v2350
      %s2368 = scalar_lea.vmem %s1, 14
      %v2369 = vld [vmem:[%s2368] sm:$0x3]
      %v2371 = vsel %vm172, %v2352, 0
      %v2374 = vsel %vm172, %v2353, 0
      %v2377 = vsel %vm172, %v2354, 0
      %v2380 = vsel %vm172, %v2355, 0
      %v2383 = vsel %vm172, %v2356, 0
      %v2386 = vsel %vm172, %v2357, 0
      %v2389 = vsel %vm172, %v2358, 0
      %v2392 = vsel %vm172, %v2359, 0
      %v2395 = vsel %vm172, %v2360, 0
      %v2398 = vsel %vm172, %v2361, 0
      %v2401 = vsel %vm172, %v2362, 0
      %v2404 = vsel %vm172, %v2363, 0
      %v2407 = vsel %vm172, %v2364, 0
      %v2410 = vsel %vm172, %v2365, 0
      %v2413 = vsel %vm172, %v2366, 0
      %v2416 = vsel %vm172, %v2367, 0
      %v2419 = vsel %vm472, %v2369, 0
      %2421 = vmatprep.subr.bf16.mxu0 0
      %2422 = vmatpush1.bf16.msra.mxu0 %v2419
      %2423 = vmatprep.subr.bf16.mxu0 0
      %2424 = vmatpush1.bf16.msra.mxu0 0
      %2425 = vmatprep.subr.bf16.mxu0 0
      %2426 = vmatpush1.bf16.msra.mxu0 0
      %2427 = vmatprep.subr.bf16.mxu0 0
      %2428 = vmatpush1.bf16.msra.mxu0 0
      %2429 = vmatprep.subr.bf16.mxu0 0
      %2430 = vmatpush1.bf16.msra.mxu0 0
      %2431 = vmatprep.subr.bf16.mxu0 0
      %2432 = vmatpush1.bf16.msra.mxu0 0
      %2433 = vmatprep.subr.bf16.mxu0 0
      %2434 = vmatpush1.bf16.msra.mxu0 0
      %2435 = vmatprep.subr.bf16.mxu0 0
      %2436 = vmatpush1.bf16.msra.mxu0 0
      %2437 = vmatprep.subr.bf16.mxu0 0
      %2438 = vmatpush1.bf16.msra.mxu0 0
      %2439 = vmatprep.subr.bf16.mxu0 0
      %2440 = vmatpush1.bf16.msra.mxu0 0
      %2441 = vmatprep.subr.bf16.mxu0 0
      %2442 = vmatpush1.bf16.msra.mxu0 0
      %2443 = vmatprep.subr.bf16.mxu0 0
      %2444 = vmatpush1.bf16.msra.mxu0 0
      %2445 = vmatprep.subr.bf16.mxu0 0
      %2446 = vmatpush1.bf16.msra.mxu0 0
      %2447 = vmatprep.subr.bf16.mxu0 0
      %2448 = vmatpush1.bf16.msra.mxu0 0
      %2449 = vmatprep.subr.bf16.mxu0 0
      %2450 = vmatpush1.bf16.msra.mxu0 0
      %2451 = vmatprep.subr.bf16.mxu0 0
      %2452 = vmatpush1.bf16.msra.mxu0 0
      %2453 = vmatprep.mubr.bf16.mxu0 0
      %2454 = vmatmul.mubr.bf16.gmra.mrb[0].mxu0 %v2371
      %v2455 = vpop.f32.mrb[0].mxu0
      %v2456 = vadd.f32 0.0, %v2455
      %v2457 = vpop.f32.mrb[0].mxu0
      %v2458 = vpop.f32.mrb[0].mxu0
      %v2459 = vadd.f32 0.0, %v2458
      %v2460 = vpop.f32.mrb[0].mxu0
      %2461 = vmatprep.mubr.bf16.mxu0 0
      %2462 = vmatmul.mubr.bf16.gmra.mrb[0].mxu0 %v2374
      %v2463 = vpop.f32.mrb[0].mxu0
      %v2464 = vadd.f32 0.0, %v2463
      %v2465 = vpop.f32.mrb[0].mxu0
      %v2466 = vpop.f32.mrb[0].mxu0
      %v2467 = vadd.f32 0.0, %v2466
      %v2468 = vpop.f32.mrb[0].mxu0
      %2469 = vmatprep.mubr.bf16.mxu0 0
      %2470 = vmatmul.mubr.bf16.gmra.mrb[0].mxu0 %v2377
      %v2471 = vpop.f32.mrb[0].mxu0
      %v2472 = vadd.f32 0.0, %v2471
      %v2473 = vpop.f32.mrb[0].mxu0
      %v2474 = vpop.f32.mrb[0].mxu0
      %v2475 = vadd.f32 0.0, %v2474
      %v2476 = vpop.f32.mrb[0].mxu0
      %2477 = vmatprep.mubr.bf16.mxu0 0
      %2478 = vmatmul.mubr.bf16.gmra.mrb[0].mxu0 %v2380
      %v2479 = vpop.f32.mrb[0].mxu0
      %v2480 = vadd.f32 0.0, %v2479
      %v2481 = vpop.f32.mrb[0].mxu0
      %v2482 = vpop.f32.mrb[0].mxu0
      %v2483 = vadd.f32 0.0, %v2482
      %v2484 = vpop.f32.mrb[0].mxu0
      %2485 = vmatprep.mubr.bf16.mxu0 0
      %2486 = vmatmul.mubr.bf16.gmra.mrb[0].mxu0 %v2383
      %v2487 = vpop.f32.mrb[0].mxu0
      %v2488 = vadd.f32 0.0, %v2487
      %v2489 = vpop.f32.mrb[0].mxu0
      %v2490 = vpop.f32.mrb[0].mxu0
      %v2491 = vadd.f32 0.0, %v2490
      %v2492 = vpop.f32.mrb[0].mxu0
      %2493 = vmatprep.mubr.bf16.mxu0 0
      %2494 = vmatmul.mubr.bf16.gmra.mrb[0].mxu0 %v2386
      %v2495 = vpop.f32.mrb[0].mxu0
      %v2496 = vadd.f32 0.0, %v2495
      %v2497 = vpop.f32.mrb[0].mxu0
      %v2498 = vpop.f32.mrb[0].mxu0
      %v2499 = vadd.f32 0.0, %v2498
      %v2500 = vpop.f32.mrb[0].mxu0
      %2501 = vmatprep.mubr.bf16.mxu0 0
      %2502 = vmatmul.mubr.bf16.gmra.mrb[0].mxu0 %v2389
      %v2503 = vpop.f32.mrb[0].mxu0
      %v2504 = vadd.f32 0.0, %v2503
      %v2505 = vpop.f32.mrb[0].mxu0
      %v2506 = vpop.f32.mrb[0].mxu0
      %v2507 = vadd.f32 0.0, %v2506
      %v2508 = vpop.f32.mrb[0].mxu0
      %2509 = vmatprep.mubr.bf16.mxu0 0
      %2510 = vmatmul.mubr.bf16.gmra.mrb[0].mxu0 %v2392
      %v2511 = vpop.f32.mrb[0].mxu0
      %v2512 = vadd.f32 0.0, %v2511
      %v2513 = vpop.f32.mrb[0].mxu0
      %v2514 = vpop.f32.mrb[0].mxu0
      %v2515 = vadd.f32 0.0, %v2514
      %v2516 = vpop.f32.mrb[0].mxu0
      %2517 = vmatprep.mubr.bf16.mxu0 0
      %2518 = vmatmul.mubr.bf16.gmra.mrb[0].mxu0 %v2395
      %v2519 = vpop.f32.mrb[0].mxu0
      %v2520 = vadd.f32 0.0, %v2519
      %v2521 = vpop.f32.mrb[0].mxu0
      %v2522 = vpop.f32.mrb[0].mxu0
      %v2523 = vadd.f32 0.0, %v2522
      %v2524 = vpop.f32.mrb[0].mxu0
      %2525 = vmatprep.mubr.bf16.mxu0 0
      %2526 = vmatmul.mubr.bf16.gmra.mrb[0].mxu0 %v2398
      %v2527 = vpop.f32.mrb[0].mxu0
      %v2528 = vadd.f32 0.0, %v2527
      %v2529 = vpop.f32.mrb[0].mxu0
      %v2530 = vpop.f32.mrb[0].mxu0
      %v2531 = vadd.f32 0.0, %v2530
      %v2532 = vpop.f32.mrb[0].mxu0
      %2533 = vmatprep.mubr.bf16.mxu0 0
      %2534 = vmatmul.mubr.bf16.gmra.mrb[0].mxu0 %v2401
      %v2535 = vpop.f32.mrb[0].mxu0
      %v2536 = vadd.f32 0.0, %v2535
      %v2537 = vpop.f32.mrb[0].mxu0
      %v2538 = vpop.f32.mrb[0].mxu0
      %v2539 = vadd.f32 0.0, %v2538
      %v2540 = vpop.f32.mrb[0].mxu0
      %2541 = vmatprep.mubr.bf16.mxu0 0
      %2542 = vmatmul.mubr.bf16.gmra.mrb[0].mxu0 %v2404
      %v2543 = vpop.f32.mrb[0].mxu0
      %v2544 = vadd.f32 0.0, %v2543
      %v2545 = vpop.f32.mrb[0].mxu0
      %v2546 = vpop.f32.mrb[0].mxu0
      %v2547 = vadd.f32 0.0, %v2546
      %v2548 = vpop.f32.mrb[0].mxu0
      %2549 = vmatprep.mubr.bf16.mxu0 0
      %2550 = vmatmul.mubr.bf16.gmra.mrb[0].mxu0 %v2407
      %v2551 = vpop.f32.mrb[0].mxu0
      %v2552 = vadd.f32 0.0, %v2551
      %v2553 = vpop.f32.mrb[0].mxu0
      %v2554 = vpop.f32.mrb[0].mxu0
      %v2555 = vadd.f32 0.0, %v2554
      %v2556 = vpop.f32.mrb[0].mxu0
      %2557 = vmatprep.mubr.bf16.mxu0 0
      %2558 = vmatmul.mubr.bf16.gmra.mrb[0].mxu0 %v2410
      %v2559 = vpop.f32.mrb[0].mxu0
      %v2560 = vadd.f32 0.0, %v2559
      %v2561 = vpop.f32.mrb[0].mxu0
      %v2562 = vpop.f32.mrb[0].mxu0
      %v2563 = vadd.f32 0.0, %v2562
      %v2564 = vpop.f32.mrb[0].mxu0
      %2565 = vmatprep.mubr.bf16.mxu0 0
      %2566 = vmatmul.mubr.bf16.gmra.mrb[0].mxu0 %v2413
      %v2567 = vpop.f32.mrb[0].mxu0
      %v2568 = vadd.f32 0.0, %v2567
      %v2569 = vpop.f32.mrb[0].mxu0
      %v2570 = vpop.f32.mrb[0].mxu0
      %v2571 = vadd.f32 0.0, %v2570
      %v2572 = vpop.f32.mrb[0].mxu0
      %2573 = vmatprep.mubr.bf16.mxu0 0
      %2574 = vmatmul.mubr.bf16.gmra.mrb[0].mxu0 %v2416
      %v2575 = vpop.f32.mrb[0].mxu0
      %v2576 = vadd.f32 0.0, %v2575
      %v2577 = vpop.f32.mrb[0].mxu0
      %v2578 = vpop.f32.mrb[0].mxu0
      %v2579 = vadd.f32 0.0, %v2578
      %v2580 = vpop.f32.mrb[0].mxu0
      %2581 = vdwg.mxu0
      %v2582 = vadd.f32 %v2288, %v2456
      %v2583 = vadd.f32 %v2289, %v2459
      %v2584 = vadd.f32 %v2290, %v2464
      %v2585 = vadd.f32 %v2291, %v2467
      %v2586 = vadd.f32 %v2292, %v2472
      %v2587 = vadd.f32 %v2293, %v2475
      %v2588 = vadd.f32 %v2294, %v2480
      %v2589 = vadd.f32 %v2295, %v2483
      %v2590 = vadd.f32 %v2296, %v2488
      %v2591 = vadd.f32 %v2297, %v2491
      %v2592 = vadd.f32 %v2298, %v2496
      %v2593 = vadd.f32 %v2299, %v2499
      %v2594 = vadd.f32 %v2300, %v2504
      %v2595 = vadd.f32 %v2301, %v2507
      %v2596 = vadd.f32 %v2302, %v2512
      %v2597 = vadd.f32 %v2303, %v2515
      %v2598 = vadd.f32 %v2304, %v2520
      %v2599 = vadd.f32 %v2305, %v2523
      %v2600 = vadd.f32 %v2306, %v2528
      %v2601 = vadd.f32 %v2307, %v2531
      %v2602 = vadd.f32 %v2308, %v2536
      %v2603 = vadd.f32 %v2309, %v2539
      %v2604 = vadd.f32 %v2310, %v2544
      %v2605 = vadd.f32 %v2311, %v2547
      %v2606 = vadd.f32 %v2312, %v2552
      %v2607 = vadd.f32 %v2313, %v2555
      %v2608 = vadd.f32 %v2314, %v2560
      %v2609 = vadd.f32 %v2315, %v2563
      %v2610 = vadd.f32 %v2316, %v2568
      %v2611 = vadd.f32 %v2317, %v2571
      %v2612 = vadd.f32 %v2318, %v2576
      %v2613 = vadd.f32 %v2319, %v2579
      %v2614 = vld [vmem:[%s2025 + $0x2] sm:$0xff]
      %v2615 = vld [vmem:[%s2025 + $0xa] sm:$0xff]
      %v2616 = vld [vmem:[%s2025 + $0x1a] sm:$0xff]
      %v2617 = vld [vmem:[%s2025 + $0x22] sm:$0xff]
      %v2618 = vld [vmem:[%s2025 + $0x32] sm:$0xff]
      %v2619 = vld [vmem:[%s2025 + $0x3a] sm:$0xff]
      %v2620 = vld [vmem:[%s2025 + $0x4a] sm:$0xff]
      %v2621 = vld [vmem:[%s2025 + $0x52] sm:$0xff]
      %v2622 = vld [vmem:[%s2025 + $0x62] sm:$0xff]
      %v2623 = vld [vmem:[%s2025 + $0x6a] sm:$0xff]
      %v2624 = vld [vmem:[%s2025 + $0x7a] sm:$0xff]
      %v2625 = vld [vmem:[%s2025 + $0x82] sm:$0xff]
      %v2626 = vld [vmem:[%s2025 + $0x92] sm:$0xff]
      %v2627 = vld [vmem:[%s2025 + $0x9a] sm:$0xff]
      %v2628 = vld [vmem:[%s2025 + $0xaa] sm:$0xff]
      %v2629 = vld [vmem:[%s2025 + $0xb2] sm:$0xff]
      %v2630 = vld [vmem:[%s2025 + $0xc2] sm:$0xff]
      %v2631 = vld [vmem:[%s2025 + $0xca] sm:$0xff]
      %v2632 = vld [vmem:[%s2025 + $0xda] sm:$0xff]
      %v2633 = vld [vmem:[%s2025 + $0xe2] sm:$0xff]
      %v2634 = vld [vmem:[%s2025 + $0xf2] sm:$0xff]
      %v2635 = vld [vmem:[%s2025 + $0xfa] sm:$0xff]
      %v2636 = vld [vmem:[%s2025 + $0x10a] sm:$0xff]
      %v2637 = vld [vmem:[%s2025 + $0x112] sm:$0xff]
      %v2638 = vld [vmem:[%s2025 + $0x122] sm:$0xff]
      %v2639 = vld [vmem:[%s2025 + $0x12a] sm:$0xff]
      %v2640 = vld [vmem:[%s2025 + $0x13a] sm:$0xff]
      %v2641 = vld [vmem:[%s2025 + $0x142] sm:$0xff]
      %v2642 = vld [vmem:[%s2025 + $0x152] sm:$0xff]
      %v2643 = vld [vmem:[%s2025 + $0x15a] sm:$0xff]
      %v2644 = vld [vmem:[%s2025 + $0x16a] sm:$0xff]
      %v2645 = vld [vmem:[%s2025 + $0x172] sm:$0xff]
      %v2646 = vpack.c.bf16 %v2615, %v2614
      %v2647 = vpack.c.bf16 %v2617, %v2616
      %v2648 = vpack.c.bf16 %v2619, %v2618
      %v2649 = vpack.c.bf16 %v2621, %v2620
      %v2650 = vpack.c.bf16 %v2623, %v2622
      %v2651 = vpack.c.bf16 %v2625, %v2624
      %v2652 = vpack.c.bf16 %v2627, %v2626
      %v2653 = vpack.c.bf16 %v2629, %v2628
      %v2654 = vpack.c.bf16 %v2631, %v2630
      %v2655 = vpack.c.bf16 %v2633, %v2632
      %v2656 = vpack.c.bf16 %v2635, %v2634
      %v2657 = vpack.c.bf16 %v2637, %v2636
      %v2658 = vpack.c.bf16 %v2639, %v2638
      %v2659 = vpack.c.bf16 %v2641, %v2640
      %v2660 = vpack.c.bf16 %v2643, %v2642
      %v2661 = vpack.c.bf16 %v2645, %v2644
      %s2662 = scalar_lea.vmem %s1, 16
      %v2663 = vld [vmem:[%s2662] sm:$0x3]
      %v2665 = vsel %vm172, %v2646, 0
      %v2668 = vsel %vm172, %v2647, 0
      %v2671 = vsel %vm172, %v2648, 0
      %v2674 = vsel %vm172, %v2649, 0
      %v2677 = vsel %vm172, %v2650, 0
      %v2680 = vsel %vm172, %v2651, 0
      %v2683 = vsel %vm172, %v2652, 0
      %v2686 = vsel %vm172, %v2653, 0
      %v2689 = vsel %vm172, %v2654, 0
      %v2692 = vsel %vm172, %v2655, 0
      %v2695 = vsel %vm172, %v2656, 0
      %v2698 = vsel %vm172, %v2657, 0
      %v2701 = vsel %vm172, %v2658, 0
      %v2704 = vsel %vm172, %v2659, 0
      %v2707 = vsel %vm172, %v2660, 0
      %v2710 = vsel %vm172, %v2661, 0
      %v2713 = vsel %vm472, %v2663, 0
      %2715 = vmatprep.subr.bf16.mxu0 0
      %2716 = vmatpush1.bf16.msra.mxu0 %v2713
      %2717 = vmatprep.subr.bf16.mxu0 0
      %2718 = vmatpush1.bf16.msra.mxu0 0
      %2719 = vmatprep.subr.bf16.mxu0 0
      %2720 = vmatpush1.bf16.msra.mxu0 0
      %2721 = vmatprep.subr.bf16.mxu0 0
      %2722 = vmatpush1.bf16.msra.mxu0 0
      %2723 = vmatprep.subr.bf16.mxu0 0
      %2724 = vmatpush1.bf16.msra.mxu0 0
      %2725 = vmatprep.subr.bf16.mxu0 0
      %2726 = vmatpush1.bf16.msra.mxu0 0
      %2727 = vmatprep.subr.bf16.mxu0 0
      %2728 = vmatpush1.bf16.msra.mxu0 0
      %2729 = vmatprep.subr.bf16.mxu0 0
      %2730 = vmatpush1.bf16.msra.mxu0 0
      %2731 = vmatprep.subr.bf16.mxu0 0
      %2732 = vmatpush1.bf16.msra.mxu0 0
      %2733 = vmatprep.subr.bf16.mxu0 0
      %2734 = vmatpush1.bf16.msra.mxu0 0
      %2735 = vmatprep.subr.bf16.mxu0 0
      %2736 = vmatpush1.bf16.msra.mxu0 0
      %2737 = vmatprep.subr.bf16.mxu0 0
      %2738 = vmatpush1.bf16.msra.mxu0 0
      %2739 = vmatprep.subr.bf16.mxu0 0
      %2740 = vmatpush1.bf16.msra.mxu0 0
      %2741 = vmatprep.subr.bf16.mxu0 0
      %2742 = vmatpush1.bf16.msra.mxu0 0
      %2743 = vmatprep.subr.bf16.mxu0 0
      %2744 = vmatpush1.bf16.msra.mxu0 0
      %2745 = vmatprep.subr.bf16.mxu0 0
      %2746 = vmatpush1.bf16.msra.mxu0 0
      %2747 = vmatprep.mubr.bf16.mxu0 0
      %2748 = vmatmul.mubr.bf16.gmra.mrb[0].mxu0 %v2665
      %v2749 = vpop.f32.mrb[0].mxu0
      %v2750 = vadd.f32 0.0, %v2749
      %v2751 = vpop.f32.mrb[0].mxu0
      %v2752 = vpop.f32.mrb[0].mxu0
      %v2753 = vadd.f32 0.0, %v2752
      %v2754 = vpop.f32.mrb[0].mxu0
      %2755 = vmatprep.mubr.bf16.mxu0 0
      %2756 = vmatmul.mubr.bf16.gmra.mrb[0].mxu0 %v2668
      %v2757 = vpop.f32.mrb[0].mxu0
      %v2758 = vadd.f32 0.0, %v2757
      %v2759 = vpop.f32.mrb[0].mxu0
      %v2760 = vpop.f32.mrb[0].mxu0
      %v2761 = vadd.f32 0.0, %v2760
      %v2762 = vpop.f32.mrb[0].mxu0
      %2763 = vmatprep.mubr.bf16.mxu0 0
      %2764 = vmatmul.mubr.bf16.gmra.mrb[0].mxu0 %v2671
      %v2765 = vpop.f32.mrb[0].mxu0
      %v2766 = vadd.f32 0.0, %v2765
      %v2767 = vpop.f32.mrb[0].mxu0
      %v2768 = vpop.f32.mrb[0].mxu0
      %v2769 = vadd.f32 0.0, %v2768
      %v2770 = vpop.f32.mrb[0].mxu0
      %2771 = vmatprep.mubr.bf16.mxu0 0
      %2772 = vmatmul.mubr.bf16.gmra.mrb[0].mxu0 %v2674
      %v2773 = vpop.f32.mrb[0].mxu0
      %v2774 = vadd.f32 0.0, %v2773
      %v2775 = vpop.f32.mrb[0].mxu0
      %v2776 = vpop.f32.mrb[0].mxu0
      %v2777 = vadd.f32 0.0, %v2776
      %v2778 = vpop.f32.mrb[0].mxu0
      %2779 = vmatprep.mubr.bf16.mxu0 0
      %2780 = vmatmul.mubr.bf16.gmra.mrb[0].mxu0 %v2677
      %v2781 = vpop.f32.mrb[0].mxu0
      %v2782 = vadd.f32 0.0, %v2781
      %v2783 = vpop.f32.mrb[0].mxu0
      %v2784 = vpop.f32.mrb[0].mxu0
      %v2785 = vadd.f32 0.0, %v2784
      %v2786 = vpop.f32.mrb[0].mxu0
      %2787 = vmatprep.mubr.bf16.mxu0 0
      %2788 = vmatmul.mubr.bf16.gmra.mrb[0].mxu0 %v2680
      %v2789 = vpop.f32.mrb[0].mxu0
      %v2790 = vadd.f32 0.0, %v2789
      %v2791 = vpop.f32.mrb[0].mxu0
      %v2792 = vpop.f32.mrb[0].mxu0
      %v2793 = vadd.f32 0.0, %v2792
      %v2794 = vpop.f32.mrb[0].mxu0
      %2795 = vmatprep.mubr.bf16.mxu0 0
      %2796 = vmatmul.mubr.bf16.gmra.mrb[0].mxu0 %v2683
      %v2797 = vpop.f32.mrb[0].mxu0
      %v2798 = vadd.f32 0.0, %v2797
      %v2799 = vpop.f32.mrb[0].mxu0
      %v2800 = vpop.f32.mrb[0].mxu0
      %v2801 = vadd.f32 0.0, %v2800
      %v2802 = vpop.f32.mrb[0].mxu0
      %2803 = vmatprep.mubr.bf16.mxu0 0
      %2804 = vmatmul.mubr.bf16.gmra.mrb[0].mxu0 %v2686
      %v2805 = vpop.f32.mrb[0].mxu0
      %v2806 = vadd.f32 0.0, %v2805
      %v2807 = vpop.f32.mrb[0].mxu0
      %v2808 = vpop.f32.mrb[0].mxu0
      %v2809 = vadd.f32 0.0, %v2808
      %v2810 = vpop.f32.mrb[0].mxu0
      %2811 = vmatprep.mubr.bf16.mxu0 0
      %2812 = vmatmul.mubr.bf16.gmra.mrb[0].mxu0 %v2689
      %v2813 = vpop.f32.mrb[0].mxu0
      %v2814 = vadd.f32 0.0, %v2813
      %v2815 = vpop.f32.mrb[0].mxu0
      %v2816 = vpop.f32.mrb[0].mxu0
      %v2817 = vadd.f32 0.0, %v2816
      %v2818 = vpop.f32.mrb[0].mxu0
      %2819 = vmatprep.mubr.bf16.mxu0 0
      %2820 = vmatmul.mubr.bf16.gmra.mrb[0].mxu0 %v2692
      %v2821 = vpop.f32.mrb[0].mxu0
      %v2822 = vadd.f32 0.0, %v2821
      %v2823 = vpop.f32.mrb[0].mxu0
      %v2824 = vpop.f32.mrb[0].mxu0
      %v2825 = vadd.f32 0.0, %v2824
      %v2826 = vpop.f32.mrb[0].mxu0
      %2827 = vmatprep.mubr.bf16.mxu0 0
      %2828 = vmatmul.mubr.bf16.gmra.mrb[0].mxu0 %v2695
      %v2829 = vpop.f32.mrb[0].mxu0
      %v2830 = vadd.f32 0.0, %v2829
      %v2831 = vpop.f32.mrb[0].mxu0
      %v2832 = vpop.f32.mrb[0].mxu0
      %v2833 = vadd.f32 0.0, %v2832
      %v2834 = vpop.f32.mrb[0].mxu0
      %2835 = vmatprep.mubr.bf16.mxu0 0
      %2836 = vmatmul.mubr.bf16.gmra.mrb[0].mxu0 %v2698
      %v2837 = vpop.f32.mrb[0].mxu0
      %v2838 = vadd.f32 0.0, %v2837
      %v2839 = vpop.f32.mrb[0].mxu0
      %v2840 = vpop.f32.mrb[0].mxu0
      %v2841 = vadd.f32 0.0, %v2840
      %v2842 = vpop.f32.mrb[0].mxu0
      %2843 = vmatprep.mubr.bf16.mxu0 0
      %2844 = vmatmul.mubr.bf16.gmra.mrb[0].mxu0 %v2701
      %v2845 = vpop.f32.mrb[0].mxu0
      %v2846 = vadd.f32 0.0, %v2845
      %v2847 = vpop.f32.mrb[0].mxu0
      %v2848 = vpop.f32.mrb[0].mxu0
      %v2849 = vadd.f32 0.0, %v2848
      %v2850 = vpop.f32.mrb[0].mxu0
      %2851 = vmatprep.mubr.bf16.mxu0 0
      %2852 = vmatmul.mubr.bf16.gmra.mrb[0].mxu0 %v2704
      %v2853 = vpop.f32.mrb[0].mxu0
      %v2854 = vadd.f32 0.0, %v2853
      %v2855 = vpop.f32.mrb[0].mxu0
      %v2856 = vpop.f32.mrb[0].mxu0
      %v2857 = vadd.f32 0.0, %v2856
      %v2858 = vpop.f32.mrb[0].mxu0
      %2859 = vmatprep.mubr.bf16.mxu0 0
      %2860 = vmatmul.mubr.bf16.gmra.mrb[0].mxu0 %v2707
      %v2861 = vpop.f32.mrb[0].mxu0
      %v2862 = vadd.f32 0.0, %v2861
      %v2863 = vpop.f32.mrb[0].mxu0
      %v2864 = vpop.f32.mrb[0].mxu0
      %v2865 = vadd.f32 0.0, %v2864
      %v2866 = vpop.f32.mrb[0].mxu0
      %2867 = vmatprep.mubr.bf16.mxu0 0
      %2868 = vmatmul.mubr.bf16.gmra.mrb[0].mxu0 %v2710
      %v2869 = vpop.f32.mrb[0].mxu0
      %v2870 = vadd.f32 0.0, %v2869
      %v2871 = vpop.f32.mrb[0].mxu0
      %v2872 = vpop.f32.mrb[0].mxu0
      %v2873 = vadd.f32 0.0, %v2872
      %v2874 = vpop.f32.mrb[0].mxu0
      %2875 = vdwg.mxu0
      %v2876 = vadd.f32 %v2582, %v2750
      %v2877 = vadd.f32 %v2583, %v2753
      %v2878 = vadd.f32 %v2584, %v2758
      %v2879 = vadd.f32 %v2585, %v2761
      %v2880 = vadd.f32 %v2586, %v2766
      %v2881 = vadd.f32 %v2587, %v2769
      %v2882 = vadd.f32 %v2588, %v2774
      %v2883 = vadd.f32 %v2589, %v2777
      %v2884 = vadd.f32 %v2590, %v2782
      %v2885 = vadd.f32 %v2591, %v2785
      %v2886 = vadd.f32 %v2592, %v2790
      %v2887 = vadd.f32 %v2593, %v2793
      %v2888 = vadd.f32 %v2594, %v2798
      %v2889 = vadd.f32 %v2595, %v2801
      %v2890 = vadd.f32 %v2596, %v2806
      %v2891 = vadd.f32 %v2597, %v2809
      %v2892 = vadd.f32 %v2598, %v2814
      %v2893 = vadd.f32 %v2599, %v2817
      %v2894 = vadd.f32 %v2600, %v2822
      %v2895 = vadd.f32 %v2601, %v2825
      %v2896 = vadd.f32 %v2602, %v2830
      %v2897 = vadd.f32 %v2603, %v2833
      %v2898 = vadd.f32 %v2604, %v2838
      %v2899 = vadd.f32 %v2605, %v2841
      %v2900 = vadd.f32 %v2606, %v2846
      %v2901 = vadd.f32 %v2607, %v2849
      %v2902 = vadd.f32 %v2608, %v2854
      %v2903 = vadd.f32 %v2609, %v2857
      %v2904 = vadd.f32 %v2610, %v2862
      %v2905 = vadd.f32 %v2611, %v2865
      %v2906 = vadd.f32 %v2612, %v2870
      %v2907 = vadd.f32 %v2613, %v2873
      %v2908 = vld [vmem:[%s2] sm:$0x1]
      %v2910 = vlaneseq
      %v2911 = vshrl.u32 %v2910, 7
      %v2912 = vsub.s32 0, %v2911
      %v2913 = vrot.slane %v2908, %v2912
      %v2915 = vadd.f32 %v2876, %v2913
      %v2916 = vadd.f32 %v2877, %v2913
      %v2917 = vadd.f32 %v2878, %v2913
      %v2918 = vadd.f32 %v2879, %v2913
      %v2919 = vadd.f32 %v2880, %v2913
      %v2920 = vadd.f32 %v2881, %v2913
      %v2921 = vadd.f32 %v2882, %v2913
      %v2922 = vadd.f32 %v2883, %v2913
      %v2923 = vadd.f32 %v2884, %v2913
      %v2924 = vadd.f32 %v2885, %v2913
      %v2925 = vadd.f32 %v2886, %v2913
      %v2926 = vadd.f32 %v2887, %v2913
      %v2927 = vadd.f32 %v2888, %v2913
      %v2928 = vadd.f32 %v2889, %v2913
      %v2929 = vadd.f32 %v2890, %v2913
      %v2930 = vadd.f32 %v2891, %v2913
      %v2931 = vadd.f32 %v2892, %v2913
      %v2932 = vadd.f32 %v2893, %v2913
      %v2933 = vadd.f32 %v2894, %v2913
      %v2934 = vadd.f32 %v2895, %v2913
      %v2935 = vadd.f32 %v2896, %v2913
      %v2936 = vadd.f32 %v2897, %v2913
      %v2937 = vadd.f32 %v2898, %v2913
      %v2938 = vadd.f32 %v2899, %v2913
      %v2939 = vadd.f32 %v2900, %v2913
      %v2940 = vadd.f32 %v2901, %v2913
      %v2941 = vadd.f32 %v2902, %v2913
      %v2942 = vadd.f32 %v2903, %v2913
      %v2943 = vadd.f32 %v2904, %v2913
      %v2944 = vadd.f32 %v2905, %v2913
      %v2945 = vadd.f32 %v2906, %v2913
      %v2946 = vadd.f32 %v2907, %v2913
      %v2947 = vmax.f32 %v2915, 0.0
      %v2948 = vmax.f32 %v2916, 0.0
      %v2949 = vmax.f32 %v2917, 0.0
      %v2950 = vmax.f32 %v2918, 0.0
      %v2951 = vmax.f32 %v2919, 0.0
      %v2952 = vmax.f32 %v2920, 0.0
      %v2953 = vmax.f32 %v2921, 0.0
      %v2954 = vmax.f32 %v2922, 0.0
      %v2955 = vmax.f32 %v2923, 0.0
      %v2956 = vmax.f32 %v2924, 0.0
      %v2957 = vmax.f32 %v2925, 0.0
      %v2958 = vmax.f32 %v2926, 0.0
      %v2959 = vmax.f32 %v2927, 0.0
      %v2960 = vmax.f32 %v2928, 0.0
      %v2961 = vmax.f32 %v2929, 0.0
      %v2962 = vmax.f32 %v2930, 0.0
      %v2963 = vmax.f32 %v2931, 0.0
      %v2964 = vmax.f32 %v2932, 0.0
      %v2965 = vmax.f32 %v2933, 0.0
      %v2966 = vmax.f32 %v2934, 0.0
      %v2967 = vmax.f32 %v2935, 0.0
      %v2968 = vmax.f32 %v2936, 0.0
      %v2969 = vmax.f32 %v2937, 0.0
      %v2970 = vmax.f32 %v2938, 0.0
      %v2971 = vmax.f32 %v2939, 0.0
      %v2972 = vmax.f32 %v2940, 0.0
      %v2973 = vmax.f32 %v2941, 0.0
      %v2974 = vmax.f32 %v2942, 0.0
      %v2975 = vmax.f32 %v2943, 0.0
      %v2976 = vmax.f32 %v2944, 0.0
      %v2977 = vmax.f32 %v2945, 0.0
      %v2978 = vmax.f32 %v2946, 0.0
      %vm2979 = vcmask 64512
      %2980 = vst.msk [vmem:[%s170] sm:$0xff] %vm2979, %v2947
      %2981 = vst.msk [vmem:[%s170 + $0x8] sm:$0xff] %vm2979, %v2948
      %2982 = vst.msk [vmem:[%s170 + $0x10] sm:$0xff] %vm2979, %v2949
      %2983 = vst.msk [vmem:[%s170 + $0x18] sm:$0xff] %vm2979, %v2950
      %2984 = vst.msk [vmem:[%s170 + $0x20] sm:$0xff] %vm2979, %v2951
      %2985 = vst.msk [vmem:[%s170 + $0x28] sm:$0xff] %vm2979, %v2952
      %2986 = vst.msk [vmem:[%s170 + $0x30] sm:$0xff] %vm2979, %v2953
      %2987 = vst.msk [vmem:[%s170 + $0x38] sm:$0xff] %vm2979, %v2954
      %2988 = vst.msk [vmem:[%s170 + $0x40] sm:$0xff] %vm2979, %v2955
      %2989 = vst.msk [vmem:[%s170 + $0x48] sm:$0xff] %vm2979, %v2956
      %2990 = vst.msk [vmem:[%s170 + $0x50] sm:$0xff] %vm2979, %v2957
      %2991 = vst.msk [vmem:[%s170 + $0x58] sm:$0xff] %vm2979, %v2958
      %2992 = vst.msk [vmem:[%s170 + $0x60] sm:$0xff] %vm2979, %v2959
      %2993 = vst.msk [vmem:[%s170 + $0x68] sm:$0xff] %vm2979, %v2960
      %2994 = vst.msk [vmem:[%s170 + $0x70] sm:$0xff] %vm2979, %v2961
      %2995 = vst.msk [vmem:[%s170 + $0x78] sm:$0xff] %vm2979, %v2962
      %2996 = vst.msk [vmem:[%s170 + $0x80] sm:$0xff] %vm2979, %v2963
      %2997 = vst.msk [vmem:[%s170 + $0x88] sm:$0xff] %vm2979, %v2964
      %2998 = vst.msk [vmem:[%s170 + $0x90] sm:$0xff] %vm2979, %v2965
      %2999 = vst.msk [vmem:[%s170 + $0x98] sm:$0xff] %vm2979, %v2966
      %3000 = vst.msk [vmem:[%s170 + $0xa0] sm:$0xff] %vm2979, %v2967
      %3001 = vst.msk [vmem:[%s170 + $0xa8] sm:$0xff] %vm2979, %v2968
      %3002 = vst.msk [vmem:[%s170 + $0xb0] sm:$0xff] %vm2979, %v2969
      %3003 = vst.msk [vmem:[%s170 + $0xb8] sm:$0xff] %vm2979, %v2970
      %3004 = vst.msk [vmem:[%s170 + $0xc0] sm:$0xff] %vm2979, %v2971
      %3005 = vst.msk [vmem:[%s170 + $0xc8] sm:$0xff] %vm2979, %v2972
      %3006 = vst.msk [vmem:[%s170 + $0xd0] sm:$0xff] %vm2979, %v2973
      %3007 = vst.msk [vmem:[%s170 + $0xd8] sm:$0xff] %vm2979, %v2974
      %3008 = vst.msk [vmem:[%s170 + $0xe0] sm:$0xff] %vm2979, %v2975
      %3009 = vst.msk [vmem:[%s170 + $0xe8] sm:$0xff] %vm2979, %v2976
      %3010 = vst.msk [vmem:[%s170 + $0xf0] sm:$0xff] %vm2979, %v2977
      %3011 = vst.msk [vmem:[%s170 + $0xf8] sm:$0xff] %vm2979, %v2978
      %p3012 = scmp.lt.s32.totalorder %s14, 1
      %s3013 = scalar_select %p3012, %s14, 1
      %s3014 = smul.addr %s3013, 32
      %s3015 = smul.addr %s3014, 8
      %s3016 = scalar_lea.vmem %s3, %s3015
      // Predicated region
      $region33: #{inception_forward.5} parent=31 // pred_check
        %p3017 = pneg %p100
      $region34: #{inception_forward.5} parent=31 // pred_check_branch
        %3019 = sbr.rel (%p3017) target = $region36
      $region35: #{inception_forward.5} parent=31 // pred_region
        _
      $region36: #{inception_forward.5} parent=31 // pred_fallthru
        _
    $region32: #{inception_forward.5} parent=5 // pred_fallthru
      _
    %p3020 = scmp.le.s32.totalorder 2, %s9
    // Predicated region
    $region37: #{inception_forward.5} parent=5 // pred_check
      %p3021 = pneg %p3020
    $region38: #{inception_forward.5} parent=5 // pred_check_branch
      %3023 = sbr.rel (%p3021) target = $region40
    $region39: #{inception_forward.5} parent=5 // pred_region
      %s3024 = ssub.s32 %s9, 2
      // Predicated region
      $region41: #{inception_forward.5} parent=39 // pred_check
        %p3025 = pneg %p106
      $region42: #{inception_forward.5} parent=39 // pred_check_branch
        %3027 = sbr.rel (%p3025) target = $region44
      $region43: #{inception_forward.5} parent=39 // pred_region
        %p3028 = scmp.lt.s32.totalorder %s15, 1
        %s3029 = scalar_select %p3028, %s15, 1
        %s3030 = smul.addr %s3029, 32
        %s3031 = smul.addr %s3030, 8
        %s3032 = scalar_lea.vmem %s3, %s3031
      $region44: #{inception_forward.5} parent=39 // pred_fallthru
        _
    $region40: #{inception_forward.5} parent=5 // pred_fallthru
      _
  $region6: #{inception_forward.5} parent=0 // loop_footer
    %s13 = sadd.s32 1, %s9
  $region7: #{inception_forward.5} parent=0 // loop_footer_branch
    %8 = sbr.rel target = $region3
  $region8: #{inception_forward.5} parent=0 // loop_exit
    _

</llo_original>
